<compile_context>
chip_gen: v6e
topology: v6e:2x2x1
jax: 0.10.0
libtpu: 0.0.40
codegen_flags: <defaults>
</compile_context>

<pallas_src>
import functools

import jax
import jax.numpy as jnp
from jax import lax
from jax.experimental import pallas as pl
from jax.experimental.pallas import tpu as pltpu

NEG_SLOPE = 0.2      # GATv2 LeakyReLU negative slope (PyG default)
LN_EPS = 1e-5        # nn.LayerNorm default eps
OUT_PAD = 128        # lane-dense padded output width (real output = column 0)
NEG_BIG = -1e30
# leaky_relu(z) = C1*z + C2*|z|
C1 = 0.5 * (1.0 + NEG_SLOPE)
C2 = 0.5 * (1.0 - NEG_SLOPE)

# row indices inside the fused per-layer vector slab [L, 8, H]
_BL, _BR, _BGAT, _BSKIP, _GAMMA, _BETA = 0, 1, 2, 3, 4, 5


def _dynamics_decoder_kernel(
    x_ref, adj_bias_ref, enc_w_ref, enc_b_ref,
    w_fused_ref, vec_fused_ref, att_ref,
    w1_ref, b1_ref, w2_ref, b2_ref,
    out_ref,
    h_sc, gat_sc,
    *, num_layers, num_heads, head_dim, hidden):
  """One grid step == one GAT layer; node state lives in h_sc (VMEM, f32)."""
  layer = pl.program_id(0)
  f32 = jnp.float32
  bf16 = jnp.bfloat16

  # ---- node encoder: Linear -> ReLU (Dropout = identity), first step only ---
  @pl.when(layer == 0)
  def _encode():
    h0 = jnp.dot(x_ref[...], enc_w_ref[...], preferred_element_type=f32)
    h_sc[...] = jnp.maximum(h0 + enc_b_ref[...], 0.0)

  h_b = h_sc[...].astype(bf16)                 # [N, H] activations (bf16 MXU in)

  # this layer's parameters only (block-sliced by the grid)
  wf = w_fused_ref[0]                          # [H, 3H] bf16 = (wl | wr | wskip)
  vecs = vec_fused_ref[0]                      # [8, H]  f32 fused vectors

  # ---- fused projections: one [N,H]x[H,3H] matmul instead of three --------
  zf = jnp.dot(h_b, wf, preferred_element_type=f32)          # [N, 3H]
  xl = zf[:, 0 * hidden:1 * hidden] + vecs[_BL:_BL + 1]      # source  [N, H]
  xr = zf[:, 1 * hidden:2 * hidden] + vecs[_BR:_BR + 1]      # target  [N, H]
  skip = jnp.maximum(zf[:, 2 * hidden:3 * hidden]
                     + vecs[_BSKIP:_BSKIP + 1], 0.0)         # skip branch
  xl_t = xl.T                                                # [H, N], once/layer

  adj_bias = adj_bias_ref[...].astype(f32)     # [N, N] additive {0, NEG_BIG}

  # ---- GATv2Conv (heads=num_heads, concat=True) ----------------------------
  for hd in range(num_heads):
    lo = hd * head_dim
    # attention coefficients read as SMEM scalars (no lane extract/broadcast)
    a_sc = [att_ref[layer, lo + c] for c in range(head_dim)]

    # rank-1 part of leaky_relu split: C1*(u_i + v_j),
    # u = xr_h @ a, v = xl_h @ a  (O(N*head_dim) work)
    u = a_sc[0] * xr[:, lo:lo + 1]                           # [N, 1]
    v = a_sc[0] * xl_t[lo:lo + 1, :]                         # [1, N]
    for c in range(1, head_dim):
      col = lo + c
      u = u + a_sc[c] * xr[:, col:col + 1]
      v = v + a_sc[c] * xl_t[col:col + 1, :]
    e = adj_bias + C1 * (u + v)                              # [N, N]

    # remaining per-channel work on the [N,N] tile: add + abs + fma only.
    # TODO(synk): switch to lax.fori_loop(..., unroll=4) once head_dim > ~16.
    for c in range(head_dim):
      col = lo + c
      z = xr[:, col:col + 1] + xl_t[col:col + 1, :]          # [N, N]
      e = e + (C2 * a_sc[c]) * jnp.abs(z)

    # unnormalized softmax over sources (lane axis).  Masked entries carry the
    # NEG_BIG bias and underflow to exactly 0; self-loops guarantee denom >= 1.
    m = jnp.max(e, axis=-1, keepdims=True)
    p = jnp.exp(e - m)
    denom = jnp.sum(p, axis=-1, keepdims=True)               # [N, 1]
    out_h = jnp.dot(p.astype(bf16), xl[:, lo:lo + head_dim].astype(bf16),
                    preferred_element_type=f32)
    # normalize AFTER aggregation: N*head_dim multiplies + EUP reciprocal
    gat_sc[:, lo:lo + head_dim] = out_h * pl.reciprocal(denom, approx=True)

  gat = gat_sc[...] + vecs[_BGAT:_BGAT + 1]

  # ---- skip connection + LayerNorm (f32 statistics) + ReLU -----------------
  hn = gat + skip
  mu = jnp.mean(hn, axis=-1, keepdims=True)
  var = jnp.mean((hn - mu) ** 2, axis=-1, keepdims=True)
  hn = (hn - mu) * lax.rsqrt(var + LN_EPS)
  hn = hn * vecs[_GAMMA:_GAMMA + 1] + vecs[_BETA:_BETA + 1]
  hn = jnp.maximum(hn, 0.0)
  h_sc[...] = hn

  # ---- output head: Linear -> ReLU -> Linear (lane-padded), last step only --
  @pl.when(layer == num_layers - 1)
  def _head():
    z1 = jnp.maximum(
        jnp.dot(hn.astype(bf16), w1_ref[...], preferred_element_type=f32)
        + b1_ref[...], 0.0)
    out = jnp.dot(z1.astype(bf16), w2_ref[...], preferred_element_type=f32) \
        + b2_ref[...]
    out_ref[...] = out.astype(out_ref.dtype)


def _full_spec(shape):
  rank = len(shape)
  return pl.BlockSpec(shape, lambda l, r=rank: (0,) * r)


def _per_layer_spec(shape):
  blk = (1,) + tuple(shape[1:])
  rank = len(shape)
  return pl.BlockSpec(blk, lambda l, r=rank: (l,) + (0,) * (r - 1))


def _prepare_inputs(x, edge_index, params):
  """Adjacency bias slab + fused, mixed-precision parameter set."""
  n = x.shape[0]
  hidden = params["enc_w"].shape[1]
  bf16 = jnp.bfloat16

  # dense adjacency (with self-loops) as an ADDITIVE bias: 0 where edge j->i
  # (or i==j), NEG_BIG otherwise, shipped in bf16 (half the HBM/VMEM of f32).
  # TODO(synk): for large sparse graphs, pass edge structure via scalar
  # prefetch (PrefetchScalarGridSpec) and skip all-masked source tiles
  # instead of densifying to an [N, N] slab.
  adj = jnp.zeros((n, n), jnp.float32)
  adj = adj.at[edge_index[1], edge_index[0]].set(1.0)
  adj = jnp.maximum(adj, jnp.eye(n, dtype=jnp.float32))
  adj_bias = jnp.where(adj > 0.0, 0.0, NEG_BIG).astype(bf16)

  # fuse per-layer weights/vectors: 2 per-layer DMA blocks per grid step
  w_fused = jnp.concatenate(
      [params["wl"], params["wr"], params["wskip"]], axis=-1).astype(bf16)
  zero_row = jnp.zeros_like(params["bl"])
  vec_fused = jnp.concatenate(
      [params["bl"], params["br"], params["bgat"], params["bskip"],
       params["gamma"], params["beta"], zero_row, zero_row], axis=1)  # [L,8,H]
  att_smem = params["att"][:, 0, :]                                   # [L, H]

  w2_pad = jnp.zeros((hidden, OUT_PAD), jnp.float32).at[:, :1].set(params["w2"])
  b2_pad = jnp.zeros((1, OUT_PAD), jnp.float32).at[:, :1].set(params["b2"])
  return {
      "x": x.astype(bf16),
      "adj_bias": adj_bias,
      "enc_w": params["enc_w"].astype(bf16), "enc_b": params["enc_b"],
      "w_fused": w_fused, "vec_fused": vec_fused, "att_smem": att_smem,
      "w1": params["w1"].astype(bf16), "b1": params["b1"],
      "w2": w2_pad.astype(bf16), "b2": b2_pad,
  }


def _vmem_limit_bytes():
  """Per-generation VMEM budget: v7x has 64 MiB/TC, v5e/v6e have 128 MiB."""
  try:
    cap = pltpu.get_tpu_info().vmem_capacity_bytes
  except Exception:
    cap = 64 * 1024 * 1024
  return int(min(48 * 1024 * 1024, (cap * 5) // 8))


def dynamics_decoder_forward(x, edge_index, batch, adj_matrices, params,
                             *, num_layers, num_heads, head_dim):
  """JAX wrapper mirroring DynamicsDecoder.forward (interventions=None,
  uncertainty=False, eval mode)."""
  del batch, adj_matrices  # only used for interventions / sizes in the module
  n = x.shape[0]
  hidden = num_heads * head_dim
  p = _prepare_inputs(x, edge_index, params)

  in_specs = [
      _full_spec(p["x"].shape),
      _full_spec(p["adj_bias"].shape),
      _full_spec(p["enc_w"].shape),
      _full_spec(p["enc_b"].shape),
      _per_layer_spec(p["w_fused"].shape),
      _per_layer_spec(p["vec_fused"].shape),
      pl.BlockSpec(memory_space=pltpu.MemorySpace.SMEM),   # att scalars in SMEM
      _full_spec(p["w1"].shape),
      _full_spec(p["b1"].shape),
      _full_spec(p["w2"].shape),
      _full_spec(p["b2"].shape),
  ]
  args = (p["x"], p["adj_bias"], p["enc_w"], p["enc_b"],
          p["w_fused"], p["vec_fused"], p["att_smem"],
          p["w1"], p["b1"], p["w2"], p["b2"])

  kernel = functools.partial(
      _dynamics_decoder_kernel, num_layers=num_layers,
      num_heads=num_heads, head_dim=head_dim, hidden=hidden)

  out_pad = pl.pallas_call(
      kernel,
      out_shape=jax.ShapeDtypeStruct((n, OUT_PAD), jnp.float32),
      grid_spec=pltpu.PrefetchScalarGridSpec(
          num_scalar_prefetch=0,
          grid=(num_layers,),
          in_specs=in_specs,
          out_specs=pl.BlockSpec((n, OUT_PAD), lambda l: (0, 0)),
          scratch_shapes=[pltpu.VMEM((n, hidden), jnp.float32),   # h state
                          pltpu.VMEM((n, hidden), jnp.float32)]),  # gat concat
      compiler_params=pltpu.CompilerParams(
          # the layer axis is a sequential carry through h_sc
          dimension_semantics=("arbitrary",),
          vmem_limit_bytes=_vmem_limit_bytes()),
  )(*args)
  return out_pad[:, :1]


def _reference_forward(prep, *, num_layers, num_heads, head_dim):
  """Pure-JAX mirror of the kernel math (same fused weights / mixed precision,
  exact division instead of the approximate reciprocal)."""
  f32, bf16 = jnp.float32, jnp.bfloat16
  hidden = num_heads * head_dim
  adj_bias = prep["adj_bias"].astype(f32)
  att = prep["att_smem"]
  h = jnp.maximum(
      jnp.dot(prep["x"], prep["enc_w"], preferred_element_type=f32)
      + prep["enc_b"], 0.0)
  for layer in range(num_layers):
    hb = h.astype(bf16)
    wf = prep["w_fused"][layer]
    vecs = prep["vec_fused"][layer]
    zf = jnp.dot(hb, wf, preferred_element_type=f32)
    xl = zf[:, 0 * hidden:1 * hidden] + vecs[_BL:_BL + 1]
    xr = zf[:, 1 * hidden:2 * hidden] + vecs[_BR:_BR + 1]
    skip = jnp.maximum(zf[:, 2 * hidden:3 * hidden]
                       + vecs[_BSKIP:_BSKIP + 1], 0.0)
    outs = []
    for hd in range(num_heads):
      lo = hd * head_dim
      xl_h, xr_h = xl[:, lo:lo + head_dim], xr[:, lo:lo + head_dim]
      a_h = att[layer:layer + 1, lo:lo + head_dim]             # [1, head_dim]
      u = jnp.sum(xr_h * a_h, axis=-1, keepdims=True)          # [N, 1]
      v = jnp.sum(xl_h * a_h, axis=-1, keepdims=True)          # [N, 1]
      z = xr_h[:, None, :] + xl_h[None, :, :]                  # [N, N, hd]
      e = adj_bias + C1 * (u + v.T) \
          + C2 * jnp.sum(jnp.abs(z) * a_h[None, :, :], axis=-1)
      m = jnp.max(e, axis=-1, keepdims=True)
      p = jnp.exp(e - m)
      denom = jnp.sum(p, axis=-1, keepdims=True)
      out_h = jnp.dot(p.astype(bf16), xl_h.astype(bf16),
                      preferred_element_type=f32)
      outs.append(out_h / denom)
    gat = jnp.concatenate(outs, axis=-1) + vecs[_BGAT:_BGAT + 1]
    h = gat + skip
    mu = jnp.mean(h, axis=-1, keepdims=True)
    var = jnp.mean((h - mu) ** 2, axis=-1, keepdims=True)
    h = (h - mu) * lax.rsqrt(var + LN_EPS)
    h = h * vecs[_GAMMA:_GAMMA + 1] + vecs[_BETA:_BETA + 1]
    h = jnp.maximum(h, 0.0)
  z1 = jnp.maximum(
      jnp.dot(h.astype(bf16), prep["w1"], preferred_element_type=f32)
      + prep["b1"], 0.0)
  out = jnp.dot(z1.astype(bf16), prep["w2"], preferred_element_type=f32) \
      + prep["b2"]
  return out[:, :1]


def _xavier(key, fan_in, fan_out, shape=None):
  std = (2.0 / (fan_in + fan_out)) ** 0.5
  shape = (fan_in, fan_out) if shape is None else shape
  return std * jax.random.normal(key, shape, dtype=jnp.float32)


def make_params(key, input_dim, hidden_dim, num_layers, num_heads):
  head_dim = hidden_dim // num_heads
  keys = jax.random.split(key, 8)
  params = {
      "enc_w": _xavier(keys[0], input_dim, hidden_dim),
      "enc_b": jnp.zeros((1, hidden_dim), jnp.float32),
      "wl": _xavier(keys[1], hidden_dim, hidden_dim,
                    (num_layers, hidden_dim, hidden_dim)),
      "bl": jnp.zeros((num_layers, 1, hidden_dim), jnp.float32),
      "wr": _xavier(keys[2], hidden_dim, hidden_dim,
                    (num_layers, hidden_dim, hidden_dim)),
      "br": jnp.zeros((num_layers, 1, hidden_dim), jnp.float32),
      # GATv2 attention vectors, flattened to [L, 1, heads*head_dim]
      "att": _xavier(keys[3], head_dim, 1,
                     (num_layers, 1, num_heads * head_dim)),
      "bgat": jnp.zeros((num_layers, 1, hidden_dim), jnp.float32),
      "wskip": _xavier(keys[4], hidden_dim, hidden_dim,
                       (num_layers, hidden_dim, hidden_dim)),
      "bskip": jnp.zeros((num_layers, 1, hidden_dim), jnp.float32),
      "gamma": jnp.ones((num_layers, 1, hidden_dim), jnp.float32),
      "beta": jnp.zeros((num_layers, 1, hidden_dim), jnp.float32),
      "w1": _xavier(keys[5], hidden_dim, hidden_dim),
      "b1": jnp.zeros((1, hidden_dim), jnp.float32),
      "w2": _xavier(keys[6], hidden_dim, 1),
      "b2": jnp.zeros((1, 1), jnp.float32),
  }
  return params, head_dim


if __name__ == "__main__":
  key = jax.random.PRNGKey(0)
  k_x, k_p = jax.random.split(key)

  batch_size, num_nodes = 2, 4
  input_dim, hidden_dim, num_layers, num_heads = 4, 32, 3, 4
  n_total = batch_size * num_nodes

  # node features [num_nodes * batch_size, input_dim]
  x = jax.random.normal(k_x, (n_total, input_dim), dtype=jnp.float32)

  # bidirectional chain within each graph
  src, dst = [], []
  for b in range(batch_size):
    off = b * num_nodes
    for i in range(num_nodes - 1):
      src += [off + i, off + i + 1]
      dst += [off + i + 1, off + i]
  edge_index = jnp.array([src, dst], dtype=jnp.int32)          # [2, num_edges]
  batch = jnp.repeat(jnp.arange(batch_size, dtype=jnp.int32), num_nodes)
  adj_matrices = jnp.zeros((batch_size, num_nodes, num_nodes), jnp.float32)

  params, head_dim = make_params(k_p, input_dim, hidden_dim, num_layers,
                                 num_heads)

  out = dynamics_decoder_forward(
      x, edge_index, batch, adj_matrices, params,
      num_layers=num_layers, num_heads=num_heads, head_dim=head_dim)
  out = jax.block_until_ready(out)
  assert out.shape == (n_total, 1)

  # correctness check against a pure-JAX reference of the same math
  # (tolerance covers the kernel's approximate EUP reciprocal in the
  #  softmax normalization; everything else is op-for-op identical).
  prep = _prepare_inputs(x, edge_index, params)
  ref = _reference_forward(prep, num_layers=num_layers,
                           num_heads=num_heads, head_dim=head_dim)
  assert jnp.allclose(out, ref, rtol=5e-3, atol=5e-3), (out, ref)

  print("KERNEL_OK")
</pallas_src>

<mosaic_0001>
module attributes {stable_mosaic.version = 11 : i64} {
  func.func @_dynamics_decoder_kernel(%arg0: i32, %arg1: memref<8x4xbf16, #tpu.memory_space<vmem>>, %arg2: memref<8x8xbf16, #tpu.memory_space<vmem>>, %arg3: memref<4x32xbf16, #tpu.memory_space<vmem>>, %arg4: memref<1x32xf32, #tpu.memory_space<vmem>>, %arg5: memref<1x32x96xbf16, #tpu.memory_space<vmem>>, %arg6: memref<1x8x32xf32, #tpu.memory_space<vmem>>, %arg7: memref<3x32xf32, #tpu.memory_space<smem>>, %arg8: memref<32x32xbf16, #tpu.memory_space<vmem>>, %arg9: memref<1x32xf32, #tpu.memory_space<vmem>>, %arg10: memref<32x128xbf16, #tpu.memory_space<vmem>>, %arg11: memref<1x128xf32, #tpu.memory_space<vmem>>, %arg12: memref<8x128xf32, #tpu.memory_space<vmem>>, %arg13: memref<8x32xf32, #tpu.memory_space<vmem>>, %arg14: memref<8x32xf32, #tpu.memory_space<vmem>>) attributes {dimension_semantics = [#tpu.dimension_semantics<arbitrary>], iteration_bounds = array<i64: 3>, scalar_prefetch = 0 : i64, scratch_operands = 2 : i64, tpu.core_type = #tpu.core_type<tc>, window_params = [{pipeline_mode = #tpu.pipeline_mode<synchronous>, transform_indices = @transform_0, window_bounds = array<i64: 8, 4>}, {pipeline_mode = #tpu.pipeline_mode<synchronous>, transform_indices = @transform_1, window_bounds = array<i64: 8, 8>}, {pipeline_mode = #tpu.pipeline_mode<synchronous>, transform_indices = @transform_2, window_bounds = array<i64: 4, 32>}, {pipeline_mode = #tpu.pipeline_mode<synchronous>, transform_indices = @transform_3, window_bounds = array<i64: 1, 32>}, {transform_indices = @transform_4, window_bounds = array<i64: 1, 32, 96>}, {transform_indices = @transform_5, window_bounds = array<i64: 1, 8, 32>}, {transform_indices = @transform_6, window_bounds = array<i64: 3, 32>}, {pipeline_mode = #tpu.pipeline_mode<synchronous>, transform_indices = @transform_7, window_bounds = array<i64: 32, 32>}, {pipeline_mode = #tpu.pipeline_mode<synchronous>, transform_indices = @transform_8, window_bounds = array<i64: 1, 32>}, {pipeline_mode = #tpu.pipeline_mode<synchronous>, transform_indices = @transform_9, window_bounds = array<i64: 32, 128>}, {pipeline_mode = #tpu.pipeline_mode<synchronous>, transform_indices = @transform_10, window_bounds = array<i64: 1, 128>}, {pipeline_mode = #tpu.pipeline_mode<synchronous>, transform_indices = @transform_11, window_bounds = array<i64: 8, 128>}]} {
    %c0_i32 = arith.constant 0 : i32
    %0 = arith.cmpi eq, %arg0, %c0_i32 : i32
    %1 = arith.extui %0 : i1 to i32
    %c0_i32_0 = arith.constant 0 : i32
    %2 = arith.cmpi ne, %1, %c0_i32_0 : i32
    scf.if %2 {
      %c0_79 = arith.constant 0 : index
      %c0_80 = arith.constant 0 : index
      %778 = vector.load %arg1[%c0_79, %c0_80] : memref<8x4xbf16, #tpu.memory_space<vmem>>, vector<8x4xbf16>
      %c0_81 = arith.constant 0 : index
      %c0_82 = arith.constant 0 : index
      %779 = vector.load %arg3[%c0_81, %c0_82] : memref<4x32xbf16, #tpu.memory_space<vmem>>, vector<4x32xbf16>
      %cst_83 = arith.constant dense<0.000000e+00> : vector<8x32xf32>
      %780 = tpu.matmul %778, %779, %cst_83 {dimension_numbers = #tpu.dot_dimension_numbers<[1], [0], [0], [1], [0, 0, 1, 1], [], []>} : vector<8x4xbf16>, vector<4x32xbf16>, vector<8x32xf32> -> vector<8x32xf32>
      %c0_84 = arith.constant 0 : index
      %c0_85 = arith.constant 0 : index
      %781 = vector.load %arg4[%c0_84, %c0_85] : memref<1x32xf32, #tpu.memory_space<vmem>>, vector<1x32xf32>
      %782 = vector.broadcast %781 : vector<1x32xf32> to vector<8x32xf32>
      %783 = arith.addf %780, %782 : vector<8x32xf32>
      %cst_86 = arith.constant 0.000000e+00 : f32
      %784 = vector.broadcast %cst_86 : f32 to vector<8x32xf32>
      %785 = arith.maximumf %783, %784 : vector<8x32xf32>
      %c0_87 = arith.constant 0 : index
      %c0_88 = arith.constant 0 : index
      %786 = vector.load %arg13[%c0_87, %c0_88] : memref<8x32xf32, #tpu.memory_space<vmem>>, vector<8x32xf32>
      tpu.vector_store %arg13[%c0_87, %c0_88], %785 {strides = array<i32>} : memref<8x32xf32, #tpu.memory_space<vmem>>, vector<8x32xf32>,
    } else {
    }
    %c0 = arith.constant 0 : index
    %c0_1 = arith.constant 0 : index
    %3 = vector.load %arg13[%c0, %c0_1] : memref<8x32xf32, #tpu.memory_space<vmem>>, vector<8x32xf32>
    %4 = arith.truncf %3 : vector<8x32xf32> to vector<8x32xbf16>
    %c0_2 = arith.constant 0 : index
    %c0_3 = arith.constant 0 : index
    %c0_4 = arith.constant 0 : index
    %5 = vector.load %arg5[%c0_2, %c0_3, %c0_4] : memref<1x32x96xbf16, #tpu.memory_space<vmem>>, vector<1x32x96xbf16>
    %6 = vector.shape_cast %5 : vector<1x32x96xbf16> to vector<32x96xbf16>
    %c0_5 = arith.constant 0 : index
    %c0_6 = arith.constant 0 : index
    %c0_7 = arith.constant 0 : index
    %7 = vector.load %arg6[%c0_5, %c0_6, %c0_7] : memref<1x8x32xf32, #tpu.memory_space<vmem>>, vector<1x8x32xf32>
    %8 = vector.shape_cast %7 : vector<1x8x32xf32> to vector<8x32xf32>
    %cst = arith.constant dense<0.000000e+00> : vector<8x96xf32>
    %9 = tpu.matmul %4, %6, %cst {dimension_numbers = #tpu.dot_dimension_numbers<[1], [0], [0], [1], [0, 0, 1, 1], [], []>} : vector<8x32xbf16>, vector<32x96xbf16>, vector<8x96xf32> -> vector<8x96xf32>
    %10 = vector.extract_strided_slice %9 {offsets = [0, 0], sizes = [8, 32], strides = [1, 1]} : vector<8x96xf32> to vector<8x32xf32>
    %11 = vector.extract_strided_slice %8 {offsets = [0, 0], sizes = [1, 32], strides = [1, 1]} : vector<8x32xf32> to vector<1x32xf32>
    %12 = vector.broadcast %11 : vector<1x32xf32> to vector<8x32xf32>
    %13 = arith.addf %10, %12 : vector<8x32xf32>
    %14 = vector.extract_strided_slice %9 {offsets = [0, 32], sizes = [8, 32], strides = [1, 1]} : vector<8x96xf32> to vector<8x32xf32>
    %15 = vector.extract_strided_slice %8 {offsets = [1, 0], sizes = [1, 32], strides = [1, 1]} : vector<8x32xf32> to vector<1x32xf32>
    %16 = vector.broadcast %15 : vector<1x32xf32> to vector<8x32xf32>
    %17 = arith.addf %14, %16 : vector<8x32xf32>
    %18 = vector.extract_strided_slice %9 {offsets = [0, 64], sizes = [8, 32], strides = [1, 1]} : vector<8x96xf32> to vector<8x32xf32>
    %19 = vector.extract_strided_slice %8 {offsets = [3, 0], sizes = [1, 32], strides = [1, 1]} : vector<8x32xf32> to vector<1x32xf32>
    %20 = vector.broadcast %19 : vector<1x32xf32> to vector<8x32xf32>
    %21 = arith.addf %18, %20 : vector<8x32xf32>
    %cst_8 = arith.constant 0.000000e+00 : f32
    %22 = vector.broadcast %cst_8 : f32 to vector<8x32xf32>
    %23 = arith.maximumf %21, %22 : vector<8x32xf32>
    %24 = tpu.transpose %13, [1, 0] : vector<8x32xf32> -> vector<32x8xf32>
    %c0_9 = arith.constant 0 : index
    %c0_10 = arith.constant 0 : index
    %25 = vector.load %arg2[%c0_9, %c0_10] : memref<8x8xbf16, #tpu.memory_space<vmem>>, vector<8x8xbf16>
    %26 = arith.extf %25 : vector<8x8xbf16> to vector<8x8xf32>
    %27 = arith.index_cast %arg0 : i32 to index
    %c0_11 = arith.constant 0 : index
    %28 = memref.load %arg7[%27, %c0_11] : memref<3x32xf32, #tpu.memory_space<smem>>
    %29 = arith.index_cast %arg0 : i32 to index
    %c1 = arith.constant 1 : index
    %30 = memref.load %arg7[%29, %c1] : memref<3x32xf32, #tpu.memory_space<smem>>
    %31 = arith.index_cast %arg0 : i32 to index
    %c2 = arith.constant 2 : index
    %32 = memref.load %arg7[%31, %c2] : memref<3x32xf32, #tpu.memory_space<smem>>
    %33 = arith.index_cast %arg0 : i32 to index
    %c3 = arith.constant 3 : index
    %34 = memref.load %arg7[%33, %c3] : memref<3x32xf32, #tpu.memory_space<smem>>
    %35 = arith.index_cast %arg0 : i32 to index
    %c4 = arith.constant 4 : index
    %36 = memref.load %arg7[%35, %c4] : memref<3x32xf32, #tpu.memory_space<smem>>
    %37 = arith.index_cast %arg0 : i32 to index
    %c5 = arith.constant 5 : index
    %38 = memref.load %arg7[%37, %c5] : memref<3x32xf32, #tpu.memory_space<smem>>
    %39 = arith.index_cast %arg0 : i32 to index
    %c6 = arith.constant 6 : index
    %40 = memref.load %arg7[%39, %c6] : memref<3x32xf32, #tpu.memory_space<smem>>
    %41 = arith.index_cast %arg0 : i32 to index
    %c7 = arith.constant 7 : index
    %42 = memref.load %arg7[%41, %c7] : memref<3x32xf32, #tpu.memory_space<smem>>
    %43 = vector.extract_strided_slice %17 {offsets = [0, 0], sizes = [8, 1], strides = [1, 1]} : vector<8x32xf32> to vector<8x1xf32>
    %44 = vector.broadcast %28 : f32 to vector<8x1xf32>
    %45 = arith.mulf %44, %43 : vector<8x1xf32>
    %46 = vector.extract_strided_slice %24 {offsets = [0, 0], sizes = [1, 8], strides = [1, 1]} : vector<32x8xf32> to vector<1x8xf32>
    %47 = vector.broadcast %28 : f32 to vector<1x8xf32>
    %48 = arith.mulf %47, %46 : vector<1x8xf32>
    %49 = vector.extract_strided_slice %17 {offsets = [0, 1], sizes = [8, 1], strides = [1, 1]} : vector<8x32xf32> to vector<8x1xf32>
    %50 = vector.broadcast %30 : f32 to vector<8x1xf32>
    %51 = arith.mulf %50, %49 : vector<8x1xf32>
    %52 = arith.addf %45, %51 : vector<8x1xf32>
    %53 = vector.extract_strided_slice %24 {offsets = [1, 0], sizes = [1, 8], strides = [1, 1]} : vector<32x8xf32> to vector<1x8xf32>
    %54 = vector.broadcast %30 : f32 to vector<1x8xf32>
    %55 = arith.mulf %54, %53 : vector<1x8xf32>
    %56 = arith.addf %48, %55 : vector<1x8xf32>
    %57 = vector.extract_strided_slice %17 {offsets = [0, 2], sizes = [8, 1], strides = [1, 1]} : vector<8x32xf32> to vector<8x1xf32>
    %58 = vector.broadcast %32 : f32 to vector<8x1xf32>
    %59 = arith.mulf %58, %57 : vector<8x1xf32>
    %60 = arith.addf %52, %59 : vector<8x1xf32>
    %61 = vector.extract_strided_slice %24 {offsets = [2, 0], sizes = [1, 8], strides = [1, 1]} : vector<32x8xf32> to vector<1x8xf32>
    %62 = vector.broadcast %32 : f32 to vector<1x8xf32>
    %63 = arith.mulf %62, %61 : vector<1x8xf32>
    %64 = arith.addf %56, %63 : vector<1x8xf32>
    %65 = vector.extract_strided_slice %17 {offsets = [0, 3], sizes = [8, 1], strides = [1, 1]} : vector<8x32xf32> to vector<8x1xf32>
    %66 = vector.broadcast %34 : f32 to vector<8x1xf32>
    %67 = arith.mulf %66, %65 : vector<8x1xf32>
    %68 = arith.addf %60, %67 : vector<8x1xf32>
    %69 = vector.extract_strided_slice %24 {offsets = [3, 0], sizes = [1, 8], strides = [1, 1]} : vector<32x8xf32> to vector<1x8xf32>
    %70 = vector.broadcast %34 : f32 to vector<1x8xf32>
    %71 = arith.mulf %70, %69 : vector<1x8xf32>
    %72 = arith.addf %64, %71 : vector<1x8xf32>
    %73 = vector.extract_strided_slice %17 {offsets = [0, 4], sizes = [8, 1], strides = [1, 1]} : vector<8x32xf32> to vector<8x1xf32>
    %74 = vector.broadcast %36 : f32 to vector<8x1xf32>
    %75 = arith.mulf %74, %73 : vector<8x1xf32>
    %76 = arith.addf %68, %75 : vector<8x1xf32>
    %77 = vector.extract_strided_slice %24 {offsets = [4, 0], sizes = [1, 8], strides = [1, 1]} : vector<32x8xf32> to vector<1x8xf32>
    %78 = vector.broadcast %36 : f32 to vector<1x8xf32>
    %79 = arith.mulf %78, %77 : vector<1x8xf32>
    %80 = arith.addf %72, %79 : vector<1x8xf32>
    %81 = vector.extract_strided_slice %17 {offsets = [0, 5], sizes = [8, 1], strides = [1, 1]} : vector<8x32xf32> to vector<8x1xf32>
    %82 = vector.broadcast %38 : f32 to vector<8x1xf32>
    %83 = arith.mulf %82, %81 : vector<8x1xf32>
    %84 = arith.addf %76, %83 : vector<8x1xf32>
    %85 = vector.extract_strided_slice %24 {offsets = [5, 0], sizes = [1, 8], strides = [1, 1]} : vector<32x8xf32> to vector<1x8xf32>
    %86 = vector.broadcast %38 : f32 to vector<1x8xf32>
    %87 = arith.mulf %86, %85 : vector<1x8xf32>
    %88 = arith.addf %80, %87 : vector<1x8xf32>
    %89 = vector.extract_strided_slice %17 {offsets = [0, 6], sizes = [8, 1], strides = [1, 1]} : vector<8x32xf32> to vector<8x1xf32>
    %90 = vector.broadcast %40 : f32 to vector<8x1xf32>
    %91 = arith.mulf %90, %89 : vector<8x1xf32>
    %92 = arith.addf %84, %91 : vector<8x1xf32>
    %93 = vector.extract_strided_slice %24 {offsets = [6, 0], sizes = [1, 8], strides = [1, 1]} : vector<32x8xf32> to vector<1x8xf32>
    %94 = vector.broadcast %40 : f32 to vector<1x8xf32>
    %95 = arith.mulf %94, %93 : vector<1x8xf32>
    %96 = arith.addf %88, %95 : vector<1x8xf32>
    %97 = vector.extract_strided_slice %17 {offsets = [0, 7], sizes = [8, 1], strides = [1, 1]} : vector<8x32xf32> to vector<8x1xf32>
    %98 = vector.broadcast %42 : f32 to vector<8x1xf32>
    %99 = arith.mulf %98, %97 : vector<8x1xf32>
    %100 = arith.addf %92, %99 : vector<8x1xf32>
    %101 = vector.extract_strided_slice %24 {offsets = [7, 0], sizes = [1, 8], strides = [1, 1]} : vector<32x8xf32> to vector<1x8xf32>
    %102 = vector.broadcast %42 : f32 to vector<1x8xf32>
    %103 = arith.mulf %102, %101 : vector<1x8xf32>
    %104 = arith.addf %96, %103 : vector<1x8xf32>
    %105 = vector.broadcast %100 : vector<8x1xf32> to vector<8x8xf32>
    %106 = vector.broadcast %104 : vector<1x8xf32> to vector<8x8xf32>
    %107 = arith.addf %105, %106 : vector<8x8xf32>
    %cst_12 = arith.constant 6.000000e-01 : f32
    %108 = vector.broadcast %cst_12 : f32 to vector<8x8xf32>
    %109 = arith.mulf %108, %107 : vector<8x8xf32>
    %110 = arith.addf %26, %109 : vector<8x8xf32>
    %111 = vector.extract_strided_slice %17 {offsets = [0, 0], sizes = [8, 1], strides = [1, 1]} : vector<8x32xf32> to vector<8x1xf32>
    %112 = vector.extract_strided_slice %24 {offsets = [0, 0], sizes = [1, 8], strides = [1, 1]} : vector<32x8xf32> to vector<1x8xf32>
    %113 = vector.broadcast %111 : vector<8x1xf32> to vector<8x8xf32>
    %114 = vector.broadcast %112 : vector<1x8xf32> to vector<8x8xf32>
    %115 = arith.addf %113, %114 : vector<8x8xf32>
    %cst_13 = arith.constant 4.000000e-01 : f32
    %116 = arith.mulf %cst_13, %28 : f32
    %117 = math.absf %115 : vector<8x8xf32>
    %118 = vector.broadcast %116 : f32 to vector<8x8xf32>
    %119 = arith.mulf %118, %117 : vector<8x8xf32>
    %120 = arith.addf %110, %119 : vector<8x8xf32>
    %121 = vector.extract_strided_slice %17 {offsets = [0, 1], sizes = [8, 1], strides = [1, 1]} : vector<8x32xf32> to vector<8x1xf32>
    %122 = vector.extract_strided_slice %24 {offsets = [1, 0], sizes = [1, 8], strides = [1, 1]} : vector<32x8xf32> to vector<1x8xf32>
    %123 = vector.broadcast %121 : vector<8x1xf32> to vector<8x8xf32>
    %124 = vector.broadcast %122 : vector<1x8xf32> to vector<8x8xf32>
    %125 = arith.addf %123, %124 : vector<8x8xf32>
    %cst_14 = arith.constant 4.000000e-01 : f32
    %126 = arith.mulf %cst_14, %30 : f32
    %127 = math.absf %125 : vector<8x8xf32>
    %128 = vector.broadcast %126 : f32 to vector<8x8xf32>
    %129 = arith.mulf %128, %127 : vector<8x8xf32>
    %130 = arith.addf %120, %129 : vector<8x8xf32>
    %131 = vector.extract_strided_slice %17 {offsets = [0, 2], sizes = [8, 1], strides = [1, 1]} : vector<8x32xf32> to vector<8x1xf32>
    %132 = vector.extract_strided_slice %24 {offsets = [2, 0], sizes = [1, 8], strides = [1, 1]} : vector<32x8xf32> to vector<1x8xf32>
    %133 = vector.broadcast %131 : vector<8x1xf32> to vector<8x8xf32>
    %134 = vector.broadcast %132 : vector<1x8xf32> to vector<8x8xf32>
    %135 = arith.addf %133, %134 : vector<8x8xf32>
    %cst_15 = arith.constant 4.000000e-01 : f32
    %136 = arith.mulf %cst_15, %32 : f32
    %137 = math.absf %135 : vector<8x8xf32>
    %138 = vector.broadcast %136 : f32 to vector<8x8xf32>
    %139 = arith.mulf %138, %137 : vector<8x8xf32>
    %140 = arith.addf %130, %139 : vector<8x8xf32>
    %141 = vector.extract_strided_slice %17 {offsets = [0, 3], sizes = [8, 1], strides = [1, 1]} : vector<8x32xf32> to vector<8x1xf32>
    %142 = vector.extract_strided_slice %24 {offsets = [3, 0], sizes = [1, 8], strides = [1, 1]} : vector<32x8xf32> to vector<1x8xf32>
    %143 = vector.broadcast %141 : vector<8x1xf32> to vector<8x8xf32>
    %144 = vector.broadcast %142 : vector<1x8xf32> to vector<8x8xf32>
    %145 = arith.addf %143, %144 : vector<8x8xf32>
    %cst_16 = arith.constant 4.000000e-01 : f32
    %146 = arith.mulf %cst_16, %34 : f32
    %147 = math.absf %145 : vector<8x8xf32>
    %148 = vector.broadcast %146 : f32 to vector<8x8xf32>
    %149 = arith.mulf %148, %147 : vector<8x8xf32>
    %150 = arith.addf %140, %149 : vector<8x8xf32>
    %151 = vector.extract_strided_slice %17 {offsets = [0, 4], sizes = [8, 1], strides = [1, 1]} : vector<8x32xf32> to vector<8x1xf32>
    %152 = vector.extract_strided_slice %24 {offsets = [4, 0], sizes = [1, 8], strides = [1, 1]} : vector<32x8xf32> to vector<1x8xf32>
    %153 = vector.broadcast %151 : vector<8x1xf32> to vector<8x8xf32>
    %154 = vector.broadcast %152 : vector<1x8xf32> to vector<8x8xf32>
    %155 = arith.addf %153, %154 : vector<8x8xf32>
    %cst_17 = arith.constant 4.000000e-01 : f32
    %156 = arith.mulf %cst_17, %36 : f32
    %157 = math.absf %155 : vector<8x8xf32>
    %158 = vector.broadcast %156 : f32 to vector<8x8xf32>
    %159 = arith.mulf %158, %157 : vector<8x8xf32>
    %160 = arith.addf %150, %159 : vector<8x8xf32>
    %161 = vector.extract_strided_slice %17 {offsets = [0, 5], sizes = [8, 1], strides = [1, 1]} : vector<8x32xf32> to vector<8x1xf32>
    %162 = vector.extract_strided_slice %24 {offsets = [5, 0], sizes = [1, 8], strides = [1, 1]} : vector<32x8xf32> to vector<1x8xf32>
    %163 = vector.broadcast %161 : vector<8x1xf32> to vector<8x8xf32>
    %164 = vector.broadcast %162 : vector<1x8xf32> to vector<8x8xf32>
    %165 = arith.addf %163, %164 : vector<8x8xf32>
    %cst_18 = arith.constant 4.000000e-01 : f32
    %166 = arith.mulf %cst_18, %38 : f32
    %167 = math.absf %165 : vector<8x8xf32>
    %168 = vector.broadcast %166 : f32 to vector<8x8xf32>
    %169 = arith.mulf %168, %167 : vector<8x8xf32>
    %170 = arith.addf %160, %169 : vector<8x8xf32>
    %171 = vector.extract_strided_slice %17 {offsets = [0, 6], sizes = [8, 1], strides = [1, 1]} : vector<8x32xf32> to vector<8x1xf32>
    %172 = vector.extract_strided_slice %24 {offsets = [6, 0], sizes = [1, 8], strides = [1, 1]} : vector<32x8xf32> to vector<1x8xf32>
    %173 = vector.broadcast %171 : vector<8x1xf32> to vector<8x8xf32>
    %174 = vector.broadcast %172 : vector<1x8xf32> to vector<8x8xf32>
    %175 = arith.addf %173, %174 : vector<8x8xf32>
    %cst_19 = arith.constant 4.000000e-01 : f32
    %176 = arith.mulf %cst_19, %40 : f32
    %177 = math.absf %175 : vector<8x8xf32>
    %178 = vector.broadcast %176 : f32 to vector<8x8xf32>
    %179 = arith.mulf %178, %177 : vector<8x8xf32>
    %180 = arith.addf %170, %179 : vector<8x8xf32>
    %181 = vector.extract_strided_slice %17 {offsets = [0, 7], sizes = [8, 1], strides = [1, 1]} : vector<8x32xf32> to vector<8x1xf32>
    %182 = vector.extract_strided_slice %24 {offsets = [7, 0], sizes = [1, 8], strides = [1, 1]} : vector<32x8xf32> to vector<1x8xf32>
    %183 = vector.broadcast %181 : vector<8x1xf32> to vector<8x8xf32>
    %184 = vector.broadcast %182 : vector<1x8xf32> to vector<8x8xf32>
    %185 = arith.addf %183, %184 : vector<8x8xf32>
    %cst_20 = arith.constant 4.000000e-01 : f32
    %186 = arith.mulf %cst_20, %42 : f32
    %187 = math.absf %185 : vector<8x8xf32>
    %188 = vector.broadcast %186 : f32 to vector<8x8xf32>
    %189 = arith.mulf %188, %187 : vector<8x8xf32>
    %190 = arith.addf %180, %189 : vector<8x8xf32>
    %cst_21 = arith.constant dense<0xFF800000> : vector<8xf32>
    %191 = vector.multi_reduction <maximumf>, %190, %cst_21 [1] : vector<8x8xf32> to vector<8xf32>
    %192 = vector.shape_cast %191 : vector<8xf32> to vector<8x1xf32>
    %193 = vector.broadcast %192 : vector<8x1xf32> to vector<8x8xf32>
    %194 = arith.subf %190, %193 : vector<8x8xf32>
    %195 = math.exp %194 : vector<8x8xf32>
    %cst_22 = arith.constant dense<0.000000e+00> : vector<8xf32>
    %196 = vector.multi_reduction <add>, %195, %cst_22 [1] : vector<8x8xf32> to vector<8xf32>
    %197 = vector.shape_cast %196 : vector<8xf32> to vector<8x1xf32>
    %198 = arith.truncf %195 : vector<8x8xf32> to vector<8x8xbf16>
    %199 = vector.extract_strided_slice %13 {offsets = [0, 0], sizes = [8, 8], strides = [1, 1]} : vector<8x32xf32> to vector<8x8xf32>
    %200 = arith.truncf %199 : vector<8x8xf32> to vector<8x8xbf16>
    %cst_23 = arith.constant dense<0.000000e+00> : vector<8x8xf32>
    %201 = tpu.matmul %198, %200, %cst_23 {dimension_numbers = #tpu.dot_dimension_numbers<[1], [0], [0], [1], [0, 0, 1, 1], [], []>} : vector<8x8xbf16>, vector<8x8xbf16>, vector<8x8xf32> -> vector<8x8xf32>
    %202 = tpu.reciprocal %197 {approx = true} : vector<8x1xf32> -> vector<8x1xf32>
    %203 = vector.broadcast %202 : vector<8x1xf32> to vector<8x8xf32>
    %204 = arith.mulf %201, %203 : vector<8x8xf32>
    %c0_24 = arith.constant 0 : index
    %c0_25 = arith.constant 0 : index
    %205 = vector.load %arg14[%c0_24, %c0_25] : memref<8x32xf32, #tpu.memory_space<vmem>>, vector<8x8xf32>
    tpu.vector_store %arg14[%c0_24, %c0_25], %204 {strides = array<i32>} : memref<8x32xf32, #tpu.memory_space<vmem>>, vector<8x8xf32>,
    %206 = arith.index_cast %arg0 : i32 to index
    %c8 = arith.constant 8 : index
    %207 = memref.load %arg7[%206, %c8] : memref<3x32xf32, #tpu.memory_space<smem>>
    %208 = arith.index_cast %arg0 : i32 to index
    %c9 = arith.constant 9 : index
    %209 = memref.load %arg7[%208, %c9] : memref<3x32xf32, #tpu.memory_space<smem>>
    %210 = arith.index_cast %arg0 : i32 to index
    %c10 = arith.constant 10 : index
    %211 = memref.load %arg7[%210, %c10] : memref<3x32xf32, #tpu.memory_space<smem>>
    %212 = arith.index_cast %arg0 : i32 to index
    %c11 = arith.constant 11 : index
    %213 = memref.load %arg7[%212, %c11] : memref<3x32xf32, #tpu.memory_space<smem>>
    %214 = arith.index_cast %arg0 : i32 to index
    %c12 = arith.constant 12 : index
    %215 = memref.load %arg7[%214, %c12] : memref<3x32xf32, #tpu.memory_space<smem>>
    %216 = arith.index_cast %arg0 : i32 to index
    %c13 = arith.constant 13 : index
    %217 = memref.load %arg7[%216, %c13] : memref<3x32xf32, #tpu.memory_space<smem>>
    %218 = arith.index_cast %arg0 : i32 to index
    %c14 = arith.constant 14 : index
    %219 = memref.load %arg7[%218, %c14] : memref<3x32xf32, #tpu.memory_space<smem>>
    %220 = arith.index_cast %arg0 : i32 to index
    %c15 = arith.constant 15 : index
    %221 = memref.load %arg7[%220, %c15] : memref<3x32xf32, #tpu.memory_space<smem>>
    %222 = vector.extract_strided_slice %17 {offsets = [0, 8], sizes = [8, 1], strides = [1, 1]} : vector<8x32xf32> to vector<8x1xf32>
    %223 = vector.broadcast %207 : f32 to vector<8x1xf32>
    %224 = arith.mulf %223, %222 : vector<8x1xf32>
    %225 = vector.extract_strided_slice %24 {offsets = [8, 0], sizes = [1, 8], strides = [1, 1]} : vector<32x8xf32> to vector<1x8xf32>
    %226 = vector.broadcast %207 : f32 to vector<1x8xf32>
    %227 = arith.mulf %226, %225 : vector<1x8xf32>
    %228 = vector.extract_strided_slice %17 {offsets = [0, 9], sizes = [8, 1], strides = [1, 1]} : vector<8x32xf32> to vector<8x1xf32>
    %229 = vector.broadcast %209 : f32 to vector<8x1xf32>
    %230 = arith.mulf %229, %228 : vector<8x1xf32>
    %231 = arith.addf %224, %230 : vector<8x1xf32>
    %232 = vector.extract_strided_slice %24 {offsets = [9, 0], sizes = [1, 8], strides = [1, 1]} : vector<32x8xf32> to vector<1x8xf32>
    %233 = vector.broadcast %209 : f32 to vector<1x8xf32>
    %234 = arith.mulf %233, %232 : vector<1x8xf32>
    %235 = arith.addf %227, %234 : vector<1x8xf32>
    %236 = vector.extract_strided_slice %17 {offsets = [0, 10], sizes = [8, 1], strides = [1, 1]} : vector<8x32xf32> to vector<8x1xf32>
    %237 = vector.broadcast %211 : f32 to vector<8x1xf32>
    %238 = arith.mulf %237, %236 : vector<8x1xf32>
    %239 = arith.addf %231, %238 : vector<8x1xf32>
    %240 = vector.extract_strided_slice %24 {offsets = [10, 0], sizes = [1, 8], strides = [1, 1]} : vector<32x8xf32> to vector<1x8xf32>
    %241 = vector.broadcast %211 : f32 to vector<1x8xf32>
    %242 = arith.mulf %241, %240 : vector<1x8xf32>
    %243 = arith.addf %235, %242 : vector<1x8xf32>
    %244 = vector.extract_strided_slice %17 {offsets = [0, 11], sizes = [8, 1], strides = [1, 1]} : vector<8x32xf32> to vector<8x1xf32>
    %245 = vector.broadcast %213 : f32 to vector<8x1xf32>
    %246 = arith.mulf %245, %244 : vector<8x1xf32>
    %247 = arith.addf %239, %246 : vector<8x1xf32>
    %248 = vector.extract_strided_slice %24 {offsets = [11, 0], sizes = [1, 8], strides = [1, 1]} : vector<32x8xf32> to vector<1x8xf32>
    %249 = vector.broadcast %213 : f32 to vector<1x8xf32>
    %250 = arith.mulf %249, %248 : vector<1x8xf32>
    %251 = arith.addf %243, %250 : vector<1x8xf32>
    %252 = vector.extract_strided_slice %17 {offsets = [0, 12], sizes = [8, 1], strides = [1, 1]} : vector<8x32xf32> to vector<8x1xf32>
    %253 = vector.broadcast %215 : f32 to vector<8x1xf32>
    %254 = arith.mulf %253, %252 : vector<8x1xf32>
    %255 = arith.addf %247, %254 : vector<8x1xf32>
    %256 = vector.extract_strided_slice %24 {offsets = [12, 0], sizes = [1, 8], strides = [1, 1]} : vector<32x8xf32> to vector<1x8xf32>
    %257 = vector.broadcast %215 : f32 to vector<1x8xf32>
    %258 = arith.mulf %257, %256 : vector<1x8xf32>
    %259 = arith.addf %251, %258 : vector<1x8xf32>
    %260 = vector.extract_strided_slice %17 {offsets = [0, 13], sizes = [8, 1], strides = [1, 1]} : vector<8x32xf32> to vector<8x1xf32>
    %261 = vector.broadcast %217 : f32 to vector<8x1xf32>
    %262 = arith.mulf %261, %260 : vector<8x1xf32>
    %263 = arith.addf %255, %262 : vector<8x1xf32>
    %264 = vector.extract_strided_slice %24 {offsets = [13, 0], sizes = [1, 8], strides = [1, 1]} : vector<32x8xf32> to vector<1x8xf32>
    %265 = vector.broadcast %217 : f32 to vector<1x8xf32>
    %266 = arith.mulf %265, %264 : vector<1x8xf32>
    %267 = arith.addf %259, %266 : vector<1x8xf32>
    %268 = vector.extract_strided_slice %17 {offsets = [0, 14], sizes = [8, 1], strides = [1, 1]} : vector<8x32xf32> to vector<8x1xf32>
    %269 = vector.broadcast %219 : f32 to vector<8x1xf32>
    %270 = arith.mulf %269, %268 : vector<8x1xf32>
    %271 = arith.addf %263, %270 : vector<8x1xf32>
    %272 = vector.extract_strided_slice %24 {offsets = [14, 0], sizes = [1, 8], strides = [1, 1]} : vector<32x8xf32> to vector<1x8xf32>
    %273 = vector.broadcast %219 : f32 to vector<1x8xf32>
    %274 = arith.mulf %273, %272 : vector<1x8xf32>
    %275 = arith.addf %267, %274 : vector<1x8xf32>
    %276 = vector.extract_strided_slice %17 {offsets = [0, 15], sizes = [8, 1], strides = [1, 1]} : vector<8x32xf32> to vector<8x1xf32>
    %277 = vector.broadcast %221 : f32 to vector<8x1xf32>
    %278 = arith.mulf %277, %276 : vector<8x1xf32>
    %279 = arith.addf %271, %278 : vector<8x1xf32>
    %280 = vector.extract_strided_slice %24 {offsets = [15, 0], sizes = [1, 8], strides = [1, 1]} : vector<32x8xf32> to vector<1x8xf32>
    %281 = vector.broadcast %221 : f32 to vector<1x8xf32>
    %282 = arith.mulf %281, %280 : vector<1x8xf32>
    %283 = arith.addf %275, %282 : vector<1x8xf32>
    %284 = vector.broadcast %279 : vector<8x1xf32> to vector<8x8xf32>
    %285 = vector.broadcast %283 : vector<1x8xf32> to vector<8x8xf32>
    %286 = arith.addf %284, %285 : vector<8x8xf32>
    %cst_26 = arith.constant 6.000000e-01 : f32
    %287 = vector.broadcast %cst_26 : f32 to vector<8x8xf32>
    %288 = arith.mulf %287, %286 : vector<8x8xf32>
    %289 = arith.addf %26, %288 : vector<8x8xf32>
    %290 = vector.extract_strided_slice %17 {offsets = [0, 8], sizes = [8, 1], strides = [1, 1]} : vector<8x32xf32> to vector<8x1xf32>
    %291 = vector.extract_strided_slice %24 {offsets = [8, 0], sizes = [1, 8], strides = [1, 1]} : vector<32x8xf32> to vector<1x8xf32>
    %292 = vector.broadcast %290 : vector<8x1xf32> to vector<8x8xf32>
    %293 = vector.broadcast %291 : vector<1x8xf32> to vector<8x8xf32>
    %294 = arith.addf %292, %293 : vector<8x8xf32>
    %cst_27 = arith.constant 4.000000e-01 : f32
    %295 = arith.mulf %cst_27, %207 : f32
    %296 = math.absf %294 : vector<8x8xf32>
    %297 = vector.broadcast %295 : f32 to vector<8x8xf32>
    %298 = arith.mulf %297, %296 : vector<8x8xf32>
    %299 = arith.addf %289, %298 : vector<8x8xf32>
    %300 = vector.extract_strided_slice %17 {offsets = [0, 9], sizes = [8, 1], strides = [1, 1]} : vector<8x32xf32> to vector<8x1xf32>
    %301 = vector.extract_strided_slice %24 {offsets = [9, 0], sizes = [1, 8], strides = [1, 1]} : vector<32x8xf32> to vector<1x8xf32>
    %302 = vector.broadcast %300 : vector<8x1xf32> to vector<8x8xf32>
    %303 = vector.broadcast %301 : vector<1x8xf32> to vector<8x8xf32>
    %304 = arith.addf %302, %303 : vector<8x8xf32>
    %cst_28 = arith.constant 4.000000e-01 : f32
    %305 = arith.mulf %cst_28, %209 : f32
    %306 = math.absf %304 : vector<8x8xf32>
    %307 = vector.broadcast %305 : f32 to vector<8x8xf32>
    %308 = arith.mulf %307, %306 : vector<8x8xf32>
    %309 = arith.addf %299, %308 : vector<8x8xf32>
    %310 = vector.extract_strided_slice %17 {offsets = [0, 10], sizes = [8, 1], strides = [1, 1]} : vector<8x32xf32> to vector<8x1xf32>
    %311 = vector.extract_strided_slice %24 {offsets = [10, 0], sizes = [1, 8], strides = [1, 1]} : vector<32x8xf32> to vector<1x8xf32>
    %312 = vector.broadcast %310 : vector<8x1xf32> to vector<8x8xf32>
    %313 = vector.broadcast %311 : vector<1x8xf32> to vector<8x8xf32>
    %314 = arith.addf %312, %313 : vector<8x8xf32>
    %cst_29 = arith.constant 4.000000e-01 : f32
    %315 = arith.mulf %cst_29, %211 : f32
    %316 = math.absf %314 : vector<8x8xf32>
    %317 = vector.broadcast %315 : f32 to vector<8x8xf32>
    %318 = arith.mulf %317, %316 : vector<8x8xf32>
    %319 = arith.addf %309, %318 : vector<8x8xf32>
    %320 = vector.extract_strided_slice %17 {offsets = [0, 11], sizes = [8, 1], strides = [1, 1]} : vector<8x32xf32> to vector<8x1xf32>
    %321 = vector.extract_strided_slice %24 {offsets = [11, 0], sizes = [1, 8], strides = [1, 1]} : vector<32x8xf32> to vector<1x8xf32>
    %322 = vector.broadcast %320 : vector<8x1xf32> to vector<8x8xf32>
    %323 = vector.broadcast %321 : vector<1x8xf32> to vector<8x8xf32>
    %324 = arith.addf %322, %323 : vector<8x8xf32>
    %cst_30 = arith.constant 4.000000e-01 : f32
    %325 = arith.mulf %cst_30, %213 : f32
    %326 = math.absf %324 : vector<8x8xf32>
    %327 = vector.broadcast %325 : f32 to vector<8x8xf32>
    %328 = arith.mulf %327, %326 : vector<8x8xf32>
    %329 = arith.addf %319, %328 : vector<8x8xf32>
    %330 = vector.extract_strided_slice %17 {offsets = [0, 12], sizes = [8, 1], strides = [1, 1]} : vector<8x32xf32> to vector<8x1xf32>
    %331 = vector.extract_strided_slice %24 {offsets = [12, 0], sizes = [1, 8], strides = [1, 1]} : vector<32x8xf32> to vector<1x8xf32>
    %332 = vector.broadcast %330 : vector<8x1xf32> to vector<8x8xf32>
    %333 = vector.broadcast %331 : vector<1x8xf32> to vector<8x8xf32>
    %334 = arith.addf %332, %333 : vector<8x8xf32>
    %cst_31 = arith.constant 4.000000e-01 : f32
    %335 = arith.mulf %cst_31, %215 : f32
    %336 = math.absf %334 : vector<8x8xf32>
    %337 = vector.broadcast %335 : f32 to vector<8x8xf32>
    %338 = arith.mulf %337, %336 : vector<8x8xf32>
    %339 = arith.addf %329, %338 : vector<8x8xf32>
    %340 = vector.extract_strided_slice %17 {offsets = [0, 13], sizes = [8, 1], strides = [1, 1]} : vector<8x32xf32> to vector<8x1xf32>
    %341 = vector.extract_strided_slice %24 {offsets = [13, 0], sizes = [1, 8], strides = [1, 1]} : vector<32x8xf32> to vector<1x8xf32>
    %342 = vector.broadcast %340 : vector<8x1xf32> to vector<8x8xf32>
    %343 = vector.broadcast %341 : vector<1x8xf32> to vector<8x8xf32>
    %344 = arith.addf %342, %343 : vector<8x8xf32>
    %cst_32 = arith.constant 4.000000e-01 : f32
    %345 = arith.mulf %cst_32, %217 : f32
    %346 = math.absf %344 : vector<8x8xf32>
    %347 = vector.broadcast %345 : f32 to vector<8x8xf32>
    %348 = arith.mulf %347, %346 : vector<8x8xf32>
    %349 = arith.addf %339, %348 : vector<8x8xf32>
    %350 = vector.extract_strided_slice %17 {offsets = [0, 14], sizes = [8, 1], strides = [1, 1]} : vector<8x32xf32> to vector<8x1xf32>
    %351 = vector.extract_strided_slice %24 {offsets = [14, 0], sizes = [1, 8], strides = [1, 1]} : vector<32x8xf32> to vector<1x8xf32>
    %352 = vector.broadcast %350 : vector<8x1xf32> to vector<8x8xf32>
    %353 = vector.broadcast %351 : vector<1x8xf32> to vector<8x8xf32>
    %354 = arith.addf %352, %353 : vector<8x8xf32>
    %cst_33 = arith.constant 4.000000e-01 : f32
    %355 = arith.mulf %cst_33, %219 : f32
    %356 = math.absf %354 : vector<8x8xf32>
    %357 = vector.broadcast %355 : f32 to vector<8x8xf32>
    %358 = arith.mulf %357, %356 : vector<8x8xf32>
    %359 = arith.addf %349, %358 : vector<8x8xf32>
    %360 = vector.extract_strided_slice %17 {offsets = [0, 15], sizes = [8, 1], strides = [1, 1]} : vector<8x32xf32> to vector<8x1xf32>
    %361 = vector.extract_strided_slice %24 {offsets = [15, 0], sizes = [1, 8], strides = [1, 1]} : vector<32x8xf32> to vector<1x8xf32>
    %362 = vector.broadcast %360 : vector<8x1xf32> to vector<8x8xf32>
    %363 = vector.broadcast %361 : vector<1x8xf32> to vector<8x8xf32>
    %364 = arith.addf %362, %363 : vector<8x8xf32>
    %cst_34 = arith.constant 4.000000e-01 : f32
    %365 = arith.mulf %cst_34, %221 : f32
    %366 = math.absf %364 : vector<8x8xf32>
    %367 = vector.broadcast %365 : f32 to vector<8x8xf32>
    %368 = arith.mulf %367, %366 : vector<8x8xf32>
    %369 = arith.addf %359, %368 : vector<8x8xf32>
    %cst_35 = arith.constant dense<0xFF800000> : vector<8xf32>
    %370 = vector.multi_reduction <maximumf>, %369, %cst_35 [1] : vector<8x8xf32> to vector<8xf32>
    %371 = vector.shape_cast %370 : vector<8xf32> to vector<8x1xf32>
    %372 = vector.broadcast %371 : vector<8x1xf32> to vector<8x8xf32>
    %373 = arith.subf %369, %372 : vector<8x8xf32>
    %374 = math.exp %373 : vector<8x8xf32>
    %cst_36 = arith.constant dense<0.000000e+00> : vector<8xf32>
    %375 = vector.multi_reduction <add>, %374, %cst_36 [1] : vector<8x8xf32> to vector<8xf32>
    %376 = vector.shape_cast %375 : vector<8xf32> to vector<8x1xf32>
    %377 = arith.truncf %374 : vector<8x8xf32> to vector<8x8xbf16>
    %378 = vector.extract_strided_slice %13 {offsets = [0, 8], sizes = [8, 8], strides = [1, 1]} : vector<8x32xf32> to vector<8x8xf32>
    %379 = arith.truncf %378 : vector<8x8xf32> to vector<8x8xbf16>
    %cst_37 = arith.constant dense<0.000000e+00> : vector<8x8xf32>
    %380 = tpu.matmul %377, %379, %cst_37 {dimension_numbers = #tpu.dot_dimension_numbers<[1], [0], [0], [1], [0, 0, 1, 1], [], []>} : vector<8x8xbf16>, vector<8x8xbf16>, vector<8x8xf32> -> vector<8x8xf32>
    %381 = tpu.reciprocal %376 {approx = true} : vector<8x1xf32> -> vector<8x1xf32>
    %382 = vector.broadcast %381 : vector<8x1xf32> to vector<8x8xf32>
    %383 = arith.mulf %380, %382 : vector<8x8xf32>
    %c0_38 = arith.constant 0 : index
    %c8_39 = arith.constant 8 : index
    %384 = vector.load %arg14[%c0_38, %c8_39] : memref<8x32xf32, #tpu.memory_space<vmem>>, vector<8x8xf32>
    tpu.vector_store %arg14[%c0_38, %c8_39], %383 {strides = array<i32>} : memref<8x32xf32, #tpu.memory_space<vmem>>, vector<8x8xf32>,
    %385 = arith.index_cast %arg0 : i32 to index
    %c16 = arith.constant 16 : index
    %386 = memref.load %arg7[%385, %c16] : memref<3x32xf32, #tpu.memory_space<smem>>
    %387 = arith.index_cast %arg0 : i32 to index
    %c17 = arith.constant 17 : index
    %388 = memref.load %arg7[%387, %c17] : memref<3x32xf32, #tpu.memory_space<smem>>
    %389 = arith.index_cast %arg0 : i32 to index
    %c18 = arith.constant 18 : index
    %390 = memref.load %arg7[%389, %c18] : memref<3x32xf32, #tpu.memory_space<smem>>
    %391 = arith.index_cast %arg0 : i32 to index
    %c19 = arith.constant 19 : index
    %392 = memref.load %arg7[%391, %c19] : memref<3x32xf32, #tpu.memory_space<smem>>
    %393 = arith.index_cast %arg0 : i32 to index
    %c20 = arith.constant 20 : index
    %394 = memref.load %arg7[%393, %c20] : memref<3x32xf32, #tpu.memory_space<smem>>
    %395 = arith.index_cast %arg0 : i32 to index
    %c21 = arith.constant 21 : index
    %396 = memref.load %arg7[%395, %c21] : memref<3x32xf32, #tpu.memory_space<smem>>
    %397 = arith.index_cast %arg0 : i32 to index
    %c22 = arith.constant 22 : index
    %398 = memref.load %arg7[%397, %c22] : memref<3x32xf32, #tpu.memory_space<smem>>
    %399 = arith.index_cast %arg0 : i32 to index
    %c23 = arith.constant 23 : index
    %400 = memref.load %arg7[%399, %c23] : memref<3x32xf32, #tpu.memory_space<smem>>
    %401 = vector.extract_strided_slice %17 {offsets = [0, 16], sizes = [8, 1], strides = [1, 1]} : vector<8x32xf32> to vector<8x1xf32>
    %402 = vector.broadcast %386 : f32 to vector<8x1xf32>
    %403 = arith.mulf %402, %401 : vector<8x1xf32>
    %404 = vector.extract_strided_slice %24 {offsets = [16, 0], sizes = [1, 8], strides = [1, 1]} : vector<32x8xf32> to vector<1x8xf32>
    %405 = vector.broadcast %386 : f32 to vector<1x8xf32>
    %406 = arith.mulf %405, %404 : vector<1x8xf32>
    %407 = vector.extract_strided_slice %17 {offsets = [0, 17], sizes = [8, 1], strides = [1, 1]} : vector<8x32xf32> to vector<8x1xf32>
    %408 = vector.broadcast %388 : f32 to vector<8x1xf32>
    %409 = arith.mulf %408, %407 : vector<8x1xf32>
    %410 = arith.addf %403, %409 : vector<8x1xf32>
    %411 = vector.extract_strided_slice %24 {offsets = [17, 0], sizes = [1, 8], strides = [1, 1]} : vector<32x8xf32> to vector<1x8xf32>
    %412 = vector.broadcast %388 : f32 to vector<1x8xf32>
    %413 = arith.mulf %412, %411 : vector<1x8xf32>
    %414 = arith.addf %406, %413 : vector<1x8xf32>
    %415 = vector.extract_strided_slice %17 {offsets = [0, 18], sizes = [8, 1], strides = [1, 1]} : vector<8x32xf32> to vector<8x1xf32>
    %416 = vector.broadcast %390 : f32 to vector<8x1xf32>
    %417 = arith.mulf %416, %415 : vector<8x1xf32>
    %418 = arith.addf %410, %417 : vector<8x1xf32>
    %419 = vector.extract_strided_slice %24 {offsets = [18, 0], sizes = [1, 8], strides = [1, 1]} : vector<32x8xf32> to vector<1x8xf32>
    %420 = vector.broadcast %390 : f32 to vector<1x8xf32>
    %421 = arith.mulf %420, %419 : vector<1x8xf32>
    %422 = arith.addf %414, %421 : vector<1x8xf32>
    %423 = vector.extract_strided_slice %17 {offsets = [0, 19], sizes = [8, 1], strides = [1, 1]} : vector<8x32xf32> to vector<8x1xf32>
    %424 = vector.broadcast %392 : f32 to vector<8x1xf32>
    %425 = arith.mulf %424, %423 : vector<8x1xf32>
    %426 = arith.addf %418, %425 : vector<8x1xf32>
    %427 = vector.extract_strided_slice %24 {offsets = [19, 0], sizes = [1, 8], strides = [1, 1]} : vector<32x8xf32> to vector<1x8xf32>
    %428 = vector.broadcast %392 : f32 to vector<1x8xf32>
    %429 = arith.mulf %428, %427 : vector<1x8xf32>
    %430 = arith.addf %422, %429 : vector<1x8xf32>
    %431 = vector.extract_strided_slice %17 {offsets = [0, 20], sizes = [8, 1], strides = [1, 1]} : vector<8x32xf32> to vector<8x1xf32>
    %432 = vector.broadcast %394 : f32 to vector<8x1xf32>
    %433 = arith.mulf %432, %431 : vector<8x1xf32>
    %434 = arith.addf %426, %433 : vector<8x1xf32>
    %435 = vector.extract_strided_slice %24 {offsets = [20, 0], sizes = [1, 8], strides = [1, 1]} : vector<32x8xf32> to vector<1x8xf32>
    %436 = vector.broadcast %394 : f32 to vector<1x8xf32>
    %437 = arith.mulf %436, %435 : vector<1x8xf32>
    %438 = arith.addf %430, %437 : vector<1x8xf32>
    %439 = vector.extract_strided_slice %17 {offsets = [0, 21], sizes = [8, 1], strides = [1, 1]} : vector<8x32xf32> to vector<8x1xf32>
    %440 = vector.broadcast %396 : f32 to vector<8x1xf32>
    %441 = arith.mulf %440, %439 : vector<8x1xf32>
    %442 = arith.addf %434, %441 : vector<8x1xf32>
    %443 = vector.extract_strided_slice %24 {offsets = [21, 0], sizes = [1, 8], strides = [1, 1]} : vector<32x8xf32> to vector<1x8xf32>
    %444 = vector.broadcast %396 : f32 to vector<1x8xf32>
    %445 = arith.mulf %444, %443 : vector<1x8xf32>
    %446 = arith.addf %438, %445 : vector<1x8xf32>
    %447 = vector.extract_strided_slice %17 {offsets = [0, 22], sizes = [8, 1], strides = [1, 1]} : vector<8x32xf32> to vector<8x1xf32>
    %448 = vector.broadcast %398 : f32 to vector<8x1xf32>
    %449 = arith.mulf %448, %447 : vector<8x1xf32>
    %450 = arith.addf %442, %449 : vector<8x1xf32>
    %451 = vector.extract_strided_slice %24 {offsets = [22, 0], sizes = [1, 8], strides = [1, 1]} : vector<32x8xf32> to vector<1x8xf32>
    %452 = vector.broadcast %398 : f32 to vector<1x8xf32>
    %453 = arith.mulf %452, %451 : vector<1x8xf32>
    %454 = arith.addf %446, %453 : vector<1x8xf32>
    %455 = vector.extract_strided_slice %17 {offsets = [0, 23], sizes = [8, 1], strides = [1, 1]} : vector<8x32xf32> to vector<8x1xf32>
    %456 = vector.broadcast %400 : f32 to vector<8x1xf32>
    %457 = arith.mulf %456, %455 : vector<8x1xf32>
    %458 = arith.addf %450, %457 : vector<8x1xf32>
    %459 = vector.extract_strided_slice %24 {offsets = [23, 0], sizes = [1, 8], strides = [1, 1]} : vector<32x8xf32> to vector<1x8xf32>
    %460 = vector.broadcast %400 : f32 to vector<1x8xf32>
    %461 = arith.mulf %460, %459 : vector<1x8xf32>
    %462 = arith.addf %454, %461 : vector<1x8xf32>
    %463 = vector.broadcast %458 : vector<8x1xf32> to vector<8x8xf32>
    %464 = vector.broadcast %462 : vector<1x8xf32> to vector<8x8xf32>
    %465 = arith.addf %463, %464 : vector<8x8xf32>
    %cst_40 = arith.constant 6.000000e-01 : f32
    %466 = vector.broadcast %cst_40 : f32 to vector<8x8xf32>
    %467 = arith.mulf %466, %465 : vector<8x8xf32>
    %468 = arith.addf %26, %467 : vector<8x8xf32>
    %469 = vector.extract_strided_slice %17 {offsets = [0, 16], sizes = [8, 1], strides = [1, 1]} : vector<8x32xf32> to vector<8x1xf32>
    %470 = vector.extract_strided_slice %24 {offsets = [16, 0], sizes = [1, 8], strides = [1, 1]} : vector<32x8xf32> to vector<1x8xf32>
    %471 = vector.broadcast %469 : vector<8x1xf32> to vector<8x8xf32>
    %472 = vector.broadcast %470 : vector<1x8xf32> to vector<8x8xf32>
    %473 = arith.addf %471, %472 : vector<8x8xf32>
    %cst_41 = arith.constant 4.000000e-01 : f32
    %474 = arith.mulf %cst_41, %386 : f32
    %475 = math.absf %473 : vector<8x8xf32>
    %476 = vector.broadcast %474 : f32 to vector<8x8xf32>
    %477 = arith.mulf %476, %475 : vector<8x8xf32>
    %478 = arith.addf %468, %477 : vector<8x8xf32>
    %479 = vector.extract_strided_slice %17 {offsets = [0, 17], sizes = [8, 1], strides = [1, 1]} : vector<8x32xf32> to vector<8x1xf32>
    %480 = vector.extract_strided_slice %24 {offsets = [17, 0], sizes = [1, 8], strides = [1, 1]} : vector<32x8xf32> to vector<1x8xf32>
    %481 = vector.broadcast %479 : vector<8x1xf32> to vector<8x8xf32>
    %482 = vector.broadcast %480 : vector<1x8xf32> to vector<8x8xf32>
    %483 = arith.addf %481, %482 : vector<8x8xf32>
    %cst_42 = arith.constant 4.000000e-01 : f32
    %484 = arith.mulf %cst_42, %388 : f32
    %485 = math.absf %483 : vector<8x8xf32>
    %486 = vector.broadcast %484 : f32 to vector<8x8xf32>
    %487 = arith.mulf %486, %485 : vector<8x8xf32>
    %488 = arith.addf %478, %487 : vector<8x8xf32>
    %489 = vector.extract_strided_slice %17 {offsets = [0, 18], sizes = [8, 1], strides = [1, 1]} : vector<8x32xf32> to vector<8x1xf32>
    %490 = vector.extract_strided_slice %24 {offsets = [18, 0], sizes = [1, 8], strides = [1, 1]} : vector<32x8xf32> to vector<1x8xf32>
    %491 = vector.broadcast %489 : vector<8x1xf32> to vector<8x8xf32>
    %492 = vector.broadcast %490 : vector<1x8xf32> to vector<8x8xf32>
    %493 = arith.addf %491, %492 : vector<8x8xf32>
    %cst_43 = arith.constant 4.000000e-01 : f32
    %494 = arith.mulf %cst_43, %390 : f32
    %495 = math.absf %493 : vector<8x8xf32>
    %496 = vector.broadcast %494 : f32 to vector<8x8xf32>
    %497 = arith.mulf %496, %495 : vector<8x8xf32>
    %498 = arith.addf %488, %497 : vector<8x8xf32>
    %499 = vector.extract_strided_slice %17 {offsets = [0, 19], sizes = [8, 1], strides = [1, 1]} : vector<8x32xf32> to vector<8x1xf32>
    %500 = vector.extract_strided_slice %24 {offsets = [19, 0], sizes = [1, 8], strides = [1, 1]} : vector<32x8xf32> to vector<1x8xf32>
    %501 = vector.broadcast %499 : vector<8x1xf32> to vector<8x8xf32>
    %502 = vector.broadcast %500 : vector<1x8xf32> to vector<8x8xf32>
    %503 = arith.addf %501, %502 : vector<8x8xf32>
    %cst_44 = arith.constant 4.000000e-01 : f32
    %504 = arith.mulf %cst_44, %392 : f32
    %505 = math.absf %503 : vector<8x8xf32>
    %506 = vector.broadcast %504 : f32 to vector<8x8xf32>
    %507 = arith.mulf %506, %505 : vector<8x8xf32>
    %508 = arith.addf %498, %507 : vector<8x8xf32>
    %509 = vector.extract_strided_slice %17 {offsets = [0, 20], sizes = [8, 1], strides = [1, 1]} : vector<8x32xf32> to vector<8x1xf32>
    %510 = vector.extract_strided_slice %24 {offsets = [20, 0], sizes = [1, 8], strides = [1, 1]} : vector<32x8xf32> to vector<1x8xf32>
    %511 = vector.broadcast %509 : vector<8x1xf32> to vector<8x8xf32>
    %512 = vector.broadcast %510 : vector<1x8xf32> to vector<8x8xf32>
    %513 = arith.addf %511, %512 : vector<8x8xf32>
    %cst_45 = arith.constant 4.000000e-01 : f32
    %514 = arith.mulf %cst_45, %394 : f32
    %515 = math.absf %513 : vector<8x8xf32>
    %516 = vector.broadcast %514 : f32 to vector<8x8xf32>
    %517 = arith.mulf %516, %515 : vector<8x8xf32>
    %518 = arith.addf %508, %517 : vector<8x8xf32>
    %519 = vector.extract_strided_slice %17 {offsets = [0, 21], sizes = [8, 1], strides = [1, 1]} : vector<8x32xf32> to vector<8x1xf32>
    %520 = vector.extract_strided_slice %24 {offsets = [21, 0], sizes = [1, 8], strides = [1, 1]} : vector<32x8xf32> to vector<1x8xf32>
    %521 = vector.broadcast %519 : vector<8x1xf32> to vector<8x8xf32>
    %522 = vector.broadcast %520 : vector<1x8xf32> to vector<8x8xf32>
    %523 = arith.addf %521, %522 : vector<8x8xf32>
    %cst_46 = arith.constant 4.000000e-01 : f32
    %524 = arith.mulf %cst_46, %396 : f32
    %525 = math.absf %523 : vector<8x8xf32>
    %526 = vector.broadcast %524 : f32 to vector<8x8xf32>
    %527 = arith.mulf %526, %525 : vector<8x8xf32>
    %528 = arith.addf %518, %527 : vector<8x8xf32>
    %529 = vector.extract_strided_slice %17 {offsets = [0, 22], sizes = [8, 1], strides = [1, 1]} : vector<8x32xf32> to vector<8x1xf32>
    %530 = vector.extract_strided_slice %24 {offsets = [22, 0], sizes = [1, 8], strides = [1, 1]} : vector<32x8xf32> to vector<1x8xf32>
    %531 = vector.broadcast %529 : vector<8x1xf32> to vector<8x8xf32>
    %532 = vector.broadcast %530 : vector<1x8xf32> to vector<8x8xf32>
    %533 = arith.addf %531, %532 : vector<8x8xf32>
    %cst_47 = arith.constant 4.000000e-01 : f32
    %534 = arith.mulf %cst_47, %398 : f32
    %535 = math.absf %533 : vector<8x8xf32>
    %536 = vector.broadcast %534 : f32 to vector<8x8xf32>
    %537 = arith.mulf %536, %535 : vector<8x8xf32>
    %538 = arith.addf %528, %537 : vector<8x8xf32>
    %539 = vector.extract_strided_slice %17 {offsets = [0, 23], sizes = [8, 1], strides = [1, 1]} : vector<8x32xf32> to vector<8x1xf32>
    %540 = vector.extract_strided_slice %24 {offsets = [23, 0], sizes = [1, 8], strides = [1, 1]} : vector<32x8xf32> to vector<1x8xf32>
    %541 = vector.broadcast %539 : vector<8x1xf32> to vector<8x8xf32>
    %542 = vector.broadcast %540 : vector<1x8xf32> to vector<8x8xf32>
    %543 = arith.addf %541, %542 : vector<8x8xf32>
    %cst_48 = arith.constant 4.000000e-01 : f32
    %544 = arith.mulf %cst_48, %400 : f32
    %545 = math.absf %543 : vector<8x8xf32>
    %546 = vector.broadcast %544 : f32 to vector<8x8xf32>
    %547 = arith.mulf %546, %545 : vector<8x8xf32>
    %548 = arith.addf %538, %547 : vector<8x8xf32>
    %cst_49 = arith.constant dense<0xFF800000> : vector<8xf32>
    %549 = vector.multi_reduction <maximumf>, %548, %cst_49 [1] : vector<8x8xf32> to vector<8xf32>
    %550 = vector.shape_cast %549 : vector<8xf32> to vector<8x1xf32>
    %551 = vector.broadcast %550 : vector<8x1xf32> to vector<8x8xf32>
    %552 = arith.subf %548, %551 : vector<8x8xf32>
    %553 = math.exp %552 : vector<8x8xf32>
    %cst_50 = arith.constant dense<0.000000e+00> : vector<8xf32>
    %554 = vector.multi_reduction <add>, %553, %cst_50 [1] : vector<8x8xf32> to vector<8xf32>
    %555 = vector.shape_cast %554 : vector<8xf32> to vector<8x1xf32>
    %556 = arith.truncf %553 : vector<8x8xf32> to vector<8x8xbf16>
    %557 = vector.extract_strided_slice %13 {offsets = [0, 16], sizes = [8, 8], strides = [1, 1]} : vector<8x32xf32> to vector<8x8xf32>
    %558 = arith.truncf %557 : vector<8x8xf32> to vector<8x8xbf16>
    %cst_51 = arith.constant dense<0.000000e+00> : vector<8x8xf32>
    %559 = tpu.matmul %556, %558, %cst_51 {dimension_numbers = #tpu.dot_dimension_numbers<[1], [0], [0], [1], [0, 0, 1, 1], [], []>} : vector<8x8xbf16>, vector<8x8xbf16>, vector<8x8xf32> -> vector<8x8xf32>
    %560 = tpu.reciprocal %555 {approx = true} : vector<8x1xf32> -> vector<8x1xf32>
    %561 = vector.broadcast %560 : vector<8x1xf32> to vector<8x8xf32>
    %562 = arith.mulf %559, %561 : vector<8x8xf32>
    %c0_52 = arith.constant 0 : index
    %c16_53 = arith.constant 16 : index
    %563 = vector.load %arg14[%c0_52, %c16_53] : memref<8x32xf32, #tpu.memory_space<vmem>>, vector<8x8xf32>
    tpu.vector_store %arg14[%c0_52, %c16_53], %562 {strides = array<i32>} : memref<8x32xf32, #tpu.memory_space<vmem>>, vector<8x8xf32>,
    %564 = arith.index_cast %arg0 : i32 to index
    %c24 = arith.constant 24 : index
    %565 = memref.load %arg7[%564, %c24] : memref<3x32xf32, #tpu.memory_space<smem>>
    %566 = arith.index_cast %arg0 : i32 to index
    %c25 = arith.constant 25 : index
    %567 = memref.load %arg7[%566, %c25] : memref<3x32xf32, #tpu.memory_space<smem>>
    %568 = arith.index_cast %arg0 : i32 to index
    %c26 = arith.constant 26 : index
    %569 = memref.load %arg7[%568, %c26] : memref<3x32xf32, #tpu.memory_space<smem>>
    %570 = arith.index_cast %arg0 : i32 to index
    %c27 = arith.constant 27 : index
    %571 = memref.load %arg7[%570, %c27] : memref<3x32xf32, #tpu.memory_space<smem>>
    %572 = arith.index_cast %arg0 : i32 to index
    %c28 = arith.constant 28 : index
    %573 = memref.load %arg7[%572, %c28] : memref<3x32xf32, #tpu.memory_space<smem>>
    %574 = arith.index_cast %arg0 : i32 to index
    %c29 = arith.constant 29 : index
    %575 = memref.load %arg7[%574, %c29] : memref<3x32xf32, #tpu.memory_space<smem>>
    %576 = arith.index_cast %arg0 : i32 to index
    %c30 = arith.constant 30 : index
    %577 = memref.load %arg7[%576, %c30] : memref<3x32xf32, #tpu.memory_space<smem>>
    %578 = arith.index_cast %arg0 : i32 to index
    %c31 = arith.constant 31 : index
    %579 = memref.load %arg7[%578, %c31] : memref<3x32xf32, #tpu.memory_space<smem>>
    %580 = vector.extract_strided_slice %17 {offsets = [0, 24], sizes = [8, 1], strides = [1, 1]} : vector<8x32xf32> to vector<8x1xf32>
    %581 = vector.broadcast %565 : f32 to vector<8x1xf32>
    %582 = arith.mulf %581, %580 : vector<8x1xf32>
    %583 = vector.extract_strided_slice %24 {offsets = [24, 0], sizes = [1, 8], strides = [1, 1]} : vector<32x8xf32> to vector<1x8xf32>
    %584 = vector.broadcast %565 : f32 to vector<1x8xf32>
    %585 = arith.mulf %584, %583 : vector<1x8xf32>
    %586 = vector.extract_strided_slice %17 {offsets = [0, 25], sizes = [8, 1], strides = [1, 1]} : vector<8x32xf32> to vector<8x1xf32>
    %587 = vector.broadcast %567 : f32 to vector<8x1xf32>
    %588 = arith.mulf %587, %586 : vector<8x1xf32>
    %589 = arith.addf %582, %588 : vector<8x1xf32>
    %590 = vector.extract_strided_slice %24 {offsets = [25, 0], sizes = [1, 8], strides = [1, 1]} : vector<32x8xf32> to vector<1x8xf32>
    %591 = vector.broadcast %567 : f32 to vector<1x8xf32>
    %592 = arith.mulf %591, %590 : vector<1x8xf32>
    %593 = arith.addf %585, %592 : vector<1x8xf32>
    %594 = vector.extract_strided_slice %17 {offsets = [0, 26], sizes = [8, 1], strides = [1, 1]} : vector<8x32xf32> to vector<8x1xf32>
    %595 = vector.broadcast %569 : f32 to vector<8x1xf32>
    %596 = arith.mulf %595, %594 : vector<8x1xf32>
    %597 = arith.addf %589, %596 : vector<8x1xf32>
    %598 = vector.extract_strided_slice %24 {offsets = [26, 0], sizes = [1, 8], strides = [1, 1]} : vector<32x8xf32> to vector<1x8xf32>
    %599 = vector.broadcast %569 : f32 to vector<1x8xf32>
    %600 = arith.mulf %599, %598 : vector<1x8xf32>
    %601 = arith.addf %593, %600 : vector<1x8xf32>
    %602 = vector.extract_strided_slice %17 {offsets = [0, 27], sizes = [8, 1], strides = [1, 1]} : vector<8x32xf32> to vector<8x1xf32>
    %603 = vector.broadcast %571 : f32 to vector<8x1xf32>
    %604 = arith.mulf %603, %602 : vector<8x1xf32>
    %605 = arith.addf %597, %604 : vector<8x1xf32>
    %606 = vector.extract_strided_slice %24 {offsets = [27, 0], sizes = [1, 8], strides = [1, 1]} : vector<32x8xf32> to vector<1x8xf32>
    %607 = vector.broadcast %571 : f32 to vector<1x8xf32>
    %608 = arith.mulf %607, %606 : vector<1x8xf32>
    %609 = arith.addf %601, %608 : vector<1x8xf32>
    %610 = vector.extract_strided_slice %17 {offsets = [0, 28], sizes = [8, 1], strides = [1, 1]} : vector<8x32xf32> to vector<8x1xf32>
    %611 = vector.broadcast %573 : f32 to vector<8x1xf32>
    %612 = arith.mulf %611, %610 : vector<8x1xf32>
    %613 = arith.addf %605, %612 : vector<8x1xf32>
    %614 = vector.extract_strided_slice %24 {offsets = [28, 0], sizes = [1, 8], strides = [1, 1]} : vector<32x8xf32> to vector<1x8xf32>
    %615 = vector.broadcast %573 : f32 to vector<1x8xf32>
    %616 = arith.mulf %615, %614 : vector<1x8xf32>
    %617 = arith.addf %609, %616 : vector<1x8xf32>
    %618 = vector.extract_strided_slice %17 {offsets = [0, 29], sizes = [8, 1], strides = [1, 1]} : vector<8x32xf32> to vector<8x1xf32>
    %619 = vector.broadcast %575 : f32 to vector<8x1xf32>
    %620 = arith.mulf %619, %618 : vector<8x1xf32>
    %621 = arith.addf %613, %620 : vector<8x1xf32>
    %622 = vector.extract_strided_slice %24 {offsets = [29, 0], sizes = [1, 8], strides = [1, 1]} : vector<32x8xf32> to vector<1x8xf32>
    %623 = vector.broadcast %575 : f32 to vector<1x8xf32>
    %624 = arith.mulf %623, %622 : vector<1x8xf32>
    %625 = arith.addf %617, %624 : vector<1x8xf32>
    %626 = vector.extract_strided_slice %17 {offsets = [0, 30], sizes = [8, 1], strides = [1, 1]} : vector<8x32xf32> to vector<8x1xf32>
    %627 = vector.broadcast %577 : f32 to vector<8x1xf32>
    %628 = arith.mulf %627, %626 : vector<8x1xf32>
    %629 = arith.addf %621, %628 : vector<8x1xf32>
    %630 = vector.extract_strided_slice %24 {offsets = [30, 0], sizes = [1, 8], strides = [1, 1]} : vector<32x8xf32> to vector<1x8xf32>
    %631 = vector.broadcast %577 : f32 to vector<1x8xf32>
    %632 = arith.mulf %631, %630 : vector<1x8xf32>
    %633 = arith.addf %625, %632 : vector<1x8xf32>
    %634 = vector.extract_strided_slice %17 {offsets = [0, 31], sizes = [8, 1], strides = [1, 1]} : vector<8x32xf32> to vector<8x1xf32>
    %635 = vector.broadcast %579 : f32 to vector<8x1xf32>
    %636 = arith.mulf %635, %634 : vector<8x1xf32>
    %637 = arith.addf %629, %636 : vector<8x1xf32>
    %638 = vector.extract_strided_slice %24 {offsets = [31, 0], sizes = [1, 8], strides = [1, 1]} : vector<32x8xf32> to vector<1x8xf32>
    %639 = vector.broadcast %579 : f32 to vector<1x8xf32>
    %640 = arith.mulf %639, %638 : vector<1x8xf32>
    %641 = arith.addf %633, %640 : vector<1x8xf32>
    %642 = vector.broadcast %637 : vector<8x1xf32> to vector<8x8xf32>
    %643 = vector.broadcast %641 : vector<1x8xf32> to vector<8x8xf32>
    %644 = arith.addf %642, %643 : vector<8x8xf32>
    %cst_54 = arith.constant 6.000000e-01 : f32
    %645 = vector.broadcast %cst_54 : f32 to vector<8x8xf32>
    %646 = arith.mulf %645, %644 : vector<8x8xf32>
    %647 = arith.addf %26, %646 : vector<8x8xf32>
    %648 = vector.extract_strided_slice %17 {offsets = [0, 24], sizes = [8, 1], strides = [1, 1]} : vector<8x32xf32> to vector<8x1xf32>
    %649 = vector.extract_strided_slice %24 {offsets = [24, 0], sizes = [1, 8], strides = [1, 1]} : vector<32x8xf32> to vector<1x8xf32>
    %650 = vector.broadcast %648 : vector<8x1xf32> to vector<8x8xf32>
    %651 = vector.broadcast %649 : vector<1x8xf32> to vector<8x8xf32>
    %652 = arith.addf %650, %651 : vector<8x8xf32>
    %cst_55 = arith.constant 4.000000e-01 : f32
    %653 = arith.mulf %cst_55, %565 : f32
    %654 = math.absf %652 : vector<8x8xf32>
    %655 = vector.broadcast %653 : f32 to vector<8x8xf32>
    %656 = arith.mulf %655, %654 : vector<8x8xf32>
    %657 = arith.addf %647, %656 : vector<8x8xf32>
    %658 = vector.extract_strided_slice %17 {offsets = [0, 25], sizes = [8, 1], strides = [1, 1]} : vector<8x32xf32> to vector<8x1xf32>
    %659 = vector.extract_strided_slice %24 {offsets = [25, 0], sizes = [1, 8], strides = [1, 1]} : vector<32x8xf32> to vector<1x8xf32>
    %660 = vector.broadcast %658 : vector<8x1xf32> to vector<8x8xf32>
    %661 = vector.broadcast %659 : vector<1x8xf32> to vector<8x8xf32>
    %662 = arith.addf %660, %661 : vector<8x8xf32>
    %cst_56 = arith.constant 4.000000e-01 : f32
    %663 = arith.mulf %cst_56, %567 : f32
    %664 = math.absf %662 : vector<8x8xf32>
    %665 = vector.broadcast %663 : f32 to vector<8x8xf32>
    %666 = arith.mulf %665, %664 : vector<8x8xf32>
    %667 = arith.addf %657, %666 : vector<8x8xf32>
    %668 = vector.extract_strided_slice %17 {offsets = [0, 26], sizes = [8, 1], strides = [1, 1]} : vector<8x32xf32> to vector<8x1xf32>
    %669 = vector.extract_strided_slice %24 {offsets = [26, 0], sizes = [1, 8], strides = [1, 1]} : vector<32x8xf32> to vector<1x8xf32>
    %670 = vector.broadcast %668 : vector<8x1xf32> to vector<8x8xf32>
    %671 = vector.broadcast %669 : vector<1x8xf32> to vector<8x8xf32>
    %672 = arith.addf %670, %671 : vector<8x8xf32>
    %cst_57 = arith.constant 4.000000e-01 : f32
    %673 = arith.mulf %cst_57, %569 : f32
    %674 = math.absf %672 : vector<8x8xf32>
    %675 = vector.broadcast %673 : f32 to vector<8x8xf32>
    %676 = arith.mulf %675, %674 : vector<8x8xf32>
    %677 = arith.addf %667, %676 : vector<8x8xf32>
    %678 = vector.extract_strided_slice %17 {offsets = [0, 27], sizes = [8, 1], strides = [1, 1]} : vector<8x32xf32> to vector<8x1xf32>
    %679 = vector.extract_strided_slice %24 {offsets = [27, 0], sizes = [1, 8], strides = [1, 1]} : vector<32x8xf32> to vector<1x8xf32>
    %680 = vector.broadcast %678 : vector<8x1xf32> to vector<8x8xf32>
    %681 = vector.broadcast %679 : vector<1x8xf32> to vector<8x8xf32>
    %682 = arith.addf %680, %681 : vector<8x8xf32>
    %cst_58 = arith.constant 4.000000e-01 : f32
    %683 = arith.mulf %cst_58, %571 : f32
    %684 = math.absf %682 : vector<8x8xf32>
    %685 = vector.broadcast %683 : f32 to vector<8x8xf32>
    %686 = arith.mulf %685, %684 : vector<8x8xf32>
    %687 = arith.addf %677, %686 : vector<8x8xf32>
    %688 = vector.extract_strided_slice %17 {offsets = [0, 28], sizes = [8, 1], strides = [1, 1]} : vector<8x32xf32> to vector<8x1xf32>
    %689 = vector.extract_strided_slice %24 {offsets = [28, 0], sizes = [1, 8], strides = [1, 1]} : vector<32x8xf32> to vector<1x8xf32>
    %690 = vector.broadcast %688 : vector<8x1xf32> to vector<8x8xf32>
    %691 = vector.broadcast %689 : vector<1x8xf32> to vector<8x8xf32>
    %692 = arith.addf %690, %691 : vector<8x8xf32>
    %cst_59 = arith.constant 4.000000e-01 : f32
    %693 = arith.mulf %cst_59, %573 : f32
    %694 = math.absf %692 : vector<8x8xf32>
    %695 = vector.broadcast %693 : f32 to vector<8x8xf32>
    %696 = arith.mulf %695, %694 : vector<8x8xf32>
    %697 = arith.addf %687, %696 : vector<8x8xf32>
    %698 = vector.extract_strided_slice %17 {offsets = [0, 29], sizes = [8, 1], strides = [1, 1]} : vector<8x32xf32> to vector<8x1xf32>
    %699 = vector.extract_strided_slice %24 {offsets = [29, 0], sizes = [1, 8], strides = [1, 1]} : vector<32x8xf32> to vector<1x8xf32>
    %700 = vector.broadcast %698 : vector<8x1xf32> to vector<8x8xf32>
    %701 = vector.broadcast %699 : vector<1x8xf32> to vector<8x8xf32>
    %702 = arith.addf %700, %701 : vector<8x8xf32>
    %cst_60 = arith.constant 4.000000e-01 : f32
    %703 = arith.mulf %cst_60, %575 : f32
    %704 = math.absf %702 : vector<8x8xf32>
    %705 = vector.broadcast %703 : f32 to vector<8x8xf32>
    %706 = arith.mulf %705, %704 : vector<8x8xf32>
    %707 = arith.addf %697, %706 : vector<8x8xf32>
    %708 = vector.extract_strided_slice %17 {offsets = [0, 30], sizes = [8, 1], strides = [1, 1]} : vector<8x32xf32> to vector<8x1xf32>
    %709 = vector.extract_strided_slice %24 {offsets = [30, 0], sizes = [1, 8], strides = [1, 1]} : vector<32x8xf32> to vector<1x8xf32>
    %710 = vector.broadcast %708 : vector<8x1xf32> to vector<8x8xf32>
    %711 = vector.broadcast %709 : vector<1x8xf32> to vector<8x8xf32>
    %712 = arith.addf %710, %711 : vector<8x8xf32>
    %cst_61 = arith.constant 4.000000e-01 : f32
    %713 = arith.mulf %cst_61, %577 : f32
    %714 = math.absf %712 : vector<8x8xf32>
    %715 = vector.broadcast %713 : f32 to vector<8x8xf32>
    %716 = arith.mulf %715, %714 : vector<8x8xf32>
    %717 = arith.addf %707, %716 : vector<8x8xf32>
    %718 = vector.extract_strided_slice %17 {offsets = [0, 31], sizes = [8, 1], strides = [1, 1]} : vector<8x32xf32> to vector<8x1xf32>
    %719 = vector.extract_strided_slice %24 {offsets = [31, 0], sizes = [1, 8], strides = [1, 1]} : vector<32x8xf32> to vector<1x8xf32>
    %720 = vector.broadcast %718 : vector<8x1xf32> to vector<8x8xf32>
    %721 = vector.broadcast %719 : vector<1x8xf32> to vector<8x8xf32>
    %722 = arith.addf %720, %721 : vector<8x8xf32>
    %cst_62 = arith.constant 4.000000e-01 : f32
    %723 = arith.mulf %cst_62, %579 : f32
    %724 = math.absf %722 : vector<8x8xf32>
    %725 = vector.broadcast %723 : f32 to vector<8x8xf32>
    %726 = arith.mulf %725, %724 : vector<8x8xf32>
    %727 = arith.addf %717, %726 : vector<8x8xf32>
    %cst_63 = arith.constant dense<0xFF800000> : vector<8xf32>
    %728 = vector.multi_reduction <maximumf>, %727, %cst_63 [1] : vector<8x8xf32> to vector<8xf32>
    %729 = vector.shape_cast %728 : vector<8xf32> to vector<8x1xf32>
    %730 = vector.broadcast %729 : vector<8x1xf32> to vector<8x8xf32>
    %731 = arith.subf %727, %730 : vector<8x8xf32>
    %732 = math.exp %731 : vector<8x8xf32>
    %cst_64 = arith.constant dense<0.000000e+00> : vector<8xf32>
    %733 = vector.multi_reduction <add>, %732, %cst_64 [1] : vector<8x8xf32> to vector<8xf32>
    %734 = vector.shape_cast %733 : vector<8xf32> to vector<8x1xf32>
    %735 = arith.truncf %732 : vector<8x8xf32> to vector<8x8xbf16>
    %736 = vector.extract_strided_slice %13 {offsets = [0, 24], sizes = [8, 8], strides = [1, 1]} : vector<8x32xf32> to vector<8x8xf32>
    %737 = arith.truncf %736 : vector<8x8xf32> to vector<8x8xbf16>
    %cst_65 = arith.constant dense<0.000000e+00> : vector<8x8xf32>
    %738 = tpu.matmul %735, %737, %cst_65 {dimension_numbers = #tpu.dot_dimension_numbers<[1], [0], [0], [1], [0, 0, 1, 1], [], []>} : vector<8x8xbf16>, vector<8x8xbf16>, vector<8x8xf32> -> vector<8x8xf32>
    %739 = tpu.reciprocal %734 {approx = true} : vector<8x1xf32> -> vector<8x1xf32>
    %740 = vector.broadcast %739 : vector<8x1xf32> to vector<8x8xf32>
    %741 = arith.mulf %738, %740 : vector<8x8xf32>
    %c0_66 = arith.constant 0 : index
    %c24_67 = arith.constant 24 : index
    %742 = vector.load %arg14[%c0_66, %c24_67] : memref<8x32xf32, #tpu.memory_space<vmem>>, vector<8x8xf32>
    tpu.vector_store %arg14[%c0_66, %c24_67], %741 {strides = array<i32>} : memref<8x32xf32, #tpu.memory_space<vmem>>, vector<8x8xf32>,
    %c0_68 = arith.constant 0 : index
    %c0_69 = arith.constant 0 : index
    %743 = vector.load %arg14[%c0_68, %c0_69] : memref<8x32xf32, #tpu.memory_space<vmem>>, vector<8x32xf32>
    %744 = vector.extract_strided_slice %8 {offsets = [2, 0], sizes = [1, 32], strides = [1, 1]} : vector<8x32xf32> to vector<1x32xf32>
    %745 = vector.broadcast %744 : vector<1x32xf32> to vector<8x32xf32>
    %746 = arith.addf %743, %745 : vector<8x32xf32>
    %747 = arith.addf %746, %23 : vector<8x32xf32>
    %cst_70 = arith.constant dense<0.000000e+00> : vector<8xf32>
    %748 = vector.multi_reduction <add>, %747, %cst_70 [1] : vector<8x32xf32> to vector<8xf32>
    %749 = vector.shape_cast %748 : vector<8xf32> to vector<8x1xf32>
    %cst_71 = arith.constant 3.200000e+01 : f32
    %750 = vector.broadcast %cst_71 : f32 to vector<8x1xf32>
    %751 = arith.divf %749, %750 : vector<8x1xf32>
    %752 = vector.broadcast %751 : vector<8x1xf32> to vector<8x32xf32>
    %753 = arith.subf %747, %752 : vector<8x32xf32>
    %754 = arith.mulf %753, %753 : vector<8x32xf32>
    %cst_72 = arith.constant dense<0.000000e+00> : vector<8xf32>
    %755 = vector.multi_reduction <add>, %754, %cst_72 [1] : vector<8x32xf32> to vector<8xf32>
    %756 = vector.shape_cast %755 : vector<8xf32> to vector<8x1xf32>
    %cst_73 = arith.constant 3.200000e+01 : f32
    %757 = vector.broadcast %cst_73 : f32 to vector<8x1xf32>
    %758 = arith.divf %756, %757 : vector<8x1xf32>
    %759 = vector.broadcast %751 : vector<8x1xf32> to vector<8x32xf32>
    %760 = arith.subf %747, %759 : vector<8x32xf32>
    %cst_74 = arith.constant 9.99999974E-6 : f32
    %761 = vector.broadcast %cst_74 : f32 to vector<8x1xf32>
    %762 = arith.addf %758, %761 : vector<8x1xf32>
    %763 = math.rsqrt %762 : vector<8x1xf32>
    %764 = vector.broadcast %763 : vector<8x1xf32> to vector<8x32xf32>
    %765 = arith.mulf %760, %764 : vector<8x32xf32>
    %766 = vector.extract_strided_slice %8 {offsets = [4, 0], sizes = [1, 32], strides = [1, 1]} : vector<8x32xf32> to vector<1x32xf32>
    %767 = vector.broadcast %766 : vector<1x32xf32> to vector<8x32xf32>
    %768 = arith.mulf %765, %767 : vector<8x32xf32>
    %769 = vector.extract_strided_slice %8 {offsets = [5, 0], sizes = [1, 32], strides = [1, 1]} : vector<8x32xf32> to vector<1x32xf32>
    %770 = vector.broadcast %769 : vector<1x32xf32> to vector<8x32xf32>
    %771 = arith.addf %768, %770 : vector<8x32xf32>
    %cst_75 = arith.constant 0.000000e+00 : f32
    %772 = vector.broadcast %cst_75 : f32 to vector<8x32xf32>
    %773 = arith.maximumf %771, %772 : vector<8x32xf32>
    %c0_76 = arith.constant 0 : index
    %c0_77 = arith.constant 0 : index
    %774 = vector.load %arg13[%c0_76, %c0_77] : memref<8x32xf32, #tpu.memory_space<vmem>>, vector<8x32xf32>
    tpu.vector_store %arg13[%c0_76, %c0_77], %773 {strides = array<i32>} : memref<8x32xf32, #tpu.memory_space<vmem>>, vector<8x32xf32>,
    %c2_i32 = arith.constant 2 : i32
    %775 = arith.cmpi eq, %arg0, %c2_i32 : i32
    %776 = arith.extui %775 : i1 to i32
    %c0_i32_78 = arith.constant 0 : i32
    %777 = arith.cmpi ne, %776, %c0_i32_78 : i32
    scf.if %777 {
      %778 = arith.truncf %773 : vector<8x32xf32> to vector<8x32xbf16>
      %c0_79 = arith.constant 0 : index
      %c0_80 = arith.constant 0 : index
      %779 = vector.load %arg8[%c0_79, %c0_80] : memref<32x32xbf16, #tpu.memory_space<vmem>>, vector<32x32xbf16>
      %cst_81 = arith.constant dense<0.000000e+00> : vector<8x32xf32>
      %780 = tpu.matmul %778, %779, %cst_81 {dimension_numbers = #tpu.dot_dimension_numbers<[1], [0], [0], [1], [0, 0, 1, 1], [], []>} : vector<8x32xbf16>, vector<32x32xbf16>, vector<8x32xf32> -> vector<8x32xf32>
      %c0_82 = arith.constant 0 : index
      %c0_83 = arith.constant 0 : index
      %781 = vector.load %arg9[%c0_82, %c0_83] : memref<1x32xf32, #tpu.memory_space<vmem>>, vector<1x32xf32>
      %782 = vector.broadcast %781 : vector<1x32xf32> to vector<8x32xf32>
      %783 = arith.addf %780, %782 : vector<8x32xf32>
      %cst_84 = arith.constant 0.000000e+00 : f32
      %784 = vector.broadcast %cst_84 : f32 to vector<8x32xf32>
      %785 = arith.maximumf %783, %784 : vector<8x32xf32>
      %786 = arith.truncf %785 : vector<8x32xf32> to vector<8x32xbf16>
      %c0_85 = arith.constant 0 : index
      %c0_86 = arith.constant 0 : index
      %787 = vector.load %arg10[%c0_85, %c0_86] : memref<32x128xbf16, #tpu.memory_space<vmem>>, vector<32x128xbf16>
      %cst_87 = arith.constant dense<0.000000e+00> : vector<8x128xf32>
      %788 = tpu.matmul %786, %787, %cst_87 {dimension_numbers = #tpu.dot_dimension_numbers<[1], [0], [0], [1], [0, 0, 1, 1], [], []>} : vector<8x32xbf16>, vector<32x128xbf16>, vector<8x128xf32> -> vector<8x128xf32>
      %c0_88 = arith.constant 0 : index
      %c0_89 = arith.constant 0 : index
      %789 = vector.load %arg11[%c0_88, %c0_89] : memref<1x128xf32, #tpu.memory_space<vmem>>, vector<1x128xf32>
      %790 = vector.broadcast %789 : vector<1x128xf32> to vector<8x128xf32>
      %791 = arith.addf %788, %790 : vector<8x128xf32>
      %c0_90 = arith.constant 0 : index
      %c0_91 = arith.constant 0 : index
      %792 = vector.load %arg12[%c0_90, %c0_91] : memref<8x128xf32, #tpu.memory_space<vmem>>, vector<8x128xf32>
      tpu.vector_store %arg12[%c0_90, %c0_91], %791 {strides = array<i32>} : memref<8x128xf32, #tpu.memory_space<vmem>>, vector<8x128xf32>,
    } else {
    }
    return
  }
  func.func @transform_0(%arg0: i32) -> (i32, i32) {
    %c0_i32 = arith.constant 0 : i32
    %c0_i32_0 = arith.constant 0 : i32
    %c0_i32_1 = arith.constant 0 : i32
    return %c0_i32, %c0_i32_0 : i32, i32
  }
  func.func @transform_1(%arg0: i32) -> (i32, i32) {
    %c0_i32 = arith.constant 0 : i32
    %c0_i32_0 = arith.constant 0 : i32
    %c0_i32_1 = arith.constant 0 : i32
    return %c0_i32, %c0_i32_0 : i32, i32
  }
  func.func @transform_2(%arg0: i32) -> (i32, i32) {
    %c0_i32 = arith.constant 0 : i32
    %c0_i32_0 = arith.constant 0 : i32
    %c0_i32_1 = arith.constant 0 : i32
    return %c0_i32, %c0_i32_0 : i32, i32
  }
  func.func @transform_3(%arg0: i32) -> (i32, i32) {
    %c0_i32 = arith.constant 0 : i32
    %c0_i32_0 = arith.constant 0 : i32
    %c0_i32_1 = arith.constant 0 : i32
    return %c0_i32, %c0_i32_0 : i32, i32
  }
  func.func @transform_4(%arg0: i32) -> (i32, i32, i32) {
    %c0_i32 = arith.constant 0 : i32
    %c0_i32_0 = arith.constant 0 : i32
    %c0_i32_1 = arith.constant 0 : i32
    return %arg0, %c0_i32, %c0_i32_0 : i32, i32, i32
  }
  func.func @transform_5(%arg0: i32) -> (i32, i32, i32) {
    %c0_i32 = arith.constant 0 : i32
    %c0_i32_0 = arith.constant 0 : i32
    %c0_i32_1 = arith.constant 0 : i32
    return %arg0, %c0_i32, %c0_i32_0 : i32, i32, i32
  }
  func.func @transform_6(%arg0: i32) -> (i32, i32) {
    %c0_i32 = arith.constant 0 : i32
    %c0_i32_0 = arith.constant 0 : i32
    %c0_i32_1 = arith.constant 0 : i32
    return %c0_i32, %c0_i32_0 : i32, i32
  }
  func.func @transform_7(%arg0: i32) -> (i32, i32) {
    %c0_i32 = arith.constant 0 : i32
    %c0_i32_0 = arith.constant 0 : i32
    %c0_i32_1 = arith.constant 0 : i32
    return %c0_i32, %c0_i32_0 : i32, i32
  }
  func.func @transform_8(%arg0: i32) -> (i32, i32) {
    %c0_i32 = arith.constant 0 : i32
    %c0_i32_0 = arith.constant 0 : i32
    %c0_i32_1 = arith.constant 0 : i32
    return %c0_i32, %c0_i32_0 : i32, i32
  }
  func.func @transform_9(%arg0: i32) -> (i32, i32) {
    %c0_i32 = arith.constant 0 : i32
    %c0_i32_0 = arith.constant 0 : i32
    %c0_i32_1 = arith.constant 0 : i32
    return %c0_i32, %c0_i32_0 : i32, i32
  }
  func.func @transform_10(%arg0: i32) -> (i32, i32) {
    %c0_i32 = arith.constant 0 : i32
    %c0_i32_0 = arith.constant 0 : i32
    %c0_i32_1 = arith.constant 0 : i32
    return %c0_i32, %c0_i32_0 : i32, i32
  }
  func.func @transform_11(%arg0: i32) -> (i32, i32) {
    %c0_i32 = arith.constant 0 : i32
    %c0_i32_0 = arith.constant 0 : i32
    %c0_i32_1 = arith.constant 0 : i32
    return %c0_i32, %c0_i32_0 : i32, i32
  }
}

</mosaic_0001>

<llo_original>
// kernel: tpu_custom_call.1
$region0: #{tpu_custom_call.1}
  #allocation0 [shape = 'u32[]', space=smem, size = 0x4, offset = 0x4, fixed_abs, tag = 'smem constant byte address 0x4 - core index']
  #allocation1 [shape = 'u32[144,128]{1,0:T(1,128)}', space=vmem, size = 0x12000, scoped, tag = 'internal scratch']
  #allocation2 [shape = 'f32[8,32]{1,0:T(8,128)}', space=vmem, size = 0x1000, scoped, tag = 'scratch operand']
  #allocation3 [shape = 'f32[8,32]{1,0:T(8,128)}', space=vmem, size = 0x1000, scoped, tag = 'scratch operand']
  %s0 = inlined_call_operand.vmem [shape: bf16[8,4], index: 0, kind: input, shape index: {}]
  %s1 = inlined_call_operand.hbm [shape: bf16[8,8], index: 1, kind: input, shape index: {}]
  %s2 = inlined_call_operand.vmem [shape: bf16[4,32], index: 2, kind: input, shape index: {}]
  %s3 = inlined_call_operand.hbm [shape: f32[1,32], index: 3, kind: input, shape index: {}]
  %s4 = inlined_call_operand.hbm [shape: bf16[3,32,96], index: 4, kind: input, shape index: {}]
  %s5 = inlined_call_operand.hbm [shape: f32[3,8,32], index: 5, kind: input, shape index: {}]
  %s6 = inlined_call_operand.hbm [shape: f32[3,32], index: 6, kind: input, shape index: {}]
  %s7 = inlined_call_operand.vmem [shape: bf16[32,32], index: 7, kind: input, shape index: {}]
  %s8 = inlined_call_operand.vmem [shape: f32[1,32], index: 8, kind: input, shape index: {}]
  %s9 = inlined_call_operand.hbm [shape: bf16[32,128], index: 9, kind: input, shape index: {}]
  %s10 = inlined_call_operand.vmem [shape: f32[1,128], index: 10, kind: input, shape index: {}]
  %s11 = inlined_call_operand.hbm [shape: f32[8,128], index: 11, kind: output, shape index: {}]
  %s12 = sld [smem:[#allocation0]]
  $region109: #{tpu_custom_call.1} parent=0
    _
  %s14 = ssub.s32 1, %s12
  %s15 = scalar_select 0, %s14, %s12
  $region1: #{tpu_custom_call.1} parent=0
    #allocation4 [shape = 'u8[2048]{0}', space=vmem, size = 0x800, scoped, tag = 'input window, operand 1, single buffered']
    #allocation5 [shape = 's32[2]{0}', space=sflag, size = 0x8, scoped, tag = 'scoped memory for tpu_custom_call.1']
    #allocation6 [shape = 's32[2]{0}', space=sflag, size = 0x8, scoped, tag = 'scoped memory for tpu_custom_call.1']
    #allocation7 [shape = 's32[2]{0}', space=sflag, size = 0x8, scoped, tag = 'scoped memory for tpu_custom_call.1']
    #allocation8 [shape = 'u8[512]{0}', space=vmem, size = 0x400, scoped, tag = 'input window, operand 3, single buffered']
    #allocation9 [shape = 's32[1]{0}', space=sflag, size = 0x4, scoped, tag = 'scoped memory for tpu_custom_call.1']
    #allocation10 [shape = 'u8[16384]{0}', space=vmem, size = 0x4000, scoped, tag = 'input window, operand 4']
    #allocation11 [shape = 'u8[8192]{0}', space=vmem, size = 0x2000, scoped, tag = 'input window, operand 5']
    #allocation12 [shape = 'u8[2048]{0}', space=smem, size = 0x800, scoped, tag = 'input window, operand 6, single buffered']
    #allocation13 [shape = 'u8[8192]{0}', space=vmem, size = 0x2000, scoped, tag = 'input window, operand 9, single buffered']
    #allocation14 [shape = 'u8[4096]{0}', space=vmem, size = 0x1000, scoped, tag = 'output window, operand 0, single buffered']
    %16 = vsyncpa [#allocation5], 0
    %17 = vsyncpa [#allocation9], 0
    %18 = vsyncpa [#allocation7], 0
    %19 = vsyncpa [#allocation6], 0
    loop: start=0, step=1, limit=5
    $region2: #{tpu_custom_call.1} parent=1 // loop_pre_header
      _
    $region3: #{tpu_custom_call.1} parent=1 // loop_header
      %s21 = sphi 0, %s25
      %p22 = scmp.ge.s32.totalorder %s21, 5
      %s29 = sphi 0, %s29
      %s31 = sphi 0, %s29
      %s32 = sphi 0, %s31
      %s46 = sphi 0, %s32
      %s50 = sphi 0, %s50
      %s52 = sphi 0, %s50
      %s53 = sphi 0, %s52
      %s67 = sphi 0, %s53
      %s71 = sphi 0, %s71
      %s73 = sphi 0, %s71
      %s74 = sphi 0, %s73
      %s88 = sphi 0, %s74
      %s92 = sphi 0, %s92
      %s94 = sphi 0, %s92
      %s95 = sphi 0, %s94
      %s109 = sphi 0, %s95
      %s115 = sphi 0, %s117
      %s118 = sphi 0, %s115
      %s119 = sphi 0, %s118
      %s135 = sphi 0, %s119
      %s141 = sphi 0, %s143
      %s144 = sphi 0, %s141
      %s145 = sphi 0, %s144
      %s161 = sphi 0, %s145
      %s165 = sphi 0, %s165
      %s167 = sphi 0, %s165
      %s168 = sphi 0, %s167
      %s182 = sphi 0, %s168
      %s186 = sphi 0, %s186
      %s188 = sphi 0, %s186
      %s189 = sphi 0, %s188
      %s203 = sphi 0, %s189
      %s207 = sphi 0, %s207
      %s209 = sphi 0, %s207
      %s210 = sphi 0, %s209
      %s224 = sphi 0, %s210
      %s228 = sphi 0, %s228
      %s230 = sphi 0, %s228
      %s231 = sphi 0, %s230
      %s245 = sphi 0, %s231
      %s249 = sphi 0, %s249
      %s251 = sphi 0, %s249
      %s252 = sphi 0, %s251
      %s266 = sphi 0, %s252
      %s270 = sphi 0, %s270
      %s272 = sphi 0, %s270
      %s273 = sphi 0, %s272
      %s287 = sphi 0, %s273
    $region4: #{tpu_custom_call.1} parent=1 // loop_header_branch
      %24 = sbr.rel (%p22) target = $region8
    $region5: #{tpu_custom_call.1} parent=1 // loop_body
      %s26 = ssub.s32 %s21, 1
      %s27 = ssub.s32 %s21, 2
      %s28 = sadd.s32 %s21, 1
      %s30 = sadd.s32 %s29, 1
      %p33 = scmp.eq.s32.totalorder %s21, 2
      %p34 = scmp.ne.s32.totalorder %s29, %s31
      %p35 = scmp.eq.s32.totalorder %s21, 0
      %p36 = por %p34, %p35
      %p37 = scmp.ne.s32.totalorder %s29, %s31
      %p38 = scmp.eq.s32.totalorder %s26, 2
      %p39 = por %p37, %p38
      %p40 = scmp.ne.s32.totalorder %s31, %s32
      %p41 = scmp.eq.s32.totalorder %s26, 0
      %p42 = por %p40, %p41
      %p43 = scmp.ne.s32.totalorder %s31, %s32
      %p44 = scmp.eq.s32.totalorder %s27, 2
      %p45 = por %p43, %p44
      %p47 = scmp.ne.s32.totalorder %s32, %s46
      %p48 = scmp.eq.s32.totalorder %s27, 0
      %p49 = por %p47, %p48
      %s51 = sadd.s32 %s50, 1
      %p54 = scmp.eq.s32.totalorder %s21, 2
      %p55 = scmp.ne.s32.totalorder %s50, %s52
      %p56 = scmp.eq.s32.totalorder %s21, 0
      %p57 = por %p55, %p56
      %p58 = scmp.ne.s32.totalorder %s50, %s52
      %p59 = scmp.eq.s32.totalorder %s26, 2
      %p60 = por %p58, %p59
      %p61 = scmp.ne.s32.totalorder %s52, %s53
      %p62 = scmp.eq.s32.totalorder %s26, 0
      %p63 = por %p61, %p62
      %p64 = scmp.ne.s32.totalorder %s52, %s53
      %p65 = scmp.eq.s32.totalorder %s27, 2
      %p66 = por %p64, %p65
      %p68 = scmp.ne.s32.totalorder %s53, %s67
      %p69 = scmp.eq.s32.totalorder %s27, 0
      %p70 = por %p68, %p69
      %s72 = sadd.s32 %s71, 1
      %p75 = scmp.eq.s32.totalorder %s21, 2
      %p76 = scmp.ne.s32.totalorder %s71, %s73
      %p77 = scmp.eq.s32.totalorder %s21, 0
      %p78 = por %p76, %p77
      %p79 = scmp.ne.s32.totalorder %s71, %s73
      %p80 = scmp.eq.s32.totalorder %s26, 2
      %p81 = por %p79, %p80
      %p82 = scmp.ne.s32.totalorder %s73, %s74
      %p83 = scmp.eq.s32.totalorder %s26, 0
      %p84 = por %p82, %p83
      %p85 = scmp.ne.s32.totalorder %s73, %s74
      %p86 = scmp.eq.s32.totalorder %s27, 2
      %p87 = por %p85, %p86
      %p89 = scmp.ne.s32.totalorder %s74, %s88
      %p90 = scmp.eq.s32.totalorder %s27, 0
      %p91 = por %p89, %p90
      %s93 = sadd.s32 %s92, 1
      %p96 = scmp.eq.s32.totalorder %s21, 2
      %p97 = scmp.ne.s32.totalorder %s92, %s94
      %p98 = scmp.eq.s32.totalorder %s21, 0
      %p99 = por %p97, %p98
      %p100 = scmp.ne.s32.totalorder %s92, %s94
      %p101 = scmp.eq.s32.totalorder %s26, 2
      %p102 = por %p100, %p101
      %p103 = scmp.ne.s32.totalorder %s94, %s95
      %p104 = scmp.eq.s32.totalorder %s26, 0
      %p105 = por %p103, %p104
      %p106 = scmp.ne.s32.totalorder %s94, %s95
      %p107 = scmp.eq.s32.totalorder %s27, 2
      %p108 = por %p106, %p107
      %p110 = scmp.ne.s32.totalorder %s95, %s109
      %p111 = scmp.eq.s32.totalorder %s27, 0
      %p112 = por %p110, %p111
      %s113 = ssub.s32 %s21, %s28
      %p114 = scmp.eq.s32.totalorder %s113, 0
      %s116 = sadd.s32 %s115, 1
      %s117 = scalar_select %p114, %s115, %s116
      %p120 = pneg %p114
      %p121 = scmp.eq.s32.totalorder %s21, 2
      %p122 = por %p120, %p121
      %p123 = scmp.ne.s32.totalorder %s115, %s118
      %p124 = scmp.eq.s32.totalorder %s21, 0
      %p125 = por %p123, %p124
      %p126 = scmp.ne.s32.totalorder %s115, %s118
      %p127 = scmp.eq.s32.totalorder %s26, 2
      %p128 = por %p126, %p127
      %p129 = scmp.ne.s32.totalorder %s118, %s119
      %p130 = scmp.eq.s32.totalorder %s26, 0
      %p131 = por %p129, %p130
      %p132 = scmp.ne.s32.totalorder %s118, %s119
      %p133 = scmp.eq.s32.totalorder %s27, 2
      %p134 = por %p132, %p133
      %p136 = scmp.ne.s32.totalorder %s119, %s135
      %p137 = scmp.eq.s32.totalorder %s27, 0
      %p138 = por %p136, %p137
      %s139 = ssub.s32 %s21, %s28
      %p140 = scmp.eq.s32.totalorder %s139, 0
      %s142 = sadd.s32 %s141, 1
      %s143 = scalar_select %p140, %s141, %s142
      %p146 = pneg %p140
      %p147 = scmp.eq.s32.totalorder %s21, 2
      %p148 = por %p146, %p147
      %p149 = scmp.ne.s32.totalorder %s141, %s144
      %p150 = scmp.eq.s32.totalorder %s21, 0
      %p151 = por %p149, %p150
      %p152 = scmp.ne.s32.totalorder %s141, %s144
      %p153 = scmp.eq.s32.totalorder %s26, 2
      %p154 = por %p152, %p153
      %p155 = scmp.ne.s32.totalorder %s144, %s145
      %p156 = scmp.eq.s32.totalorder %s26, 0
      %p157 = por %p155, %p156
      %p158 = scmp.ne.s32.totalorder %s144, %s145
      %p159 = scmp.eq.s32.totalorder %s27, 2
      %p160 = por %p158, %p159
      %p162 = scmp.ne.s32.totalorder %s145, %s161
      %p163 = scmp.eq.s32.totalorder %s27, 0
      %p164 = por %p162, %p163
      %s166 = sadd.s32 %s165, 1
      %p169 = scmp.eq.s32.totalorder %s21, 2
      %p170 = scmp.ne.s32.totalorder %s165, %s167
      %p171 = scmp.eq.s32.totalorder %s21, 0
      %p172 = por %p170, %p171
      %p173 = scmp.ne.s32.totalorder %s165, %s167
      %p174 = scmp.eq.s32.totalorder %s26, 2
      %p175 = por %p173, %p174
      %p176 = scmp.ne.s32.totalorder %s167, %s168
      %p177 = scmp.eq.s32.totalorder %s26, 0
      %p178 = por %p176, %p177
      %p179 = scmp.ne.s32.totalorder %s167, %s168
      %p180 = scmp.eq.s32.totalorder %s27, 2
      %p181 = por %p179, %p180
      %p183 = scmp.ne.s32.totalorder %s168, %s182
      %p184 = scmp.eq.s32.totalorder %s27, 0
      %p185 = por %p183, %p184
      %s187 = sadd.s32 %s186, 1
      %p190 = scmp.eq.s32.totalorder %s21, 2
      %p191 = scmp.ne.s32.totalorder %s186, %s188
      %p192 = scmp.eq.s32.totalorder %s21, 0
      %p193 = por %p191, %p192
      %p194 = scmp.ne.s32.totalorder %s186, %s188
      %p195 = scmp.eq.s32.totalorder %s26, 2
      %p196 = por %p194, %p195
      %p197 = scmp.ne.s32.totalorder %s188, %s189
      %p198 = scmp.eq.s32.totalorder %s26, 0
      %p199 = por %p197, %p198
      %p200 = scmp.ne.s32.totalorder %s188, %s189
      %p201 = scmp.eq.s32.totalorder %s27, 2
      %p202 = por %p200, %p201
      %p204 = scmp.ne.s32.totalorder %s189, %s203
      %p205 = scmp.eq.s32.totalorder %s27, 0
      %p206 = por %p204, %p205
      %s208 = sadd.s32 %s207, 1
      %p211 = scmp.eq.s32.totalorder %s21, 2
      %p212 = scmp.ne.s32.totalorder %s207, %s209
      %p213 = scmp.eq.s32.totalorder %s21, 0
      %p214 = por %p212, %p213
      %p215 = scmp.ne.s32.totalorder %s207, %s209
      %p216 = scmp.eq.s32.totalorder %s26, 2
      %p217 = por %p215, %p216
      %p218 = scmp.ne.s32.totalorder %s209, %s210
      %p219 = scmp.eq.s32.totalorder %s26, 0
      %p220 = por %p218, %p219
      %p221 = scmp.ne.s32.totalorder %s209, %s210
      %p222 = scmp.eq.s32.totalorder %s27, 2
      %p223 = por %p221, %p222
      %p225 = scmp.ne.s32.totalorder %s210, %s224
      %p226 = scmp.eq.s32.totalorder %s27, 0
      %p227 = por %p225, %p226
      %s229 = sadd.s32 %s228, 1
      %p232 = scmp.eq.s32.totalorder %s21, 2
      %p233 = scmp.ne.s32.totalorder %s228, %s230
      %p234 = scmp.eq.s32.totalorder %s21, 0
      %p235 = por %p233, %p234
      %p236 = scmp.ne.s32.totalorder %s228, %s230
      %p237 = scmp.eq.s32.totalorder %s26, 2
      %p238 = por %p236, %p237
      %p239 = scmp.ne.s32.totalorder %s230, %s231
      %p240 = scmp.eq.s32.totalorder %s26, 0
      %p241 = por %p239, %p240
      %p242 = scmp.ne.s32.totalorder %s230, %s231
      %p243 = scmp.eq.s32.totalorder %s27, 2
      %p244 = por %p242, %p243
      %p246 = scmp.ne.s32.totalorder %s231, %s245
      %p247 = scmp.eq.s32.totalorder %s27, 0
      %p248 = por %p246, %p247
      %s250 = sadd.s32 %s249, 1
      %p253 = scmp.eq.s32.totalorder %s21, 2
      %p254 = scmp.ne.s32.totalorder %s249, %s251
      %p255 = scmp.eq.s32.totalorder %s21, 0
      %p256 = por %p254, %p255
      %p257 = scmp.ne.s32.totalorder %s249, %s251
      %p258 = scmp.eq.s32.totalorder %s26, 2
      %p259 = por %p257, %p258
      %p260 = scmp.ne.s32.totalorder %s251, %s252
      %p261 = scmp.eq.s32.totalorder %s26, 0
      %p262 = por %p260, %p261
      %p263 = scmp.ne.s32.totalorder %s251, %s252
      %p264 = scmp.eq.s32.totalorder %s27, 2
      %p265 = por %p263, %p264
      %p267 = scmp.ne.s32.totalorder %s252, %s266
      %p268 = scmp.eq.s32.totalorder %s27, 0
      %p269 = por %p267, %p268
      %s271 = sadd.s32 %s270, 1
      %p274 = scmp.eq.s32.totalorder %s21, 2
      %p275 = scmp.ne.s32.totalorder %s270, %s272
      %p276 = scmp.eq.s32.totalorder %s21, 0
      %p277 = por %p275, %p276
      %p278 = scmp.ne.s32.totalorder %s270, %s272
      %p279 = scmp.eq.s32.totalorder %s26, 2
      %p280 = por %p278, %p279
      %p281 = scmp.ne.s32.totalorder %s272, %s273
      %p282 = scmp.eq.s32.totalorder %s26, 0
      %p283 = por %p281, %p282
      %p284 = scmp.ne.s32.totalorder %s272, %s273
      %p285 = scmp.eq.s32.totalorder %s27, 2
      %p286 = por %p284, %p285
      %p288 = scmp.ne.s32.totalorder %s273, %s287
      %p289 = scmp.eq.s32.totalorder %s27, 0
      %p290 = por %p288, %p289
      %p291 = scmp.le.s32.totalorder 1, %s21
      %p292 = scmp.lt.s32.totalorder %s21, 4
      %p293 = pnand %p291, %p292
      %p294 = pneg %p293
      // Predicated region
      $region9: #{tpu_custom_call.1} parent=5 // pred_check
        _
      $region10: #{tpu_custom_call.1} parent=5 // pred_check_branch
        %296 = sbr.rel (%p293) target = $region12
      $region11: #{tpu_custom_call.1} parent=5 // pred_region
        %s297 = ssub.s32 %s21, 1
        // Predicated region
        $region13: #{tpu_custom_call.1} parent=11 // pred_check
          %p298 = pneg %p42
        $region14: #{tpu_custom_call.1} parent=11 // pred_check_branch
          %300 = sbr.rel (%p298) target = $region16
        $region15: #{tpu_custom_call.1} parent=11 // pred_region
          _
        $region16: #{tpu_custom_call.1} parent=11 // pred_fallthru
          _
        // Predicated region
        $region17: #{tpu_custom_call.1} parent=11 // pred_check
          %p301 = pneg %p63
        $region18: #{tpu_custom_call.1} parent=11 // pred_check_branch
          %303 = sbr.rel (%p301) target = $region20
        $region19: #{tpu_custom_call.1} parent=11 // pred_region
          %s305 = ssub.s32 64, 64
          %306 = vsyncadd [#allocation5], %s305
          %s308 = sshll.u32 [#allocation4], 4
          %s309 = int_to_ptr.vmem [resolvable:$true] %s308
          %311 = dma.hbm_to_vmem [thread:$0]  %s1, 64, %s309, [#allocation5]
        $region20: #{tpu_custom_call.1} parent=11 // pred_fallthru
          _
        // Predicated region
        $region21: #{tpu_custom_call.1} parent=11 // pred_check
          %p312 = pneg %p84
        $region22: #{tpu_custom_call.1} parent=11 // pred_check_branch
          %314 = sbr.rel (%p312) target = $region24
        $region23: #{tpu_custom_call.1} parent=11 // pred_region
          _
        $region24: #{tpu_custom_call.1} parent=11 // pred_fallthru
          _
        // Predicated region
        $region25: #{tpu_custom_call.1} parent=11 // pred_check
          %p315 = pneg %p105
        $region26: #{tpu_custom_call.1} parent=11 // pred_check_branch
          %317 = sbr.rel (%p315) target = $region28
        $region27: #{tpu_custom_call.1} parent=11 // pred_region
          %s319 = ssub.s32 16, 16
          %320 = vsyncadd [#allocation9], %s319
          %s322 = sshll.u32 [#allocation8], 4
          %s323 = int_to_ptr.vmem [resolvable:$true] %s322
          %325 = dma.hbm_to_vmem [thread:$0]  %s3, 16, %s323, [#allocation9]
        $region28: #{tpu_custom_call.1} parent=11 // pred_fallthru
          _
        // Predicated region
        $region29: #{tpu_custom_call.1} parent=11 // pred_check
          %p326 = pneg %p178
        $region30: #{tpu_custom_call.1} parent=11 // pred_check_branch
          %328 = sbr.rel (%p326) target = $region32
        $region31: #{tpu_custom_call.1} parent=11 // pred_region
          %s330 = ssub.s32 64, 64
          %331 = vsyncadd [#allocation7], %s330
          %334 = dma.hbm_to_smem %s6, 64, [#allocation12], [#allocation7]
        $region32: #{tpu_custom_call.1} parent=11 // pred_fallthru
          _
        // Predicated region
        $region33: #{tpu_custom_call.1} parent=11 // pred_check
          %p335 = pneg %p199
        $region34: #{tpu_custom_call.1} parent=11 // pred_check_branch
          %337 = sbr.rel (%p335) target = $region36
        $region35: #{tpu_custom_call.1} parent=11 // pred_region
          _
        $region36: #{tpu_custom_call.1} parent=11 // pred_fallthru
          _
        // Predicated region
        $region37: #{tpu_custom_call.1} parent=11 // pred_check
          %p338 = pneg %p220
        $region38: #{tpu_custom_call.1} parent=11 // pred_check_branch
          %340 = sbr.rel (%p338) target = $region40
        $region39: #{tpu_custom_call.1} parent=11 // pred_region
          _
        $region40: #{tpu_custom_call.1} parent=11 // pred_fallthru
          _
        // Predicated region
        $region41: #{tpu_custom_call.1} parent=11 // pred_check
          %p341 = pneg %p241
        $region42: #{tpu_custom_call.1} parent=11 // pred_check_branch
          %343 = sbr.rel (%p341) target = $region44
        $region43: #{tpu_custom_call.1} parent=11 // pred_region
          %s345 = ssub.s32 256, 256
          %346 = vsyncadd [#allocation9], %s345
          %s347 = sshll.u32 [#allocation13], 4
          %s348 = int_to_ptr.vmem [resolvable:$true] %s347
          %353 = dma.hbm_to_vmem [thread:$0]  %s9, 256, %s348, [#allocation9], 64, 64, 4
        $region44: #{tpu_custom_call.1} parent=11 // pred_fallthru
          _
        // Predicated region
        $region45: #{tpu_custom_call.1} parent=11 // pred_check
          %p354 = pneg %p262
        $region46: #{tpu_custom_call.1} parent=11 // pred_check_branch
          %356 = sbr.rel (%p354) target = $region48
        $region47: #{tpu_custom_call.1} parent=11 // pred_region
          _
        $region48: #{tpu_custom_call.1} parent=11 // pred_fallthru
          _
      $region12: #{tpu_custom_call.1} parent=5 // pred_fallthru
        _
      %p357 = scmp.lt.s32.totalorder %s21, 3
      // Predicated region
      $region49: #{tpu_custom_call.1} parent=5 // pred_check
        %p358 = pneg %p357
      $region50: #{tpu_custom_call.1} parent=5 // pred_check_branch
        %360 = sbr.rel (%p358) target = $region52
      $region51: #{tpu_custom_call.1} parent=5 // pred_region
        // Predicated region
        $region53: #{tpu_custom_call.1} parent=51 // pred_check
          %p361 = pneg %p125
        $region54: #{tpu_custom_call.1} parent=51 // pred_check_branch
          %363 = sbr.rel (%p361) target = $region56
        $region55: #{tpu_custom_call.1} parent=51 // pred_region
          %s364 = sand.u32 %s21, 1
          %s365 = scalar_lea.sflag [#allocation5], %s364
          %s366 = sand.u32 %s115, 1
          %s367 = smul.addr %s366, 16
          %s368 = scalar_lea.vmem [#allocation10], %s367
          %s370 = ssub.s32 256, 256
          %371 = vsyncadd %s365, %s370
          %s372 = smul.addr %s21, 4
          %s373 = smul.addr %s372, 64
          %s374 = scalar_lea.hbm %s4, %s373
          %s375 = sshll.u32 %s368, 4
          %s376 = int_to_ptr.vmem [resolvable:$true] %s375
          %381 = dma.hbm_to_vmem [thread:$0]  %s374, 256, %s376, %s365, 64, 64, 4
        $region56: #{tpu_custom_call.1} parent=51 // pred_fallthru
          _
        // Predicated region
        $region57: #{tpu_custom_call.1} parent=51 // pred_check
          %p382 = pneg %p151
        $region58: #{tpu_custom_call.1} parent=51 // pred_check_branch
          %384 = sbr.rel (%p382) target = $region60
        $region59: #{tpu_custom_call.1} parent=51 // pred_region
          %s385 = sand.u32 %s21, 1
          %s386 = scalar_lea.sflag [#allocation5], %s385
          %s387 = sand.u32 %s141, 1
          %s388 = smul.addr %s387, 8
          %s389 = scalar_lea.vmem [#allocation11], %s388
          %s391 = ssub.s32 128, 128
          %392 = vsyncadd %s386, %s391
          %s393 = smul.addr %s21, 128
          %s394 = scalar_lea.hbm %s5, %s393
          %s396 = sshll.u32 %s389, 4
          %s397 = int_to_ptr.vmem [resolvable:$true] %s396
          %399 = dma.hbm_to_vmem [thread:$0]  %s394, 128, %s397, %s386
        $region60: #{tpu_custom_call.1} parent=51 // pred_fallthru
          _
      $region52: #{tpu_custom_call.1} parent=5 // pred_fallthru
        _
      %p400 = scmp.le.s32.totalorder 1, %s21
      %p401 = scmp.lt.s32.totalorder %s21, 4
      %p402 = pnand %p400, %p401
      %p403 = pneg %p402
      // Predicated region
      $region61: #{tpu_custom_call.1} parent=5 // pred_check
        _
      $region62: #{tpu_custom_call.1} parent=5 // pred_check_branch
        %405 = sbr.rel (%p402) target = $region64
      $region63: #{tpu_custom_call.1} parent=5 // pred_region
        %s406 = ssub.s32 %s21, 1
        // Predicated region
        $region65: #{tpu_custom_call.1} parent=63 // pred_check
          %p407 = pneg %p63
        $region66: #{tpu_custom_call.1} parent=63 // pred_check_branch
          %409 = sbr.rel (%p407) target = $region68
        $region67: #{tpu_custom_call.1} parent=63 // pred_region
          %410 = dma.done [#allocation5], 64
        $region68: #{tpu_custom_call.1} parent=63 // pred_fallthru
          _
        // Predicated region
        $region69: #{tpu_custom_call.1} parent=63 // pred_check
          %p411 = pneg %p105
        $region70: #{tpu_custom_call.1} parent=63 // pred_check_branch
          %413 = sbr.rel (%p411) target = $region72
        $region71: #{tpu_custom_call.1} parent=63 // pred_region
          %414 = dma.done [#allocation9], 16
        $region72: #{tpu_custom_call.1} parent=63 // pred_fallthru
          _
        %s415 = sand.u32 %s26, 1
        %s416 = scalar_lea.sflag [#allocation5], %s415
        %s417 = sand.u32 %s118, 1
        %s418 = smul.addr %s417, 16
        %s419 = scalar_lea.vmem [#allocation10], %s418
        // Predicated region
        $region73: #{tpu_custom_call.1} parent=63 // pred_check
          %p420 = pneg %p131
        $region74: #{tpu_custom_call.1} parent=63 // pred_check_branch
          %422 = sbr.rel (%p420) target = $region76
        $region75: #{tpu_custom_call.1} parent=63 // pred_region
          %423 = dma.done %s416, 256
        $region76: #{tpu_custom_call.1} parent=63 // pred_fallthru
          _
        %s424 = sand.u32 %s26, 1
        %s425 = scalar_lea.sflag [#allocation5], %s424
        %s426 = sand.u32 %s144, 1
        %s427 = smul.addr %s426, 8
        %s428 = scalar_lea.vmem [#allocation11], %s427
        // Predicated region
        $region77: #{tpu_custom_call.1} parent=63 // pred_check
          %p429 = pneg %p157
        $region78: #{tpu_custom_call.1} parent=63 // pred_check_branch
          %431 = sbr.rel (%p429) target = $region80
        $region79: #{tpu_custom_call.1} parent=63 // pred_region
          %432 = dma.done %s425, 128
        $region80: #{tpu_custom_call.1} parent=63 // pred_fallthru
          _
        // Predicated region
        $region81: #{tpu_custom_call.1} parent=63 // pred_check
          %p433 = pneg %p178
        $region82: #{tpu_custom_call.1} parent=63 // pred_check_branch
          %435 = sbr.rel (%p433) target = $region84
        $region83: #{tpu_custom_call.1} parent=63 // pred_region
          %436 = dma.done [#allocation7], 64
        $region84: #{tpu_custom_call.1} parent=63 // pred_fallthru
          _
        // Predicated region
        $region85: #{tpu_custom_call.1} parent=63 // pred_check
          %p437 = pneg %p241
        $region86: #{tpu_custom_call.1} parent=63 // pred_check_branch
          %439 = sbr.rel (%p437) target = $region88
        $region87: #{tpu_custom_call.1} parent=63 // pred_region
          %440 = dma.done [#allocation9], 256
        $region88: #{tpu_custom_call.1} parent=63 // pred_fallthru
          _
        %441 = sfence
        %p442 = pneg %p42
        %p443 = pneg %p39
        %p444 = pneg %p63
        %p445 = pneg %p60
        %p446 = pneg %p84
        %p447 = pneg %p81
        %p448 = pneg %p105
        %p449 = pneg %p102
        %s450 = sand.u32 %s26, 1
        %s451 = scalar_lea.sflag [#allocation5], %s450
        %s452 = sand.u32 %s118, 1
        %s453 = smul.addr %s452, 16
        %s454 = scalar_lea.vmem [#allocation10], %s453
        %p455 = pneg %p131
        %p456 = pneg %p128
        %s457 = sand.u32 %s26, 1
        %s458 = scalar_lea.sflag [#allocation5], %s457
        %s459 = sand.u32 %s144, 1
        %s460 = smul.addr %s459, 8
        %s461 = scalar_lea.vmem [#allocation11], %s460
        %p462 = pneg %p157
        %p463 = pneg %p154
        %p464 = pneg %p178
        %p465 = pneg %p175
        %p466 = pneg %p199
        %p467 = pneg %p196
        %p468 = pneg %p220
        %p469 = pneg %p217
        %p470 = pneg %p241
        %p471 = pneg %p238
        %p472 = pneg %p262
        %p473 = pneg %p259
        %p474 = pneg %p283
        %p475 = pneg %p280
        %p477 = scmp.eq.s32.totalorder %s26, 0
        // Predicated region
        $region89: #{tpu_custom_call.1} parent=63 // pred_check
          %p478 = pneg %p477
        $region90: #{tpu_custom_call.1} parent=63 // pred_check_branch
          %480 = sbr.rel (%p478) target = $region92
        $region91: #{tpu_custom_call.1} parent=63 // pred_region
          %v481 = vld [vmem:[%s0] sm:$0xf]
          %v482 = vld [vmem:[%s2] sm:$0x3]
          %v483 = vld [vmem:[#allocation8] sm:$0x1]
          %v485 = vlaneseq
          %v486 = vshrl.u32 %v485, 7
          %v487 = vsub.s32 0, %v486
          %v488 = vrot.slane %v483, %v487
          %vm490 = vcmask 31744
          %v492 = vsel %vm490, %v481, 0
          %vm494 = vcmask 1041408
          %v496 = vsel %vm494, %v482, 0
          %498 = vmatprep.subr.bf16.mxu0 0
          %499 = vmatpush1.bf16.msra.mxu0 0
          %500 = vmatprep.subr.bf16.mxu0 0
          %501 = vmatpush1.bf16.msra.mxu0 0
          %502 = vmatprep.subr.bf16.mxu0 0
          %503 = vmatpush1.bf16.msra.mxu0 0
          %504 = vmatprep.subr.bf16.mxu0 0
          %505 = vmatpush1.bf16.msra.mxu0 0
          %506 = vmatprep.subr.bf16.mxu0 0
          %507 = vmatpush1.bf16.msra.mxu0 0
          %508 = vmatprep.subr.bf16.mxu0 0
          %509 = vmatpush1.bf16.msra.mxu0 0
          %510 = vmatprep.subr.bf16.mxu0 0
          %511 = vmatpush1.bf16.msra.mxu0 0
          %512 = vmatprep.subr.bf16.mxu0 0
          %513 = vmatpush1.bf16.msra.mxu0 %v496
          %514 = vmatprep.subr.bf16.mxu0 0
          %515 = vmatpush2.bf16.msra.mxu0 0
          %516 = vmatprep.subr.bf16.mxu0 0
          %517 = vmatpush2.bf16.msra.mxu0 0
          %518 = vmatprep.subr.bf16.mxu0 0
          %519 = vmatpush2.bf16.msra.mxu0 0
          %520 = vmatprep.subr.bf16.mxu0 0
          %521 = vmatpush2.bf16.msra.mxu0 0
          %522 = vmatprep.subr.bf16.mxu0 0
          %523 = vmatpush2.bf16.msra.mxu0 0
          %524 = vmatprep.subr.bf16.mxu0 0
          %525 = vmatpush2.bf16.msra.mxu0 0
          %526 = vmatprep.subr.bf16.mxu0 0
          %527 = vmatpush2.bf16.msra.mxu0 0
          %528 = vmatprep.subr.bf16.mxu0 0
          %529 = vmatpush2.bf16.msra.mxu0 0
          %530 = vmatprep.mubr.bf16.mxu0 0
          %531 = vmatmul.mubr.bf16.gmra.mxu0 %v492
          %v532 = vpop.f32.mrf.mxu0
          %v533 = vadd.f32 %v488, %v532
          %v534 = vpop.f32.mrf.mxu0
          %v535 = vpop.f32.mrf.mxu0
          %v536 = vpop.f32.mrf.mxu0
          %537 = vdwg.mxu0
          %v538 = vmax.f32 %v533, 0.0
          %vm539 = vcmask 261120
          %540 = vst.msk [vmem:[#allocation2] sm:$0xff] %vm539, %v538
        $region92: #{tpu_custom_call.1} parent=63 // pred_fallthru
          _
        %v541 = vld [vmem:[#allocation2] sm:$0xff]
        %v542 = vpack.c.bf16 %v541, %v541
        %v543 = vld [vmem:[%s419] sm:$0xf]
        %v544 = vld [vmem:[%s419 + $0x4] sm:$0xf]
        %v545 = vld [vmem:[%s419 + $0x8] sm:$0xf]
        %v546 = vld [vmem:[%s419 + $0xc] sm:$0xf]
        %v547 = vld [vmem:[%s428] sm:$0xff]
        %v552 = vunpack.c.l.b16 %v543
        %v553 = vunpack.c.l.b16 %v544
        %v554 = vunpack.c.l.b16 %v545
        %v555 = vunpack.c.l.b16 %v546
        %v556 = vpack.c.b16 %v553, %v552
        %v557 = vpack.c.b16 %v555, %v554
        %vm560 = vcmask 261120
        %v562 = vsel %vm560, %v542, 0
        %564 = vmatprep.subr.bf16.mxu0 0
        %565 = vmatpush1.bf16.msra.mxu0 0
        %566 = vmatprep.subr.bf16.mxu0 0
        %567 = vmatpush1.bf16.msra.mxu0 0
        %568 = vmatprep.subr.bf16.mxu0 0
        %569 = vmatpush1.bf16.msra.mxu0 0
        %570 = vmatprep.subr.bf16.mxu0 0
        %571 = vmatpush1.bf16.msra.mxu0 0
        %572 = vmatprep.subr.bf16.mxu0 0
        %573 = vmatpush1.bf16.msra.mxu0 0
        %574 = vmatprep.subr.bf16.mxu0 0
        %575 = vmatpush1.bf16.msra.mxu0 0
        %576 = vmatprep.subr.bf16.mxu0 0
        %577 = vmatpush1.bf16.msra.mxu0 %v557
        %578 = vmatprep.subr.bf16.mxu0 0
        %579 = vmatpush1.bf16.msra.mxu0 %v556
        %580 = vmatprep.subr.bf16.mxu0 0
        %581 = vmatpush2.bf16.msra.mxu0 0
        %582 = vmatprep.subr.bf16.mxu0 0
        %583 = vmatpush2.bf16.msra.mxu0 0
        %584 = vmatprep.subr.bf16.mxu0 0
        %585 = vmatpush2.bf16.msra.mxu0 0
        %586 = vmatprep.subr.bf16.mxu0 0
        %587 = vmatpush2.bf16.msra.mxu0 0
        %588 = vmatprep.subr.bf16.mxu0 0
        %589 = vmatpush2.bf16.msra.mxu0 0
        %590 = vmatprep.subr.bf16.mxu0 0
        %591 = vmatpush2.bf16.msra.mxu0 0
        %592 = vmatprep.subr.bf16.mxu0 0
        %593 = vmatpush2.bf16.msra.mxu0 0
        %594 = vmatprep.subr.bf16.mxu0 0
        %595 = vmatpush2.bf16.msra.mxu0 0
        %596 = vmatprep.mubr.bf16.mxu0 0
        %597 = vmatmul.mubr.bf16.gmra.mxu0 %v562
        %v598 = vpop.f32.mrf.mxu0
        %v599 = vadd.f32 0.0, %v598
        %v600 = vpop.f32.mrf.mxu0
        %v601 = vpop.f32.mrf.mxu0
        %v602 = vpop.f32.mrf.mxu0
        %603 = vdwg.mxu0
        %v604 = vlaneseq
        %v605 = vshrl.u32 %v604, 7
        %v606 = vsub.s32 0, %v605
        %v607 = vrot.slane %v547, %v606
        %v608 = vadd.f32 %v599, %v607
        %v609 = vlaneseq
        %v610 = vshrl.u32 %v609, 7
        %v611 = vsub.s32 1, %v610
        %v612 = vrot.slane %v547, %v611
        %614 = vrot.lane.b32.xlu0 %v612, 32
        %v615 = vpop.permute.xlu0 %614
        %v617 = vadd.f32 %v599, %v615
        %v618 = vlaneseq
        %v619 = vshrl.u32 %v618, 7
        %v620 = vsub.s32 3, %v619
        %v621 = vrot.slane %v547, %v620
        %623 = vrot.lane.b32.xlu0 %v621, 64
        %v624 = vpop.permute.xlu0 %623
        %v626 = vadd.f32 %v599, %v624
        %v627 = vmax.f32 %v626, 0.0
        %628 = vxpose.xlu0.b32.start [1/16] %v608, 128
        %629 = vxpose.xlu0.b32.cont [2/16] 0.0, 128
        %630 = vxpose.xlu0.b32.cont [3/16] 0.0, 128
        %631 = vxpose.xlu0.b32.cont [4/16] 0.0, 128
        %632 = vxpose.xlu0.b32.cont [5/16] 0.0, 128
        %633 = vxpose.xlu0.b32.cont [6/16] 0.0, 128
        %634 = vxpose.xlu0.b32.cont [7/16] 0.0, 128
        %635 = vxpose.xlu0.b32.cont [8/16] 0.0, 128
        %636 = vxpose.xlu0.b32.cont [9/16] 0.0, 128
        %637 = vxpose.xlu0.b32.cont [10/16] 0.0, 128
        %638 = vxpose.xlu0.b32.cont [11/16] 0.0, 128
        %639 = vxpose.xlu0.b32.cont [12/16] 0.0, 128
        %640 = vxpose.xlu0.b32.cont [13/16] 0.0, 128
        %641 = vxpose.xlu0.b32.cont [14/16] 0.0, 128
        %642 = vxpose.xlu0.b32.cont [15/16] 0.0, 128
        %643 = vxpose.xlu0.b32.end [16/16] 0.0, 128
        %v644 = vpop.trf.xlu0
        %v645 = vpop.trf.xlu0
        %v646 = vpop.trf.xlu0
        %v647 = vpop.trf.xlu0
        %v648 = vpop.trf.xlu0
        %v649 = vpop.trf.xlu0
        %v650 = vpop.trf.xlu0
        %v651 = vpop.trf.xlu0
        %v652 = vpop.trf.xlu0
        %v653 = vpop.trf.xlu0
        %v654 = vpop.trf.xlu0
        %v655 = vpop.trf.xlu0
        %v656 = vpop.trf.xlu0
        %v657 = vpop.trf.xlu0
        %v658 = vpop.trf.xlu0
        %v659 = vpop.trf.xlu0
        %v660 = vld [vmem:[#allocation4] sm:$0xf]
        %v661 = vunpack.c.l.bf16 %v660
        %s662 = smul.u32 %s26, 128
        %s663 = sld [smem:[#allocation12 + %s662]]
        %s664 = sadd.s32 %s662, 1
        %s665 = sld [smem:[#allocation12 + %s664]]
        %s666 = sadd.s32 %s662, 2
        %s667 = sld [smem:[#allocation12 + %s666]]
        %s668 = sadd.s32 %s662, 3
        %s669 = sld [smem:[#allocation12 + %s668]]
        %s670 = sadd.s32 %s662, 4
        %s671 = sld [smem:[#allocation12 + %s670]]
        %s672 = sadd.s32 %s662, 5
        %s673 = sld [smem:[#allocation12 + %s672]]
        %s674 = sadd.s32 %s662, 6
        %s675 = sld [smem:[#allocation12 + %s674]]
        %s676 = sadd.s32 %s662, 7
        %s677 = sld [smem:[#allocation12 + %s676]]
        %v678 = vstv %s663
        %v679 = vmul.f32 %v678, %v617
        %v680 = vmul.f32 %v678, %v644
        %v681 = vstv %s665
        %v682 = vmul.f32 %v681, %v617
        %684 = vrot.lane.b32.xlu0 %v682, 127
        %v685 = vpop.permute.xlu0 %684
        %v687 = vadd.f32 %v679, %v685
        %v688 = vmul.f32 %v681, %v644
        %v690 = vrot.slane %v688, 1
        %v692 = vadd.f32 %v680, %v690
        %v693 = vstv %s667
        %v694 = vmul.f32 %v693, %v617
        %696 = vrot.lane.b32.xlu0 %v694, 126
        %v697 = vpop.permute.xlu0 %696
        %v699 = vadd.f32 %v687, %v697
        %v700 = vmul.f32 %v693, %v644
        %v702 = vrot.slane %v700, 2
        %v704 = vadd.f32 %v692, %v702
        %v705 = vstv %s669
        %v706 = vmul.f32 %v705, %v617
        %708 = vrot.lane.b32.xlu0 %v706, 125
        %v709 = vpop.permute.xlu0 %708
        %v711 = vadd.f32 %v699, %v709
        %v712 = vmul.f32 %v705, %v644
        %v714 = vrot.slane %v712, 3
        %v716 = vadd.f32 %v704, %v714
        %v717 = vstv %s671
        %v718 = vmul.f32 %v717, %v617
        %720 = vrot.lane.b32.xlu0 %v718, 124
        %v721 = vpop.permute.xlu0 %720
        %v723 = vadd.f32 %v711, %v721
        %v724 = vmul.f32 %v717, %v644
        %v726 = vrot.slane %v724, 4
        %v728 = vadd.f32 %v716, %v726
        %v729 = vstv %s673
        %v730 = vmul.f32 %v729, %v617
        %732 = vrot.lane.b32.xlu0 %v730, 123
        %v733 = vpop.permute.xlu0 %732
        %v735 = vadd.f32 %v723, %v733
        %v736 = vmul.f32 %v729, %v644
        %v738 = vrot.slane %v736, 5
        %v740 = vadd.f32 %v728, %v738
        %v741 = vstv %s675
        %v742 = vmul.f32 %v741, %v617
        %744 = vrot.lane.b32.xlu0 %v742, 122
        %v745 = vpop.permute.xlu0 %744
        %v747 = vadd.f32 %v735, %v745
        %v748 = vmul.f32 %v741, %v644
        %v750 = vrot.slane %v748, 6
        %v752 = vadd.f32 %v740, %v750
        %v753 = vstv %s677
        %v754 = vmul.f32 %v753, %v617
        %756 = vrot.lane.b32.xlu0 %v754, 121
        %v757 = vpop.permute.xlu0 %756
        %v759 = vadd.f32 %v747, %v757
        %v760 = vmul.f32 %v753, %v644
        %v762 = vrot.slane %v760, 7
        %v764 = vadd.f32 %v752, %v762
        %766 = vset.pattern.permute.xlu0 32
        %767 = vperm.xlu0 %766, %v759
        %v768 = vpop.permute.xlu0 %767
        %v770 = vlaneseq
        %v771 = vshrl.u32 %v770, 7
        %v772 = vsub.s32 0, %v771
        %v773 = vrot.slane %v764, %v772
        %v774 = vadd.f32 %v768, %v773
        %v775 = vmul.f32 %v774, 0.6
        %v776 = vadd.f32 %v661, %v775
        %778 = vset.pattern.permute.xlu0 32
        %779 = vperm.xlu0 %778, %v617
        %v780 = vpop.permute.xlu0 %779
        %v782 = vlaneseq
        %v783 = vshrl.u32 %v782, 7
        %v784 = vsub.s32 0, %v783
        %v785 = vrot.slane %v644, %v784
        %v786 = vadd.f32 %v780, %v785
        %s787 = smul.f32 %s663, 0.4
        %v788 = vand.u32 2147483647, %v786
        %v789 = vstv %s787
        %v790 = vmul.f32 %v789, %v788
        %v791 = vadd.f32 %v776, %v790
        %792 = vset.pattern.permute.xlu0 33
        %793 = vperm.xlu0 %792, %v617
        %v794 = vpop.permute.xlu0 %793
        %v796 = vlaneseq
        %v797 = vshrl.u32 %v796, 7
        %v798 = vsub.s32 1, %v797
        %v799 = vrot.slane %v644, %v798
        %v800 = vadd.f32 %v794, %v799
        %s801 = smul.f32 %s665, 0.4
        %v802 = vand.u32 2147483647, %v800
        %v803 = vstv %s801
        %v804 = vmul.f32 %v803, %v802
        %v805 = vadd.f32 %v791, %v804
        %806 = vset.pattern.permute.xlu0 34
        %807 = vperm.xlu0 %806, %v617
        %v808 = vpop.permute.xlu0 %807
        %v810 = vlaneseq
        %v811 = vshrl.u32 %v810, 7
        %v812 = vsub.s32 2, %v811
        %v813 = vrot.slane %v644, %v812
        %v814 = vadd.f32 %v808, %v813
        %s815 = smul.f32 %s667, 0.4
        %v816 = vand.u32 2147483647, %v814
        %v817 = vstv %s815
        %v818 = vmul.f32 %v817, %v816
        %v819 = vadd.f32 %v805, %v818
        %820 = vset.pattern.permute.xlu0 35
        %821 = vperm.xlu0 %820, %v617
        %v822 = vpop.permute.xlu0 %821
        %v824 = vlaneseq
        %v825 = vshrl.u32 %v824, 7
        %v826 = vsub.s32 3, %v825
        %v827 = vrot.slane %v644, %v826
        %v828 = vadd.f32 %v822, %v827
        %s829 = smul.f32 %s669, 0.4
        %v830 = vand.u32 2147483647, %v828
        %v831 = vstv %s829
        %v832 = vmul.f32 %v831, %v830
        %v833 = vadd.f32 %v819, %v832
        %834 = vset.pattern.permute.xlu0 36
        %835 = vperm.xlu0 %834, %v617
        %v836 = vpop.permute.xlu0 %835
        %v838 = vlaneseq
        %v839 = vshrl.u32 %v838, 7
        %v840 = vsub.s32 4, %v839
        %v841 = vrot.slane %v644, %v840
        %v842 = vadd.f32 %v836, %v841
        %s843 = smul.f32 %s671, 0.4
        %v844 = vand.u32 2147483647, %v842
        %v845 = vstv %s843
        %v846 = vmul.f32 %v845, %v844
        %v847 = vadd.f32 %v833, %v846
        %848 = vset.pattern.permute.xlu0 37
        %849 = vperm.xlu0 %848, %v617
        %v850 = vpop.permute.xlu0 %849
        %v852 = vlaneseq
        %v853 = vshrl.u32 %v852, 7
        %v854 = vsub.s32 5, %v853
        %v855 = vrot.slane %v644, %v854
        %v856 = vadd.f32 %v850, %v855
        %s857 = smul.f32 %s673, 0.4
        %v858 = vand.u32 2147483647, %v856
        %v859 = vstv %s857
        %v860 = vmul.f32 %v859, %v858
        %v861 = vadd.f32 %v847, %v860
        %862 = vset.pattern.permute.xlu0 38
        %863 = vperm.xlu0 %862, %v617
        %v864 = vpop.permute.xlu0 %863
        %v866 = vlaneseq
        %v867 = vshrl.u32 %v866, 7
        %v868 = vsub.s32 6, %v867
        %v869 = vrot.slane %v644, %v868
        %v870 = vadd.f32 %v864, %v869
        %s871 = smul.f32 %s675, 0.4
        %v872 = vand.u32 2147483647, %v870
        %v873 = vstv %s871
        %v874 = vmul.f32 %v873, %v872
        %v875 = vadd.f32 %v861, %v874
        %876 = vset.pattern.permute.xlu0 39
        %877 = vperm.xlu0 %876, %v617
        %v878 = vpop.permute.xlu0 %877
        %v880 = vlaneseq
        %v881 = vshrl.u32 %v880, 7
        %v882 = vsub.s32 7, %v881
        %v883 = vrot.slane %v644, %v882
        %v884 = vadd.f32 %v878, %v883
        %s885 = smul.f32 %s677, 0.4
        %v886 = vand.u32 2147483647, %v884
        %v887 = vstv %s885
        %v888 = vmul.f32 %v887, %v886
        %v889 = vadd.f32 %v875, %v888
        %vm890 = vcmask 64512
        %v891 = vsel %vm890, %v889, -inf
        %892 = vmax.xlane.f32.xlu0 %v891
        %v893 = vpop.xlane.xlu0 %892
        %v894 = vsub.f32 %v889, %v893
        %v895 = vmul.f32 %v894, 1.442695
        %v896 = vpow.pop %v895
        %v897 = vsel %vm890, %v896, 0.0
        %898 = vadd.xlane.f32.xlu0 %v897
        %v899 = vpop.xlane.xlu0 %898
        %v900 = vpack.c.bf16 %v896, %v896
        %v901 = vpack.c.bf16 %v608, %v608
        %v903 = vsel %vm890, %v900, 0
        %vm905 = vcmask 1043456
        %v907 = vsel %vm905, %v901, 0
        %909 = vmatprep.subr.bf16.mxu0 0
        %910 = vmatpush1.bf16.msra.mxu0 0
        %911 = vmatprep.subr.bf16.mxu0 0
        %912 = vmatpush1.bf16.msra.mxu0 0
        %913 = vmatprep.subr.bf16.mxu0 0
        %914 = vmatpush1.bf16.msra.mxu0 0
        %915 = vmatprep.subr.bf16.mxu0 0
        %916 = vmatpush1.bf16.msra.mxu0 0
        %917 = vmatprep.subr.bf16.mxu0 0
        %918 = vmatpush1.bf16.msra.mxu0 0
        %919 = vmatprep.subr.bf16.mxu0 0
        %920 = vmatpush1.bf16.msra.mxu0 0
        %921 = vmatprep.subr.bf16.mxu0 0
        %922 = vmatpush1.bf16.msra.mxu0 0
        %923 = vmatprep.subr.bf16.mxu0 0
        %924 = vmatpush1.bf16.msra.mxu0 %v907
        %925 = vmatprep.subr.bf16.mxu0 0
        %926 = vmatpush2.bf16.msra.mxu0 0
        %927 = vmatprep.subr.bf16.mxu0 0
        %928 = vmatpush2.bf16.msra.mxu0 0
        %929 = vmatprep.subr.bf16.mxu0 0
        %930 = vmatpush2.bf16.msra.mxu0 0
        %931 = vmatprep.subr.bf16.mxu0 0
        %932 = vmatpush2.bf16.msra.mxu0 0
        %933 = vmatprep.subr.bf16.mxu0 0
        %934 = vmatpush2.bf16.msra.mxu0 0
        %935 = vmatprep.subr.bf16.mxu0 0
        %936 = vmatpush2.bf16.msra.mxu0 0
        %937 = vmatprep.subr.bf16.mxu0 0
        %938 = vmatpush2.bf16.msra.mxu0 0
        %939 = vmatprep.subr.bf16.mxu0 0
        %940 = vmatpush2.bf16.msra.mxu0 0
        %941 = vmatprep.mubr.bf16.mxu0 0
        %942 = vmatmul.mubr.bf16.gmra.mxu0 %v903
        %v943 = vpop.f32.mrf.mxu0
        %v944 = vadd.f32 0.0, %v943
        %v945 = vpop.f32.mrf.mxu0
        %v946 = vpop.f32.mrf.mxu0
        %v947 = vpop.f32.mrf.mxu0
        %948 = vdwg.mxu0
        %v949 = vrcp.pop %v899
        %v950 = vmul.f32 %v944, %v949
        %951 = vst.msk [vmem:[#allocation3] sm:$0xff] %vm890, %v950
        %s952 = sadd.s32 %s662, 8
        %s953 = sld [smem:[#allocation12 + %s952]]
        %s954 = sadd.s32 %s662, 9
        %s955 = sld [smem:[#allocation12 + %s954]]
        %s956 = sadd.s32 %s662, 10
        %s957 = sld [smem:[#allocation12 + %s956]]
        %s958 = sadd.s32 %s662, 11
        %s959 = sld [smem:[#allocation12 + %s958]]
        %s960 = sadd.s32 %s662, 12
        %s961 = sld [smem:[#allocation12 + %s960]]
        %s962 = sadd.s32 %s662, 13
        %s963 = sld [smem:[#allocation12 + %s962]]
        %s964 = sadd.s32 %s662, 14
        %s965 = sld [smem:[#allocation12 + %s964]]
        %s966 = sadd.s32 %s662, 15
        %s967 = sld [smem:[#allocation12 + %s966]]
        %v968 = vstv %s953
        %v969 = vmul.f32 %v968, %v617
        %v970 = vmul.f32 %v968, %v645
        %v971 = vstv %s955
        %v972 = vmul.f32 %v971, %v617
        %974 = vrot.lane.b32.xlu0 %v972, 127
        %v975 = vpop.permute.xlu0 %974
        %v977 = vadd.f32 %v969, %v975
        %v978 = vmul.f32 %v971, %v645
        %v980 = vrot.slane %v978, 1
        %v982 = vadd.f32 %v970, %v980
        %v983 = vstv %s957
        %v984 = vmul.f32 %v983, %v617
        %986 = vrot.lane.b32.xlu0 %v984, 126
        %v987 = vpop.permute.xlu0 %986
        %v989 = vadd.f32 %v977, %v987
        %v990 = vmul.f32 %v983, %v645
        %v992 = vrot.slane %v990, 2
        %v994 = vadd.f32 %v982, %v992
        %v995 = vstv %s959
        %v996 = vmul.f32 %v995, %v617
        %998 = vrot.lane.b32.xlu0 %v996, 125
        %v999 = vpop.permute.xlu0 %998
        %v1001 = vadd.f32 %v989, %v999
        %v1002 = vmul.f32 %v995, %v645
        %v1004 = vrot.slane %v1002, 3
        %v1006 = vadd.f32 %v994, %v1004
        %v1007 = vstv %s961
        %v1008 = vmul.f32 %v1007, %v617
        %1010 = vrot.lane.b32.xlu0 %v1008, 124
        %v1011 = vpop.permute.xlu0 %1010
        %v1013 = vadd.f32 %v1001, %v1011
        %v1014 = vmul.f32 %v1007, %v645
        %v1016 = vrot.slane %v1014, 4
        %v1018 = vadd.f32 %v1006, %v1016
        %v1019 = vstv %s963
        %v1020 = vmul.f32 %v1019, %v617
        %1022 = vrot.lane.b32.xlu0 %v1020, 123
        %v1023 = vpop.permute.xlu0 %1022
        %v1025 = vadd.f32 %v1013, %v1023
        %v1026 = vmul.f32 %v1019, %v645
        %v1028 = vrot.slane %v1026, 5
        %v1030 = vadd.f32 %v1018, %v1028
        %v1031 = vstv %s965
        %v1032 = vmul.f32 %v1031, %v617
        %1034 = vrot.lane.b32.xlu0 %v1032, 122
        %v1035 = vpop.permute.xlu0 %1034
        %v1037 = vadd.f32 %v1025, %v1035
        %v1038 = vmul.f32 %v1031, %v645
        %v1040 = vrot.slane %v1038, 6
        %v1042 = vadd.f32 %v1030, %v1040
        %v1043 = vstv %s967
        %v1044 = vmul.f32 %v1043, %v617
        %1046 = vrot.lane.b32.xlu0 %v1044, 121
        %v1047 = vpop.permute.xlu0 %1046
        %v1049 = vadd.f32 %v1037, %v1047
        %v1050 = vmul.f32 %v1043, %v645
        %v1052 = vrot.slane %v1050, 7
        %v1054 = vadd.f32 %v1042, %v1052
        %1056 = vset.pattern.permute.xlu0 40
        %1057 = vperm.xlu0 %1056, %v1049
        %v1058 = vpop.permute.xlu0 %1057
        %v1060 = vlaneseq
        %v1061 = vshrl.u32 %v1060, 7
        %v1062 = vsub.s32 0, %v1061
        %v1063 = vrot.slane %v1054, %v1062
        %v1064 = vadd.f32 %v1058, %v1063
        %v1065 = vmul.f32 %v1064, 0.6
        %v1066 = vadd.f32 %v661, %v1065
        %1067 = vset.pattern.permute.xlu0 40
        %1068 = vperm.xlu0 %1067, %v617
        %v1069 = vpop.permute.xlu0 %1068
        %v1071 = vlaneseq
        %v1072 = vshrl.u32 %v1071, 7
        %v1073 = vsub.s32 0, %v1072
        %v1074 = vrot.slane %v645, %v1073
        %v1075 = vadd.f32 %v1069, %v1074
        %s1076 = smul.f32 %s953, 0.4
        %v1077 = vand.u32 2147483647, %v1075
        %v1078 = vstv %s1076
        %v1079 = vmul.f32 %v1078, %v1077
        %v1080 = vadd.f32 %v1066, %v1079
        %1081 = vset.pattern.permute.xlu0 41
        %1082 = vperm.xlu0 %1081, %v617
        %v1083 = vpop.permute.xlu0 %1082
        %v1085 = vlaneseq
        %v1086 = vshrl.u32 %v1085, 7
        %v1087 = vsub.s32 1, %v1086
        %v1088 = vrot.slane %v645, %v1087
        %v1089 = vadd.f32 %v1083, %v1088
        %s1090 = smul.f32 %s955, 0.4
        %v1091 = vand.u32 2147483647, %v1089
        %v1092 = vstv %s1090
        %v1093 = vmul.f32 %v1092, %v1091
        %v1094 = vadd.f32 %v1080, %v1093
        %1095 = vset.pattern.permute.xlu0 42
        %1096 = vperm.xlu0 %1095, %v617
        %v1097 = vpop.permute.xlu0 %1096
        %v1099 = vlaneseq
        %v1100 = vshrl.u32 %v1099, 7
        %v1101 = vsub.s32 2, %v1100
        %v1102 = vrot.slane %v645, %v1101
        %v1103 = vadd.f32 %v1097, %v1102
        %s1104 = smul.f32 %s957, 0.4
        %v1105 = vand.u32 2147483647, %v1103
        %v1106 = vstv %s1104
        %v1107 = vmul.f32 %v1106, %v1105
        %v1108 = vadd.f32 %v1094, %v1107
        %1109 = vset.pattern.permute.xlu0 43
        %1110 = vperm.xlu0 %1109, %v617
        %v1111 = vpop.permute.xlu0 %1110
        %v1113 = vlaneseq
        %v1114 = vshrl.u32 %v1113, 7
        %v1115 = vsub.s32 3, %v1114
        %v1116 = vrot.slane %v645, %v1115
        %v1117 = vadd.f32 %v1111, %v1116
        %s1118 = smul.f32 %s959, 0.4
        %v1119 = vand.u32 2147483647, %v1117
        %v1120 = vstv %s1118
        %v1121 = vmul.f32 %v1120, %v1119
        %v1122 = vadd.f32 %v1108, %v1121
        %1123 = vset.pattern.permute.xlu0 44
        %1124 = vperm.xlu0 %1123, %v617
        %v1125 = vpop.permute.xlu0 %1124
        %v1127 = vlaneseq
        %v1128 = vshrl.u32 %v1127, 7
        %v1129 = vsub.s32 4, %v1128
        %v1130 = vrot.slane %v645, %v1129
        %v1131 = vadd.f32 %v1125, %v1130
        %s1132 = smul.f32 %s961, 0.4
        %v1133 = vand.u32 2147483647, %v1131
        %v1134 = vstv %s1132
        %v1135 = vmul.f32 %v1134, %v1133
        %v1136 = vadd.f32 %v1122, %v1135
        %1137 = vset.pattern.permute.xlu0 45
        %1138 = vperm.xlu0 %1137, %v617
        %v1139 = vpop.permute.xlu0 %1138
        %v1141 = vlaneseq
        %v1142 = vshrl.u32 %v1141, 7
        %v1143 = vsub.s32 5, %v1142
        %v1144 = vrot.slane %v645, %v1143
        %v1145 = vadd.f32 %v1139, %v1144
        %s1146 = smul.f32 %s963, 0.4
        %v1147 = vand.u32 2147483647, %v1145
        %v1148 = vstv %s1146
        %v1149 = vmul.f32 %v1148, %v1147
        %v1150 = vadd.f32 %v1136, %v1149
        %1151 = vset.pattern.permute.xlu0 46
        %1152 = vperm.xlu0 %1151, %v617
        %v1153 = vpop.permute.xlu0 %1152
        %v1155 = vlaneseq
        %v1156 = vshrl.u32 %v1155, 7
        %v1157 = vsub.s32 6, %v1156
        %v1158 = vrot.slane %v645, %v1157
        %v1159 = vadd.f32 %v1153, %v1158
        %s1160 = smul.f32 %s965, 0.4
        %v1161 = vand.u32 2147483647, %v1159
        %v1162 = vstv %s1160
        %v1163 = vmul.f32 %v1162, %v1161
        %v1164 = vadd.f32 %v1150, %v1163
        %1165 = vset.pattern.permute.xlu0 47
        %1166 = vperm.xlu0 %1165, %v617
        %v1167 = vpop.permute.xlu0 %1166
        %v1169 = vlaneseq
        %v1170 = vshrl.u32 %v1169, 7
        %v1171 = vsub.s32 7, %v1170
        %v1172 = vrot.slane %v645, %v1171
        %v1173 = vadd.f32 %v1167, %v1172
        %s1174 = smul.f32 %s967, 0.4
        %v1175 = vand.u32 2147483647, %v1173
        %v1176 = vstv %s1174
        %v1177 = vmul.f32 %v1176, %v1175
        %v1178 = vadd.f32 %v1164, %v1177
        %v1179 = vsel %vm890, %v1178, -inf
        %1180 = vmax.xlane.f32.xlu0 %v1179
        %v1181 = vpop.xlane.xlu0 %1180
        %v1182 = vsub.f32 %v1178, %v1181
        %v1183 = vmul.f32 %v1182, 1.442695
        %v1184 = vpow.pop %v1183
        %v1185 = vsel %vm890, %v1184, 0.0
        %1186 = vadd.xlane.f32.xlu0 %v1185
        %v1187 = vpop.xlane.xlu0 %1186
        %v1188 = vpack.c.bf16 %v1184, %v1184
        %1190 = vrot.lane.b32.xlu0 %v901, 120
        %v1191 = vpop.permute.xlu0 %1190
        %v1193 = vsel %vm890, %v1188, 0
        %v1196 = vsel %vm905, %v1191, 0
        %1198 = vmatprep.subr.bf16.mxu0 0
        %1199 = vmatpush1.bf16.msra.mxu0 0
        %1200 = vmatprep.subr.bf16.mxu0 0
        %1201 = vmatpush1.bf16.msra.mxu0 0
        %1202 = vmatprep.subr.bf16.mxu0 0
        %1203 = vmatpush1.bf16.msra.mxu0 0
        %1204 = vmatprep.subr.bf16.mxu0 0
        %1205 = vmatpush1.bf16.msra.mxu0 0
        %1206 = vmatprep.subr.bf16.mxu0 0
        %1207 = vmatpush1.bf16.msra.mxu0 0
        %1208 = vmatprep.subr.bf16.mxu0 0
        %1209 = vmatpush1.bf16.msra.mxu0 0
        %1210 = vmatprep.subr.bf16.mxu0 0
        %1211 = vmatpush1.bf16.msra.mxu0 0
        %1212 = vmatprep.subr.bf16.mxu0 0
        %1213 = vmatpush1.bf16.msra.mxu0 %v1196
        %1214 = vmatprep.subr.bf16.mxu0 0
        %1215 = vmatpush2.bf16.msra.mxu0 0
        %1216 = vmatprep.subr.bf16.mxu0 0
        %1217 = vmatpush2.bf16.msra.mxu0 0
        %1218 = vmatprep.subr.bf16.mxu0 0
        %1219 = vmatpush2.bf16.msra.mxu0 0
        %1220 = vmatprep.subr.bf16.mxu0 0
        %1221 = vmatpush2.bf16.msra.mxu0 0
        %1222 = vmatprep.subr.bf16.mxu0 0
        %1223 = vmatpush2.bf16.msra.mxu0 0
        %1224 = vmatprep.subr.bf16.mxu0 0
        %1225 = vmatpush2.bf16.msra.mxu0 0
        %1226 = vmatprep.subr.bf16.mxu0 0
        %1227 = vmatpush2.bf16.msra.mxu0 0
        %1228 = vmatprep.subr.bf16.mxu0 0
        %1229 = vmatpush2.bf16.msra.mxu0 0
        %1230 = vmatprep.mubr.bf16.mxu0 0
        %1231 = vmatmul.mubr.bf16.gmra.mxu0 %v1193
        %v1232 = vpop.f32.mrf.mxu0
        %v1233 = vadd.f32 0.0, %v1232
        %v1234 = vpop.f32.mrf.mxu0
        %v1235 = vpop.f32.mrf.mxu0
        %v1236 = vpop.f32.mrf.mxu0
        %1237 = vdwg.mxu0
        %v1238 = vrcp.pop %v1187
        %v1239 = vmul.f32 %v1233, %v1238
        %1241 = vrot.lane.b32.xlu0 %v1239, 8
        %v1242 = vpop.permute.xlu0 %1241
        %vm1244 = vcmask 130112
        %1245 = vst.msk [vmem:[#allocation3] sm:$0xff] %vm1244, %v1242
        %s1246 = sadd.s32 %s662, 16
        %s1247 = sld [smem:[#allocation12 + %s1246]]
        %s1248 = sadd.s32 %s662, 17
        %s1249 = sld [smem:[#allocation12 + %s1248]]
        %s1250 = sadd.s32 %s662, 18
        %s1251 = sld [smem:[#allocation12 + %s1250]]
        %s1252 = sadd.s32 %s662, 19
        %s1253 = sld [smem:[#allocation12 + %s1252]]
        %s1254 = sadd.s32 %s662, 20
        %s1255 = sld [smem:[#allocation12 + %s1254]]
        %s1256 = sadd.s32 %s662, 21
        %s1257 = sld [smem:[#allocation12 + %s1256]]
        %s1258 = sadd.s32 %s662, 22
        %s1259 = sld [smem:[#allocation12 + %s1258]]
        %s1260 = sadd.s32 %s662, 23
        %s1261 = sld [smem:[#allocation12 + %s1260]]
        %v1262 = vstv %s1247
        %v1263 = vmul.f32 %v1262, %v617
        %v1264 = vmul.f32 %v1262, %v646
        %v1265 = vstv %s1249
        %v1266 = vmul.f32 %v1265, %v617
        %1268 = vrot.lane.b32.xlu0 %v1266, 127
        %v1269 = vpop.permute.xlu0 %1268
        %v1271 = vadd.f32 %v1263, %v1269
        %v1272 = vmul.f32 %v1265, %v646
        %v1274 = vrot.slane %v1272, 1
        %v1276 = vadd.f32 %v1264, %v1274
        %v1277 = vstv %s1251
        %v1278 = vmul.f32 %v1277, %v617
        %1280 = vrot.lane.b32.xlu0 %v1278, 126
        %v1281 = vpop.permute.xlu0 %1280
        %v1283 = vadd.f32 %v1271, %v1281
        %v1284 = vmul.f32 %v1277, %v646
        %v1286 = vrot.slane %v1284, 2
        %v1288 = vadd.f32 %v1276, %v1286
        %v1289 = vstv %s1253
        %v1290 = vmul.f32 %v1289, %v617
        %1292 = vrot.lane.b32.xlu0 %v1290, 125
        %v1293 = vpop.permute.xlu0 %1292
        %v1295 = vadd.f32 %v1283, %v1293
        %v1296 = vmul.f32 %v1289, %v646
        %v1298 = vrot.slane %v1296, 3
        %v1300 = vadd.f32 %v1288, %v1298
        %v1301 = vstv %s1255
        %v1302 = vmul.f32 %v1301, %v617
        %1304 = vrot.lane.b32.xlu0 %v1302, 124
        %v1305 = vpop.permute.xlu0 %1304
        %v1307 = vadd.f32 %v1295, %v1305
        %v1308 = vmul.f32 %v1301, %v646
        %v1310 = vrot.slane %v1308, 4
        %v1312 = vadd.f32 %v1300, %v1310
        %v1313 = vstv %s1257
        %v1314 = vmul.f32 %v1313, %v617
        %1316 = vrot.lane.b32.xlu0 %v1314, 123
        %v1317 = vpop.permute.xlu0 %1316
        %v1319 = vadd.f32 %v1307, %v1317
        %v1320 = vmul.f32 %v1313, %v646
        %v1322 = vrot.slane %v1320, 5
        %v1324 = vadd.f32 %v1312, %v1322
        %v1325 = vstv %s1259
        %v1326 = vmul.f32 %v1325, %v617
        %1328 = vrot.lane.b32.xlu0 %v1326, 122
        %v1329 = vpop.permute.xlu0 %1328
        %v1331 = vadd.f32 %v1319, %v1329
        %v1332 = vmul.f32 %v1325, %v646
        %v1334 = vrot.slane %v1332, 6
        %v1336 = vadd.f32 %v1324, %v1334
        %v1337 = vstv %s1261
        %v1338 = vmul.f32 %v1337, %v617
        %1340 = vrot.lane.b32.xlu0 %v1338, 121
        %v1341 = vpop.permute.xlu0 %1340
        %v1343 = vadd.f32 %v1331, %v1341
        %v1344 = vmul.f32 %v1337, %v646
        %v1346 = vrot.slane %v1344, 7
        %v1348 = vadd.f32 %v1336, %v1346
        %1350 = vset.pattern.permute.xlu0 48
        %1351 = vperm.xlu0 %1350, %v1343
        %v1352 = vpop.permute.xlu0 %1351
        %v1354 = vlaneseq
        %v1355 = vshrl.u32 %v1354, 7
        %v1356 = vsub.s32 0, %v1355
        %v1357 = vrot.slane %v1348, %v1356
        %v1358 = vadd.f32 %v1352, %v1357
        %v1359 = vmul.f32 %v1358, 0.6
        %v1360 = vadd.f32 %v661, %v1359
        %1361 = vset.pattern.permute.xlu0 48
        %1362 = vperm.xlu0 %1361, %v617
        %v1363 = vpop.permute.xlu0 %1362
        %v1365 = vlaneseq
        %v1366 = vshrl.u32 %v1365, 7
        %v1367 = vsub.s32 0, %v1366
        %v1368 = vrot.slane %v646, %v1367
        %v1369 = vadd.f32 %v1363, %v1368
        %s1370 = smul.f32 %s1247, 0.4
        %v1371 = vand.u32 2147483647, %v1369
        %v1372 = vstv %s1370
        %v1373 = vmul.f32 %v1372, %v1371
        %v1374 = vadd.f32 %v1360, %v1373
        %1375 = vset.pattern.permute.xlu0 49
        %1376 = vperm.xlu0 %1375, %v617
        %v1377 = vpop.permute.xlu0 %1376
        %v1379 = vlaneseq
        %v1380 = vshrl.u32 %v1379, 7
        %v1381 = vsub.s32 1, %v1380
        %v1382 = vrot.slane %v646, %v1381
        %v1383 = vadd.f32 %v1377, %v1382
        %s1384 = smul.f32 %s1249, 0.4
        %v1385 = vand.u32 2147483647, %v1383
        %v1386 = vstv %s1384
        %v1387 = vmul.f32 %v1386, %v1385
        %v1388 = vadd.f32 %v1374, %v1387
        %1389 = vset.pattern.permute.xlu0 50
        %1390 = vperm.xlu0 %1389, %v617
        %v1391 = vpop.permute.xlu0 %1390
        %v1393 = vlaneseq
        %v1394 = vshrl.u32 %v1393, 7
        %v1395 = vsub.s32 2, %v1394
        %v1396 = vrot.slane %v646, %v1395
        %v1397 = vadd.f32 %v1391, %v1396
        %s1398 = smul.f32 %s1251, 0.4
        %v1399 = vand.u32 2147483647, %v1397
        %v1400 = vstv %s1398
        %v1401 = vmul.f32 %v1400, %v1399
        %v1402 = vadd.f32 %v1388, %v1401
        %1403 = vset.pattern.permute.xlu0 51
        %1404 = vperm.xlu0 %1403, %v617
        %v1405 = vpop.permute.xlu0 %1404
        %v1407 = vlaneseq
        %v1408 = vshrl.u32 %v1407, 7
        %v1409 = vsub.s32 3, %v1408
        %v1410 = vrot.slane %v646, %v1409
        %v1411 = vadd.f32 %v1405, %v1410
        %s1412 = smul.f32 %s1253, 0.4
        %v1413 = vand.u32 2147483647, %v1411
        %v1414 = vstv %s1412
        %v1415 = vmul.f32 %v1414, %v1413
        %v1416 = vadd.f32 %v1402, %v1415
        %1417 = vset.pattern.permute.xlu0 52
        %1418 = vperm.xlu0 %1417, %v617
        %v1419 = vpop.permute.xlu0 %1418
        %v1421 = vlaneseq
        %v1422 = vshrl.u32 %v1421, 7
        %v1423 = vsub.s32 4, %v1422
        %v1424 = vrot.slane %v646, %v1423
        %v1425 = vadd.f32 %v1419, %v1424
        %s1426 = smul.f32 %s1255, 0.4
        %v1427 = vand.u32 2147483647, %v1425
        %v1428 = vstv %s1426
        %v1429 = vmul.f32 %v1428, %v1427
        %v1430 = vadd.f32 %v1416, %v1429
        %1431 = vset.pattern.permute.xlu0 53
        %1432 = vperm.xlu0 %1431, %v617
        %v1433 = vpop.permute.xlu0 %1432
        %v1435 = vlaneseq
        %v1436 = vshrl.u32 %v1435, 7
        %v1437 = vsub.s32 5, %v1436
        %v1438 = vrot.slane %v646, %v1437
        %v1439 = vadd.f32 %v1433, %v1438
        %s1440 = smul.f32 %s1257, 0.4
        %v1441 = vand.u32 2147483647, %v1439
        %v1442 = vstv %s1440
        %v1443 = vmul.f32 %v1442, %v1441
        %v1444 = vadd.f32 %v1430, %v1443
        %1445 = vset.pattern.permute.xlu0 54
        %1446 = vperm.xlu0 %1445, %v617
        %v1447 = vpop.permute.xlu0 %1446
        %v1449 = vlaneseq
        %v1450 = vshrl.u32 %v1449, 7
        %v1451 = vsub.s32 6, %v1450
        %v1452 = vrot.slane %v646, %v1451
        %v1453 = vadd.f32 %v1447, %v1452
        %s1454 = smul.f32 %s1259, 0.4
        %v1455 = vand.u32 2147483647, %v1453
        %v1456 = vstv %s1454
        %v1457 = vmul.f32 %v1456, %v1455
        %v1458 = vadd.f32 %v1444, %v1457
        %1459 = vset.pattern.permute.xlu0 55
        %1460 = vperm.xlu0 %1459, %v617
        %v1461 = vpop.permute.xlu0 %1460
        %v1463 = vlaneseq
        %v1464 = vshrl.u32 %v1463, 7
        %v1465 = vsub.s32 7, %v1464
        %v1466 = vrot.slane %v646, %v1465
        %v1467 = vadd.f32 %v1461, %v1466
        %s1468 = smul.f32 %s1261, 0.4
        %v1469 = vand.u32 2147483647, %v1467
        %v1470 = vstv %s1468
        %v1471 = vmul.f32 %v1470, %v1469
        %v1472 = vadd.f32 %v1458, %v1471
        %v1473 = vsel %vm890, %v1472, -inf
        %1474 = vmax.xlane.f32.xlu0 %v1473
        %v1475 = vpop.xlane.xlu0 %1474
        %v1476 = vsub.f32 %v1472, %v1475
        %v1477 = vmul.f32 %v1476, 1.442695
        %v1478 = vpow.pop %v1477
        %v1479 = vsel %vm890, %v1478, 0.0
        %1480 = vadd.xlane.f32.xlu0 %v1479
        %v1481 = vpop.xlane.xlu0 %1480
        %v1482 = vpack.c.bf16 %v1478, %v1478
        %1483 = vrot.lane.b32.xlu0 %v901, 112
        %v1484 = vpop.permute.xlu0 %1483
        %v1486 = vsel %vm890, %v1482, 0
        %v1489 = vsel %vm905, %v1484, 0
        %1491 = vmatprep.subr.bf16.mxu0 0
        %1492 = vmatpush1.bf16.msra.mxu0 0
        %1493 = vmatprep.subr.bf16.mxu0 0
        %1494 = vmatpush1.bf16.msra.mxu0 0
        %1495 = vmatprep.subr.bf16.mxu0 0
        %1496 = vmatpush1.bf16.msra.mxu0 0
        %1497 = vmatprep.subr.bf16.mxu0 0
        %1498 = vmatpush1.bf16.msra.mxu0 0
        %1499 = vmatprep.subr.bf16.mxu0 0
        %1500 = vmatpush1.bf16.msra.mxu0 0
        %1501 = vmatprep.subr.bf16.mxu0 0
        %1502 = vmatpush1.bf16.msra.mxu0 0
        %1503 = vmatprep.subr.bf16.mxu0 0
        %1504 = vmatpush1.bf16.msra.mxu0 0
        %1505 = vmatprep.subr.bf16.mxu0 0
        %1506 = vmatpush1.bf16.msra.mxu0 %v1489
        %1507 = vmatprep.subr.bf16.mxu0 0
        %1508 = vmatpush2.bf16.msra.mxu0 0
        %1509 = vmatprep.subr.bf16.mxu0 0
        %1510 = vmatpush2.bf16.msra.mxu0 0
        %1511 = vmatprep.subr.bf16.mxu0 0
        %1512 = vmatpush2.bf16.msra.mxu0 0
        %1513 = vmatprep.subr.bf16.mxu0 0
        %1514 = vmatpush2.bf16.msra.mxu0 0
        %1515 = vmatprep.subr.bf16.mxu0 0
        %1516 = vmatpush2.bf16.msra.mxu0 0
        %1517 = vmatprep.subr.bf16.mxu0 0
        %1518 = vmatpush2.bf16.msra.mxu0 0
        %1519 = vmatprep.subr.bf16.mxu0 0
        %1520 = vmatpush2.bf16.msra.mxu0 0
        %1521 = vmatprep.subr.bf16.mxu0 0
        %1522 = vmatpush2.bf16.msra.mxu0 0
        %1523 = vmatprep.mubr.bf16.mxu0 0
        %1524 = vmatmul.mubr.bf16.gmra.mxu0 %v1486
        %v1525 = vpop.f32.mrf.mxu0
        %v1526 = vadd.f32 0.0, %v1525
        %v1527 = vpop.f32.mrf.mxu0
        %v1528 = vpop.f32.mrf.mxu0
        %v1529 = vpop.f32.mrf.mxu0
        %1530 = vdwg.mxu0
        %v1531 = vrcp.pop %v1481
        %v1532 = vmul.f32 %v1526, %v1531
        %1534 = vrot.lane.b32.xlu0 %v1532, 16
        %v1535 = vpop.permute.xlu0 %1534
        %vm1537 = vcmask 195712
        %1538 = vst.msk [vmem:[#allocation3] sm:$0xff] %vm1537, %v1535
        %s1539 = sadd.s32 %s662, 24
        %s1540 = sld [smem:[#allocation12 + %s1539]]
        %s1541 = sadd.s32 %s662, 25
        %s1542 = sld [smem:[#allocation12 + %s1541]]
        %s1543 = sadd.s32 %s662, 26
        %s1544 = sld [smem:[#allocation12 + %s1543]]
        %s1545 = sadd.s32 %s662, 27
        %s1546 = sld [smem:[#allocation12 + %s1545]]
        %s1547 = sadd.s32 %s662, 28
        %s1548 = sld [smem:[#allocation12 + %s1547]]
        %s1549 = sadd.s32 %s662, 29
        %s1550 = sld [smem:[#allocation12 + %s1549]]
        %s1551 = sadd.s32 %s662, 30
        %s1552 = sld [smem:[#allocation12 + %s1551]]
        %s1553 = sadd.s32 %s662, 31
        %s1554 = sld [smem:[#allocation12 + %s1553]]
        %v1555 = vstv %s1540
        %v1556 = vmul.f32 %v1555, %v617
        %v1557 = vmul.f32 %v1555, %v647
        %v1558 = vstv %s1542
        %v1559 = vmul.f32 %v1558, %v617
        %1561 = vrot.lane.b32.xlu0 %v1559, 127
        %v1562 = vpop.permute.xlu0 %1561
        %v1564 = vadd.f32 %v1556, %v1562
        %v1565 = vmul.f32 %v1558, %v647
        %v1567 = vrot.slane %v1565, 1
        %v1569 = vadd.f32 %v1557, %v1567
        %v1570 = vstv %s1544
        %v1571 = vmul.f32 %v1570, %v617
        %1573 = vrot.lane.b32.xlu0 %v1571, 126
        %v1574 = vpop.permute.xlu0 %1573
        %v1576 = vadd.f32 %v1564, %v1574
        %v1577 = vmul.f32 %v1570, %v647
        %v1579 = vrot.slane %v1577, 2
        %v1581 = vadd.f32 %v1569, %v1579
        %v1582 = vstv %s1546
        %v1583 = vmul.f32 %v1582, %v617
        %1585 = vrot.lane.b32.xlu0 %v1583, 125
        %v1586 = vpop.permute.xlu0 %1585
        %v1588 = vadd.f32 %v1576, %v1586
        %v1589 = vmul.f32 %v1582, %v647
        %v1591 = vrot.slane %v1589, 3
        %v1593 = vadd.f32 %v1581, %v1591
        %v1594 = vstv %s1548
        %v1595 = vmul.f32 %v1594, %v617
        %1597 = vrot.lane.b32.xlu0 %v1595, 124
        %v1598 = vpop.permute.xlu0 %1597
        %v1600 = vadd.f32 %v1588, %v1598
        %v1601 = vmul.f32 %v1594, %v647
        %v1603 = vrot.slane %v1601, 4
        %v1605 = vadd.f32 %v1593, %v1603
        %v1606 = vstv %s1550
        %v1607 = vmul.f32 %v1606, %v617
        %1609 = vrot.lane.b32.xlu0 %v1607, 123
        %v1610 = vpop.permute.xlu0 %1609
        %v1612 = vadd.f32 %v1600, %v1610
        %v1613 = vmul.f32 %v1606, %v647
        %v1615 = vrot.slane %v1613, 5
        %v1617 = vadd.f32 %v1605, %v1615
        %v1618 = vstv %s1552
        %v1619 = vmul.f32 %v1618, %v617
        %1621 = vrot.lane.b32.xlu0 %v1619, 122
        %v1622 = vpop.permute.xlu0 %1621
        %v1624 = vadd.f32 %v1612, %v1622
        %v1625 = vmul.f32 %v1618, %v647
        %v1627 = vrot.slane %v1625, 6
        %v1629 = vadd.f32 %v1617, %v1627
        %v1630 = vstv %s1554
        %v1631 = vmul.f32 %v1630, %v617
        %1633 = vrot.lane.b32.xlu0 %v1631, 121
        %v1634 = vpop.permute.xlu0 %1633
        %v1636 = vadd.f32 %v1624, %v1634
        %v1637 = vmul.f32 %v1630, %v647
        %v1639 = vrot.slane %v1637, 7
        %v1641 = vadd.f32 %v1629, %v1639
        %1643 = vset.pattern.permute.xlu0 56
        %1644 = vperm.xlu0 %1643, %v1636
        %v1645 = vpop.permute.xlu0 %1644
        %v1647 = vlaneseq
        %v1648 = vshrl.u32 %v1647, 7
        %v1649 = vsub.s32 0, %v1648
        %v1650 = vrot.slane %v1641, %v1649
        %v1651 = vadd.f32 %v1645, %v1650
        %v1652 = vmul.f32 %v1651, 0.6
        %v1653 = vadd.f32 %v661, %v1652
        %1654 = vset.pattern.permute.xlu0 56
        %1655 = vperm.xlu0 %1654, %v617
        %v1656 = vpop.permute.xlu0 %1655
        %v1658 = vlaneseq
        %v1659 = vshrl.u32 %v1658, 7
        %v1660 = vsub.s32 0, %v1659
        %v1661 = vrot.slane %v647, %v1660
        %v1662 = vadd.f32 %v1656, %v1661
        %s1663 = smul.f32 %s1540, 0.4
        %v1664 = vand.u32 2147483647, %v1662
        %v1665 = vstv %s1663
        %v1666 = vmul.f32 %v1665, %v1664
        %v1667 = vadd.f32 %v1653, %v1666
        %1668 = vset.pattern.permute.xlu0 57
        %1669 = vperm.xlu0 %1668, %v617
        %v1670 = vpop.permute.xlu0 %1669
        %v1672 = vlaneseq
        %v1673 = vshrl.u32 %v1672, 7
        %v1674 = vsub.s32 1, %v1673
        %v1675 = vrot.slane %v647, %v1674
        %v1676 = vadd.f32 %v1670, %v1675
        %s1677 = smul.f32 %s1542, 0.4
        %v1678 = vand.u32 2147483647, %v1676
        %v1679 = vstv %s1677
        %v1680 = vmul.f32 %v1679, %v1678
        %v1681 = vadd.f32 %v1667, %v1680
        %1682 = vset.pattern.permute.xlu0 58
        %1683 = vperm.xlu0 %1682, %v617
        %v1684 = vpop.permute.xlu0 %1683
        %v1686 = vlaneseq
        %v1687 = vshrl.u32 %v1686, 7
        %v1688 = vsub.s32 2, %v1687
        %v1689 = vrot.slane %v647, %v1688
        %v1690 = vadd.f32 %v1684, %v1689
        %s1691 = smul.f32 %s1544, 0.4
        %v1692 = vand.u32 2147483647, %v1690
        %v1693 = vstv %s1691
        %v1694 = vmul.f32 %v1693, %v1692
        %v1695 = vadd.f32 %v1681, %v1694
        %1696 = vset.pattern.permute.xlu0 59
        %1697 = vperm.xlu0 %1696, %v617
        %v1698 = vpop.permute.xlu0 %1697
        %v1700 = vlaneseq
        %v1701 = vshrl.u32 %v1700, 7
        %v1702 = vsub.s32 3, %v1701
        %v1703 = vrot.slane %v647, %v1702
        %v1704 = vadd.f32 %v1698, %v1703
        %s1705 = smul.f32 %s1546, 0.4
        %v1706 = vand.u32 2147483647, %v1704
        %v1707 = vstv %s1705
        %v1708 = vmul.f32 %v1707, %v1706
        %v1709 = vadd.f32 %v1695, %v1708
        %1710 = vset.pattern.permute.xlu0 60
        %1711 = vperm.xlu0 %1710, %v617
        %v1712 = vpop.permute.xlu0 %1711
        %v1714 = vlaneseq
        %v1715 = vshrl.u32 %v1714, 7
        %v1716 = vsub.s32 4, %v1715
        %v1717 = vrot.slane %v647, %v1716
        %v1718 = vadd.f32 %v1712, %v1717
        %s1719 = smul.f32 %s1548, 0.4
        %v1720 = vand.u32 2147483647, %v1718
        %v1721 = vstv %s1719
        %v1722 = vmul.f32 %v1721, %v1720
        %v1723 = vadd.f32 %v1709, %v1722
        %1724 = vset.pattern.permute.xlu0 61
        %1725 = vperm.xlu0 %1724, %v617
        %v1726 = vpop.permute.xlu0 %1725
        %v1728 = vlaneseq
        %v1729 = vshrl.u32 %v1728, 7
        %v1730 = vsub.s32 5, %v1729
        %v1731 = vrot.slane %v647, %v1730
        %v1732 = vadd.f32 %v1726, %v1731
        %s1733 = smul.f32 %s1550, 0.4
        %v1734 = vand.u32 2147483647, %v1732
        %v1735 = vstv %s1733
        %v1736 = vmul.f32 %v1735, %v1734
        %v1737 = vadd.f32 %v1723, %v1736
        %1738 = vset.pattern.permute.xlu0 62
        %1739 = vperm.xlu0 %1738, %v617
        %v1740 = vpop.permute.xlu0 %1739
        %v1742 = vlaneseq
        %v1743 = vshrl.u32 %v1742, 7
        %v1744 = vsub.s32 6, %v1743
        %v1745 = vrot.slane %v647, %v1744
        %v1746 = vadd.f32 %v1740, %v1745
        %s1747 = smul.f32 %s1552, 0.4
        %v1748 = vand.u32 2147483647, %v1746
        %v1749 = vstv %s1747
        %v1750 = vmul.f32 %v1749, %v1748
        %v1751 = vadd.f32 %v1737, %v1750
        %1752 = vset.pattern.permute.xlu0 63
        %1753 = vperm.xlu0 %1752, %v617
        %v1754 = vpop.permute.xlu0 %1753
        %v1756 = vlaneseq
        %v1757 = vshrl.u32 %v1756, 7
        %v1758 = vsub.s32 7, %v1757
        %v1759 = vrot.slane %v647, %v1758
        %v1760 = vadd.f32 %v1754, %v1759
        %s1761 = smul.f32 %s1554, 0.4
        %v1762 = vand.u32 2147483647, %v1760
        %v1763 = vstv %s1761
        %v1764 = vmul.f32 %v1763, %v1762
        %v1765 = vadd.f32 %v1751, %v1764
        %v1766 = vsel %vm890, %v1765, -inf
        %1767 = vmax.xlane.f32.xlu0 %v1766
        %v1768 = vpop.xlane.xlu0 %1767
        %v1769 = vsub.f32 %v1765, %v1768
        %v1770 = vmul.f32 %v1769, 1.442695
        %v1771 = vpow.pop %v1770
        %v1772 = vsel %vm890, %v1771, 0.0
        %1773 = vadd.xlane.f32.xlu0 %v1772
        %v1774 = vpop.xlane.xlu0 %1773
        %v1775 = vpack.c.bf16 %v1771, %v1771
        %1776 = vrot.lane.b32.xlu0 %v901, 104
        %v1777 = vpop.permute.xlu0 %1776
        %v1779 = vsel %vm890, %v1775, 0
        %v1782 = vsel %vm905, %v1777, 0
        %1784 = vmatprep.subr.bf16.mxu0 0
        %1785 = vmatpush1.bf16.msra.mxu0 0
        %1786 = vmatprep.subr.bf16.mxu0 0
        %1787 = vmatpush1.bf16.msra.mxu0 0
        %1788 = vmatprep.subr.bf16.mxu0 0
        %1789 = vmatpush1.bf16.msra.mxu0 0
        %1790 = vmatprep.subr.bf16.mxu0 0
        %1791 = vmatpush1.bf16.msra.mxu0 0
        %1792 = vmatprep.subr.bf16.mxu0 0
        %1793 = vmatpush1.bf16.msra.mxu0 0
        %1794 = vmatprep.subr.bf16.mxu0 0
        %1795 = vmatpush1.bf16.msra.mxu0 0
        %1796 = vmatprep.subr.bf16.mxu0 0
        %1797 = vmatpush1.bf16.msra.mxu0 0
        %1798 = vmatprep.subr.bf16.mxu0 0
        %1799 = vmatpush1.bf16.msra.mxu0 %v1782
        %1800 = vmatprep.subr.bf16.mxu0 0
        %1801 = vmatpush2.bf16.msra.mxu0 0
        %1802 = vmatprep.subr.bf16.mxu0 0
        %1803 = vmatpush2.bf16.msra.mxu0 0
        %1804 = vmatprep.subr.bf16.mxu0 0
        %1805 = vmatpush2.bf16.msra.mxu0 0
        %1806 = vmatprep.subr.bf16.mxu0 0
        %1807 = vmatpush2.bf16.msra.mxu0 0
        %1808 = vmatprep.subr.bf16.mxu0 0
        %1809 = vmatpush2.bf16.msra.mxu0 0
        %1810 = vmatprep.subr.bf16.mxu0 0
        %1811 = vmatpush2.bf16.msra.mxu0 0
        %1812 = vmatprep.subr.bf16.mxu0 0
        %1813 = vmatpush2.bf16.msra.mxu0 0
        %1814 = vmatprep.subr.bf16.mxu0 0
        %1815 = vmatpush2.bf16.msra.mxu0 0
        %1816 = vmatprep.mubr.bf16.mxu0 0
        %1817 = vmatmul.mubr.bf16.gmra.mxu0 %v1779
        %v1818 = vpop.f32.mrf.mxu0
        %v1819 = vadd.f32 0.0, %v1818
        %v1820 = vpop.f32.mrf.mxu0
        %v1821 = vpop.f32.mrf.mxu0
        %v1822 = vpop.f32.mrf.mxu0
        %1823 = vdwg.mxu0
        %v1824 = vrcp.pop %v1774
        %v1825 = vmul.f32 %v1819, %v1824
        %1827 = vrot.lane.b32.xlu0 %v1825, 24
        %v1828 = vpop.permute.xlu0 %1827
        %vm1830 = vcmask 261312
        %1831 = vst.msk [vmem:[#allocation3] sm:$0xff] %vm1830, %v1828
        %v1832 = vld [vmem:[#allocation3] sm:$0xff]
        %v1833 = vlaneseq
        %v1834 = vshrl.u32 %v1833, 7
        %v1835 = vsub.s32 2, %v1834
        %v1836 = vrot.slane %v547, %v1835
        %v1837 = vadd.f32 %v1832, %v1836
        %1839 = vrot.lane.b32.xlu0 %v627, 64
        %v1840 = vpop.permute.xlu0 %1839
        %v1842 = vadd.f32 %v1837, %v1840
        %v1843 = vsel %vm560, %v1842, 0.0
        %1844 = vadd.xlane.f32.xlu0 %v1843
        %v1845 = vpop.xlane.xlu0 %1844
        %v1846 = vrcp.pop 32.0
        %v1847 = vmul.f32 %v1845, %v1846
        %v1848 = vsub.f32 %v1842, %v1847
        %v1849 = vmul.f32 %v1848, %v1848
        %v1850 = vsel %vm560, %v1849, 0.0
        %1851 = vadd.xlane.f32.xlu0 %v1850
        %v1852 = vpop.xlane.xlu0 %1851
        %v1853 = vmul.f32 %v1852, %v1846
        %v1854 = vadd.f32 %v1853, 1e-05
        %v1855 = vrsqrt.pop %v1854
        %v1856 = vmul.f32 %v1848, %v1855
        %v1857 = vlaneseq
        %v1858 = vshrl.u32 %v1857, 7
        %v1859 = vsub.s32 4, %v1858
        %v1860 = vrot.slane %v547, %v1859
        %v1861 = vmul.f32 %v1856, %v1860
        %v1862 = vlaneseq
        %v1863 = vshrl.u32 %v1862, 7
        %v1864 = vsub.s32 5, %v1863
        %v1865 = vrot.slane %v547, %v1864
        %v1866 = vadd.f32 %v1861, %v1865
        %v1867 = vmax.f32 %v1866, 0.0
        %1868 = vst.msk [vmem:[#allocation2] sm:$0xff] %vm560, %v1867
        %p1869 = scmp.eq.s32.totalorder %s26, 2
        // Predicated region
        $region93: #{tpu_custom_call.1} parent=63 // pred_check
          %p1870 = pneg %p1869
        $region94: #{tpu_custom_call.1} parent=63 // pred_check_branch
          %1872 = sbr.rel (%p1870) target = $region96
        $region95: #{tpu_custom_call.1} parent=63 // pred_region
          %v1873 = vpack.c.bf16 %v1867, %v1867
          %v1874 = vld [vmem:[%s7] sm:$0xf]
          %v1875 = vld [vmem:[%s7 + $0x4] sm:$0xf]
          %v1876 = vld [vmem:[%s7 + $0x8] sm:$0xf]
          %v1877 = vld [vmem:[%s7 + $0xc] sm:$0xf]
          %v1878 = vld [vmem:[%s8] sm:$0x1]
          %v1880 = vlaneseq
          %v1881 = vshrl.u32 %v1880, 7
          %v1882 = vsub.s32 0, %v1881
          %v1883 = vrot.slane %v1878, %v1882
          %v1889 = vunpack.c.l.b16 %v1874
          %v1890 = vunpack.c.l.b16 %v1875
          %v1891 = vunpack.c.l.b16 %v1876
          %v1892 = vunpack.c.l.b16 %v1877
          %v1893 = vpack.c.b16 %v1890, %v1889
          %v1894 = vpack.c.b16 %v1892, %v1891
          %v1898 = vsel %vm560, %v1873, 0
          %1900 = vmatprep.subr.bf16.mxu0 0
          %1901 = vmatpush1.bf16.msra.mxu0 0
          %1902 = vmatprep.subr.bf16.mxu0 0
          %1903 = vmatpush1.bf16.msra.mxu0 0
          %1904 = vmatprep.subr.bf16.mxu0 0
          %1905 = vmatpush1.bf16.msra.mxu0 0
          %1906 = vmatprep.subr.bf16.mxu0 0
          %1907 = vmatpush1.bf16.msra.mxu0 0
          %1908 = vmatprep.subr.bf16.mxu0 0
          %1909 = vmatpush1.bf16.msra.mxu0 0
          %1910 = vmatprep.subr.bf16.mxu0 0
          %1911 = vmatpush1.bf16.msra.mxu0 0
          %1912 = vmatprep.subr.bf16.mxu0 0
          %1913 = vmatpush1.bf16.msra.mxu0 %v1894
          %1914 = vmatprep.subr.bf16.mxu0 0
          %1915 = vmatpush1.bf16.msra.mxu0 %v1893
          %1916 = vmatprep.subr.bf16.mxu0 0
          %1917 = vmatpush2.bf16.msra.mxu0 0
          %1918 = vmatprep.subr.bf16.mxu0 0
          %1919 = vmatpush2.bf16.msra.mxu0 0
          %1920 = vmatprep.subr.bf16.mxu0 0
          %1921 = vmatpush2.bf16.msra.mxu0 0
          %1922 = vmatprep.subr.bf16.mxu0 0
          %1923 = vmatpush2.bf16.msra.mxu0 0
          %1924 = vmatprep.subr.bf16.mxu0 0
          %1925 = vmatpush2.bf16.msra.mxu0 0
          %1926 = vmatprep.subr.bf16.mxu0 0
          %1927 = vmatpush2.bf16.msra.mxu0 0
          %1928 = vmatprep.subr.bf16.mxu0 0
          %1929 = vmatpush2.bf16.msra.mxu0 0
          %1930 = vmatprep.subr.bf16.mxu0 0
          %1931 = vmatpush2.bf16.msra.mxu0 0
          %1932 = vmatprep.mubr.bf16.mxu0 0
          %1933 = vmatmul.mubr.bf16.gmra.mxu0 %v1898
          %v1934 = vpop.f32.mrf.mxu0
          %v1935 = vadd.f32 %v1883, %v1934
          %v1936 = vpop.f32.mrf.mxu0
          %v1937 = vpop.f32.mrf.mxu0
          %v1938 = vpop.f32.mrf.mxu0
          %1939 = vdwg.mxu0
          %v1940 = vmax.f32 %v1935, 0.0
          %v1941 = vpack.c.bf16 %v1940, %v1940
          %v1942 = vld [vmem:[#allocation13] sm:$0xf]
          %v1943 = vld [vmem:[#allocation13 + $0x4] sm:$0xf]
          %v1944 = vld [vmem:[#allocation13 + $0x8] sm:$0xf]
          %v1945 = vld [vmem:[#allocation13 + $0xc] sm:$0xf]
          %v1946 = vld [vmem:[%s10] sm:$0x1]
          %v1948 = vlaneseq
          %v1949 = vshrl.u32 %v1948, 7
          %v1950 = vsub.s32 0, %v1949
          %v1951 = vrot.slane %v1946, %v1950
          %v1957 = vunpack.c.l.b16 %v1942
          %v1958 = vunpack.c.l.b16 %v1943
          %v1959 = vunpack.c.l.b16 %v1944
          %v1960 = vunpack.c.l.b16 %v1945
          %v1961 = vpack.c.b16 %v1958, %v1957
          %v1962 = vpack.c.b16 %v1960, %v1959
          %v1966 = vsel %vm560, %v1941, 0
          %1968 = vmatprep.subr.bf16.mxu0 0
          %1969 = vmatpush1.bf16.msra.mxu0 0
          %1970 = vmatprep.subr.bf16.mxu0 0
          %1971 = vmatpush1.bf16.msra.mxu0 0
          %1972 = vmatprep.subr.bf16.mxu0 0
          %1973 = vmatpush1.bf16.msra.mxu0 0
          %1974 = vmatprep.subr.bf16.mxu0 0
          %1975 = vmatpush1.bf16.msra.mxu0 0
          %1976 = vmatprep.subr.bf16.mxu0 0
          %1977 = vmatpush1.bf16.msra.mxu0 0
          %1978 = vmatprep.subr.bf16.mxu0 0
          %1979 = vmatpush1.bf16.msra.mxu0 0
          %1980 = vmatprep.subr.bf16.mxu0 0
          %1981 = vmatpush1.bf16.msra.mxu0 %v1962
          %1982 = vmatprep.subr.bf16.mxu0 0
          %1983 = vmatpush1.bf16.msra.mxu0 %v1961
          %1984 = vmatprep.subr.bf16.mxu0 0
          %1985 = vmatpush2.bf16.msra.mxu0 0
          %1986 = vmatprep.subr.bf16.mxu0 0
          %1987 = vmatpush2.bf16.msra.mxu0 0
          %1988 = vmatprep.subr.bf16.mxu0 0
          %1989 = vmatpush2.bf16.msra.mxu0 0
          %1990 = vmatprep.subr.bf16.mxu0 0
          %1991 = vmatpush2.bf16.msra.mxu0 0
          %1992 = vmatprep.subr.bf16.mxu0 0
          %1993 = vmatpush2.bf16.msra.mxu0 0
          %1994 = vmatprep.subr.bf16.mxu0 0
          %1995 = vmatpush2.bf16.msra.mxu0 0
          %1996 = vmatprep.subr.bf16.mxu0 0
          %1997 = vmatpush2.bf16.msra.mxu0 0
          %1998 = vmatprep.subr.bf16.mxu0 0
          %1999 = vmatpush2.bf16.msra.mxu0 0
          %2000 = vmatprep.mubr.bf16.mxu0 0
          %2001 = vmatmul.mubr.bf16.gmra.mxu0 %v1966
          %v2002 = vpop.f32.mrf.mxu0
          %v2003 = vadd.f32 %v1951, %v2002
          %v2004 = vpop.f32.mrf.mxu0
          %v2005 = vpop.f32.mrf.mxu0
          %v2006 = vpop.f32.mrf.mxu0
          %2007 = vdwg.mxu0
          %2008 = vst [vmem:[#allocation14] sm:$0xff] %v2003
        $region96: #{tpu_custom_call.1} parent=63 // pred_fallthru
          _
        // Predicated region
        $region97: #{tpu_custom_call.1} parent=63 // pred_check
          %p2009 = pneg %p280
        $region98: #{tpu_custom_call.1} parent=63 // pred_check_branch
          %2011 = sbr.rel (%p2009) target = $region100
        $region99: #{tpu_custom_call.1} parent=63 // pred_region
          %s2013 = ssub.s32 128, 128
          %2014 = vsyncadd [#allocation6], %s2013
          %s2016 = sshll.u32 [#allocation14], 4
          %s2017 = int_to_ptr.vmem [resolvable:$true] %s2016
          %2019 = dma.vmem_to_hbm [thread:$0]  %s2017, 128, %s11, [#allocation6]
        $region100: #{tpu_custom_call.1} parent=63 // pred_fallthru
          _
        // Predicated region
        $region101: #{tpu_custom_call.1} parent=63 // pred_check
          %p2020 = pneg %p280
        $region102: #{tpu_custom_call.1} parent=63 // pred_check_branch
          %2022 = sbr.rel (%p2020) target = $region104
        $region103: #{tpu_custom_call.1} parent=63 // pred_region
          %2023 = dma.done [#allocation6], 128
        $region104: #{tpu_custom_call.1} parent=63 // pred_fallthru
          _
      $region64: #{tpu_custom_call.1} parent=5 // pred_fallthru
        _
      %p2024 = scmp.le.s32.totalorder 2, %s21
      // Predicated region
      $region105: #{tpu_custom_call.1} parent=5 // pred_check
        %p2025 = pneg %p2024
      $region106: #{tpu_custom_call.1} parent=5 // pred_check_branch
        %2027 = sbr.rel (%p2025) target = $region108
      $region107: #{tpu_custom_call.1} parent=5 // pred_region
        %s2028 = ssub.s32 %s21, 2
      $region108: #{tpu_custom_call.1} parent=5 // pred_fallthru
        _
    $region6: #{tpu_custom_call.1} parent=1 // loop_footer
      %s25 = sadd.s32 1, %s21
    $region7: #{tpu_custom_call.1} parent=1 // loop_footer_branch
      %20 = sbr.rel target = $region3
    $region8: #{tpu_custom_call.1} parent=1 // loop_exit
      _
    %2029 = vsyncpa [#allocation5], 1
    %s2030 = scalar_lea.sflag [#allocation5], 1
    %2031 = vsyncpa %s2030, 1
    %2032 = vsyncpa [#allocation9], 1
    %2033 = vsyncpa [#allocation6], 1
    %s2034 = scalar_lea.sflag [#allocation6], 1
    %2035 = vsyncpa %s2034, 1
    %2036 = vsyncpa [#allocation7], 1
    %s2037 = scalar_lea.sflag [#allocation7], 1
    %2038 = vsyncpa %s2037, 1

</llo_original>
